<compile_context>
chip_gen: v5e
topology: v5e:2x2
jax: 0.10.0
libtpu: 0.0.40
codegen_flags: <defaults>
</compile_context>

<pallas_src>
import functools

import jax
import jax.numpy as jnp
from jax.experimental import pallas as pl
from jax.experimental.pallas import tpu as pltpu


# ----------------------------------------------------------------------------
# helpers
# ----------------------------------------------------------------------------
def _round_up(x, m):
    return ((x + m - 1) // m) * m


def _pick_tm(M, cap=512):
    """Largest row tile <= cap that divides M (prefer >= 2 grid steps)."""
    fallback = None
    for tm in (512, 256, 128, 64, 32, 16, 8):
        if tm > cap or tm > M:
            continue
        if M % tm == 0:
            if M // tm >= 2:
                return tm
            if fallback is None:
                fallback = tm
    if fallback is not None:
        return fallback
    return min(cap, max(8, M))          # remainder handled by padding M


def _pick_tn(Np):
    """256-aligned N tiles when possible (v6e/v7x MXU is 2x256^2)."""
    for tn in (512, 256, 128):
        if Np % tn == 0:
            return tn
    return Np


# ----------------------------------------------------------------------------
# Kernel B: fused matmul + per-channel scale/shift + optional ReLU
#   x:(tm,K) bf16, w:(K,tn) bf16 -> f32 accumulate, f32 epilogue, f32 store.
# ----------------------------------------------------------------------------
def _fused_matmul_kernel(x_ref, w_ref, s_ref, b_ref, o_ref, *, relu):
    acc = jnp.dot(x_ref[...], w_ref[...], preferred_element_type=jnp.float32)
    y = acc * s_ref[...] + b_ref[...]
    if relu:
        y = jnp.maximum(y, 0.0)
    o_ref[...] = y.astype(o_ref.dtype)


def fused_matmul(x, w, scale, bias, *, relu, tm_cap=512):
    """(M, K) @ (K, Np) * scale[Np] + bias[Np]  (optional ReLU).  Np % 128 == 0."""
    M, K = x.shape
    Kw, Np = w.shape
    assert Kw == K and Np % 128 == 0
    tn = _pick_tn(Np)
    tm = _pick_tm(M, tm_cap)
    Mp = pl.cdiv(M, tm) * tm
    xp = x if Mp == M else jnp.pad(x, ((0, Mp - M), (0, 0)))
    out = pl.pallas_call(
        functools.partial(_fused_matmul_kernel, relu=relu),
        out_shape=jax.ShapeDtypeStruct((Mp, Np), jnp.float32),
        grid_spec=pltpu.PrefetchScalarGridSpec(
            num_scalar_prefetch=0,
            grid=(Mp // tm, Np // tn),
            in_specs=[
                pl.BlockSpec((tm, K), lambda i, j: (i, 0)),
                pl.BlockSpec((K, tn), lambda i, j: (0, j)),
                pl.BlockSpec((1, tn), lambda i, j: (0, j)),
                pl.BlockSpec((1, tn), lambda i, j: (0, j)),
            ],
            out_specs=pl.BlockSpec((tm, tn), lambda i, j: (i, j)),
        ),
        compiler_params=pltpu.CompilerParams(
            dimension_semantics=("parallel", "parallel")),
    )(xp.astype(jnp.bfloat16), w.astype(jnp.bfloat16),
      scale.reshape(1, Np).astype(jnp.float32),
      bias.reshape(1, Np).astype(jnp.float32))
    return out if Mp == M else out[:M]


# ----------------------------------------------------------------------------
# Kernel A: 3x3 conv (pad=1, stride=1) with im2col fused in-kernel.
#   Whole padded image block resident in VMEM; 9 taps -> 9 accumulated matmuls.
#   x_pad:(Hp,Wp,C) bf16, w:(9,C,Np) bf16, scale/bias:(1,Np) f32.
# ----------------------------------------------------------------------------
def _conv3x3_kernel(x_ref, w_ref, s_ref, b_ref, o_ref, *, relu, H, W):
    C = x_ref.shape[-1]
    Np = o_ref.shape[-1]
    acc = jnp.zeros((H * W, Np), jnp.float32)
    for di in range(3):
        for dj in range(3):
            xs = x_ref[di:di + H, dj:dj + W, :].reshape(H * W, C)
            acc = acc + jnp.dot(xs, w_ref[di * 3 + dj],
                                preferred_element_type=jnp.float32)
    y = acc * s_ref[...] + b_ref[...]
    if relu:
        y = jnp.maximum(y, 0.0)
    o_ref[...] = y.reshape(H, W, Np).astype(o_ref.dtype)


def conv3x3_fused(x_pad, w_taps, scale, bias, *, relu):
    """x_pad:(B,H+2,W+2,C) bf16, w_taps:(9,C,Np) bf16 -> (B,H,W,Np) f32."""
    # TODO(synk): for large H*W the whole-image VMEM block should become a
    # halo row-strip pipeline (pl.ANY + make_async_copy); fine at these sizes.
    B, Hp, Wp, C = x_pad.shape
    H, W = Hp - 2, Wp - 2
    Np = w_taps.shape[-1]
    assert Np % 128 == 0
    return pl.pallas_call(
        functools.partial(_conv3x3_kernel, relu=relu, H=H, W=W),
        out_shape=jax.ShapeDtypeStruct((B, H, W, Np), jnp.float32),
        grid_spec=pltpu.PrefetchScalarGridSpec(
            num_scalar_prefetch=0,
            grid=(B,),
            in_specs=[
                pl.BlockSpec((None, Hp, Wp, C), lambda b: (b, 0, 0, 0)),
                pl.BlockSpec((9, C, Np), lambda b: (0, 0, 0)),
                pl.BlockSpec((1, Np), lambda b: (0, 0)),
                pl.BlockSpec((1, Np), lambda b: (0, 0)),
            ],
            out_specs=pl.BlockSpec((None, H, W, Np), lambda b: (b, 0, 0, 0)),
        ),
        compiler_params=pltpu.CompilerParams(
            dimension_semantics=("parallel",)),
    )(x_pad, w_taps,
      scale.reshape(1, Np).astype(jnp.float32),
      bias.reshape(1, Np).astype(jnp.float32))


# ----------------------------------------------------------------------------
# XLA-side glue: bilinear upsample (NHWC) and deformable bilinear sampling.
# ----------------------------------------------------------------------------
def upsample2x_bilinear_align_corners_nhwc(x):
    B, H, W, C = x.shape
    Ho, Wo = 2 * H, 2 * W
    sr = jnp.arange(Ho, dtype=jnp.float32) * (H - 1) / (Ho - 1)
    sc = jnp.arange(Wo, dtype=jnp.float32) * (W - 1) / (Wo - 1)
    r0 = jnp.floor(sr).astype(jnp.int32)
    c0 = jnp.floor(sc).astype(jnp.int32)
    r1 = jnp.minimum(r0 + 1, H - 1)
    c1 = jnp.minimum(c0 + 1, W - 1)
    fr = (sr - r0)[None, :, None, None]
    fc = (sc - c0)[None, None, :, None]
    xr0, xr1 = x[:, r0, :, :], x[:, r1, :, :]
    top = xr0[:, :, c0, :] * (1 - fc) + xr0[:, :, c1, :] * fc
    bot = xr1[:, :, c0, :] * (1 - fc) + xr1[:, :, c1, :] * fc
    return top * (1 - fr) + bot * fr


def _deform_sample_nhwc(x_nhwc, offset, ks=3):
    """Bilinear sampling at p0 + pn + offset.

    x_nhwc: (B,H,W,C); offset: (B,H,W,2N).  Returns (B*H*W, N*C) bf16 patches
    that come out pixel-major with a contiguous (tap, channel) minor axis —
    no transpose of a 9x-expanded tensor is needed.
    """
    # TODO(synk): the data-dependent gather has no clean Pallas equivalent on
    # TPU; it stays in XLA (single fused take_along_axis over all 4 corners).
    B, H, W, C = x_nhwc.shape
    N = ks * ks
    off_r, off_c = offset[..., :N], offset[..., N:]                  # (B,H,W,N)
    p0_r = jnp.arange(1, H + 1, dtype=jnp.float32)[None, :, None, None]
    p0_c = jnp.arange(1, W + 1, dtype=jnp.float32)[None, None, :, None]
    pn_r = (jnp.arange(N, dtype=jnp.float32) // ks - (ks - 1) // 2)[None, None, None, :]
    pn_c = (jnp.arange(N, dtype=jnp.float32) % ks - (ks - 1) // 2)[None, None, None, :]
    p_r = p0_r + pn_r + off_r
    p_c = p0_c + pn_c + off_c

    q_lt_r = jnp.clip(jnp.floor(p_r), 0, H - 1).astype(jnp.int32)
    q_lt_c = jnp.clip(jnp.floor(p_c), 0, W - 1).astype(jnp.int32)
    q_rb_r = jnp.clip(jnp.floor(p_r) + 1, 0, H - 1).astype(jnp.int32)
    q_rb_c = jnp.clip(jnp.floor(p_c) + 1, 0, W - 1).astype(jnp.int32)
    p_r = jnp.clip(p_r, 0, H - 1)
    p_c = jnp.clip(p_c, 0, W - 1)

    # bilinear corner weights (canonical non-normalized boundary handling)
    g_lt = (1 + (q_lt_r - p_r)) * (1 + (q_lt_c - p_c))
    g_rb = (1 - (q_rb_r - p_r)) * (1 - (q_rb_c - p_c))
    g_lb = (1 + (q_lt_r - p_r)) * (1 - (q_rb_c - p_c))
    g_rt = (1 - (q_rb_r - p_r)) * (1 + (q_lt_c - p_c))

    idx = jnp.stack([q_lt_r * W + q_lt_c,
                     q_rb_r * W + q_rb_c,
                     q_lt_r * W + q_rb_c,
                     q_rb_r * W + q_lt_c], axis=3)                   # (B,H,W,4,N)
    g = jnp.stack([g_lt, g_rb, g_lb, g_rt], axis=3)                  # (B,H,W,4,N)

    x_flat = x_nhwc.reshape(B, H * W, C).astype(jnp.bfloat16)
    gathered = jnp.take_along_axis(x_flat, idx.reshape(B, -1)[..., None], axis=1)
    gathered = gathered.reshape(B, H, W, 4, N, C).astype(jnp.float32)
    x_off = jnp.sum(g[..., None] * gathered, axis=3)                 # (B,H,W,N,C)
    return x_off.reshape(B * H * W, N * C).astype(jnp.bfloat16)


# ----------------------------------------------------------------------------
# DeformConv2d(k=3, pad=0) + BatchNorm(eval) + ReLU, hot paths in Pallas.
# ----------------------------------------------------------------------------
def deform_conv_bn_relu(x_nhwc, params):
    B, H, W, C = x_nhwc.shape
    twoN = params["p_w"].shape[0]
    O = params["w"].shape[0]

    # ---- offset conv: 3x3, pad=1, stride=1 (im2col fused in Kernel A) ----
    twoN_p = _round_up(twoN, 128)
    x_pad = jnp.pad(x_nhwc, ((0, 0), (1, 1), (1, 1), (0, 0))).astype(jnp.bfloat16)
    w_taps = params["p_w"].transpose(2, 3, 1, 0).reshape(9, C, twoN)   # (tap,C,2N)
    w_taps = jnp.pad(w_taps, ((0, 0), (0, 0), (0, twoN_p - twoN))).astype(jnp.bfloat16)
    s_off = jnp.pad(jnp.ones((twoN,), jnp.float32), (0, twoN_p - twoN))
    b_off = jnp.pad(params["p_b"].astype(jnp.float32), (0, twoN_p - twoN))
    offset = conv3x3_fused(x_pad, w_taps, s_off, b_off, relu=False)[..., :twoN]

    # ---- deformable bilinear sampling -> (B*H*W, 9*C) patches (tap-major) ----
    patches = _deform_sample_nhwc(x_nhwc, offset, ks=3)

    # ---- main conv (no bias) fused with BatchNorm(eval) + ReLU (Kernel B) ----
    eps = 1e-5
    scale = params["gamma"] / jnp.sqrt(params["var"] + eps)
    shift = params["beta"] - params["mean"] * scale
    O_p = _round_up(O, 128)
    w_main = params["w"].transpose(0, 2, 3, 1).reshape(O, 9 * C).T     # (9C, O)
    w_main = jnp.pad(w_main, ((0, 0), (0, O_p - O)))
    scale = jnp.pad(scale, (0, O_p - O))          # padded cols: scale=0
    shift = jnp.pad(shift, (0, O_p - O))          # padded cols: bias=0
    y = fused_matmul(patches, w_main, scale, shift, relu=True)         # (M, O_p)
    return y[:, :O].reshape(B, H, W, O)


def deform_up_forward(x1, x2, params1, params2):
    # NCHW -> NHWC once; everything below stays channels-last (lane dim = C).
    x1 = jnp.transpose(x1, (0, 2, 3, 1))
    x2 = jnp.transpose(x2, (0, 2, 3, 1))
    x1 = upsample2x_bilinear_align_corners_nhwc(x1)
    diffY = x2.shape[1] - x1.shape[1]
    diffX = x2.shape[2] - x1.shape[2]
    x1 = jnp.pad(x1, ((0, 0),
                      (diffY // 2, diffY - diffY // 2),
                      (diffX // 2, diffX - diffX // 2),
                      (0, 0)))
    x = jnp.concatenate([x2, x1], axis=-1)
    x = deform_conv_bn_relu(x, params1)
    x = deform_conv_bn_relu(x, params2)
    return jnp.transpose(x, (0, 3, 1, 2))          # back to NCHW (PyTorch layout)


# ----------------------------------------------------------------------------
# Deterministic parameter construction (synthetic, no checkpoint load)
# ----------------------------------------------------------------------------
def make_params(key, in_ch, out_ch, ks=3):
    k = jax.random.split(key, 5)
    twoN = 2 * ks * ks
    return {
        # p_conv: Conv2d(in_ch, 2*ks*ks, k=3, pad=1) — small weights, modest offsets
        "p_w": 0.05 * jax.random.normal(k[0], (twoN, in_ch, 3, 3), jnp.float32),
        "p_b": 0.05 * jax.random.normal(k[1], (twoN,), jnp.float32),
        # main conv: Conv2d(in_ch, out_ch, k=ks, stride=ks, bias=None)
        "w": 0.2 * jax.random.normal(k[2], (out_ch, in_ch, ks, ks), jnp.float32),
        # BatchNorm2d(out_ch) in eval mode with default running stats
        "gamma": 1.0 + 0.1 * jax.random.normal(k[3], (out_ch,), jnp.float32),
        "beta": 0.1 * jax.random.normal(k[4], (out_ch,), jnp.float32),
        "mean": jnp.zeros((out_ch,), jnp.float32),
        "var": jnp.ones((out_ch,), jnp.float32),
    }


if __name__ == "__main__":
    key = jax.random.PRNGKey(0)
    k1, k2, k3, k4 = jax.random.split(key, 4)

    in_ch, out_ch = 8, 8
    # x1: coarse feature map (in_ch//2 channels), x2: skip connection (in_ch//2)
    x1 = jax.random.normal(k1, (2, in_ch // 2, 8, 8), jnp.float32)
    x2 = jax.random.normal(k2, (2, in_ch // 2, 16, 16), jnp.float32)

    params1 = make_params(k3, in_ch, out_ch)       # first DeformConv2d + BN + ReLU
    params2 = make_params(k4, out_ch, out_ch)      # second DeformConv2d + BN + ReLU

    out = jax.jit(deform_up_forward)(x1, x2, params1, params2)
    out = jax.block_until_ready(out)
    assert out.shape == (2, out_ch, 16, 16), out.shape
    assert bool(jnp.all(jnp.isfinite(out)))
    print("KERNEL_OK")
</pallas_src>

<mosaic_0001>
module attributes {stable_mosaic.version = 11 : i64} {
  func.func @_conv3x3_kernel(%arg0: i32, %arg1: memref<1x18x18x8xbf16, #tpu.memory_space<vmem>>, %arg2: memref<9x8x128xbf16, #tpu.memory_space<vmem>>, %arg3: memref<1x128xf32, #tpu.memory_space<vmem>>, %arg4: memref<1x128xf32, #tpu.memory_space<vmem>>, %arg5: memref<1x16x16x128xf32, #tpu.memory_space<vmem>>) attributes {dimension_semantics = [#tpu.dimension_semantics<parallel>], iteration_bounds = array<i64: 2>, scalar_prefetch = 0 : i64, scratch_operands = 0 : i64, tpu.core_type = #tpu.core_type<tc>, window_params = [{transform_indices = @transform_0, window_bounds = array<i64: 1, 18, 18, 8>}, {pipeline_mode = #tpu.pipeline_mode<synchronous>, transform_indices = @transform_1, window_bounds = array<i64: 9, 8, 128>}, {pipeline_mode = #tpu.pipeline_mode<synchronous>, transform_indices = @transform_2, window_bounds = array<i64: 1, 128>}, {pipeline_mode = #tpu.pipeline_mode<synchronous>, transform_indices = @transform_3, window_bounds = array<i64: 1, 128>}, {transform_indices = @transform_4, window_bounds = array<i64: 1, 16, 16, 128>}]} {
    %cst = arith.constant 0.000000e+00 : f32
    %0 = vector.broadcast %cst : f32 to vector<256x128xf32>
    %c0 = arith.constant 0 : index
    %c0_0 = arith.constant 0 : index
    %c0_1 = arith.constant 0 : index
    %c0_2 = arith.constant 0 : index
    %1 = vector.load %arg1[%c0, %c0_0, %c0_1, %c0_2] : memref<1x18x18x8xbf16, #tpu.memory_space<vmem>>, vector<1x16x16x8xbf16>
    %2 = vector.shape_cast %1 : vector<1x16x16x8xbf16> to vector<16x16x8xbf16>
    %3 = vector.shape_cast %2 : vector<16x16x8xbf16> to vector<256x8xbf16>
    %c0_3 = arith.constant 0 : index
    %c0_4 = arith.constant 0 : index
    %c0_5 = arith.constant 0 : index
    %4 = vector.load %arg2[%c0_3, %c0_4, %c0_5] : memref<9x8x128xbf16, #tpu.memory_space<vmem>>, vector<1x8x128xbf16>
    %5 = vector.shape_cast %4 : vector<1x8x128xbf16> to vector<8x128xbf16>
    %cst_6 = arith.constant dense<0.000000e+00> : vector<256x128xf32>
    %6 = tpu.matmul %3, %5, %cst_6 {dimension_numbers = #tpu.dot_dimension_numbers<[1], [0], [0], [1], [0, 0, 1, 1], [], []>} : vector<256x8xbf16>, vector<8x128xbf16>, vector<256x128xf32> -> vector<256x128xf32>
    %7 = arith.addf %0, %6 : vector<256x128xf32>
    %c0_7 = arith.constant 0 : index
    %c0_8 = arith.constant 0 : index
    %c1 = arith.constant 1 : index
    %c0_9 = arith.constant 0 : index
    %8 = vector.load %arg1[%c0_7, %c0_8, %c1, %c0_9] : memref<1x18x18x8xbf16, #tpu.memory_space<vmem>>, vector<1x16x16x8xbf16>
    %9 = vector.shape_cast %8 : vector<1x16x16x8xbf16> to vector<16x16x8xbf16>
    %10 = vector.shape_cast %9 : vector<16x16x8xbf16> to vector<256x8xbf16>
    %c1_10 = arith.constant 1 : index
    %c0_11 = arith.constant 0 : index
    %c0_12 = arith.constant 0 : index
    %11 = vector.load %arg2[%c1_10, %c0_11, %c0_12] : memref<9x8x128xbf16, #tpu.memory_space<vmem>>, vector<1x8x128xbf16>
    %12 = vector.shape_cast %11 : vector<1x8x128xbf16> to vector<8x128xbf16>
    %cst_13 = arith.constant dense<0.000000e+00> : vector<256x128xf32>
    %13 = tpu.matmul %10, %12, %cst_13 {dimension_numbers = #tpu.dot_dimension_numbers<[1], [0], [0], [1], [0, 0, 1, 1], [], []>} : vector<256x8xbf16>, vector<8x128xbf16>, vector<256x128xf32> -> vector<256x128xf32>
    %14 = arith.addf %7, %13 : vector<256x128xf32>
    %c0_14 = arith.constant 0 : index
    %c0_15 = arith.constant 0 : index
    %c2 = arith.constant 2 : index
    %c0_16 = arith.constant 0 : index
    %15 = vector.load %arg1[%c0_14, %c0_15, %c2, %c0_16] : memref<1x18x18x8xbf16, #tpu.memory_space<vmem>>, vector<1x16x16x8xbf16>
    %16 = vector.shape_cast %15 : vector<1x16x16x8xbf16> to vector<16x16x8xbf16>
    %17 = vector.shape_cast %16 : vector<16x16x8xbf16> to vector<256x8xbf16>
    %c2_17 = arith.constant 2 : index
    %c0_18 = arith.constant 0 : index
    %c0_19 = arith.constant 0 : index
    %18 = vector.load %arg2[%c2_17, %c0_18, %c0_19] : memref<9x8x128xbf16, #tpu.memory_space<vmem>>, vector<1x8x128xbf16>
    %19 = vector.shape_cast %18 : vector<1x8x128xbf16> to vector<8x128xbf16>
    %cst_20 = arith.constant dense<0.000000e+00> : vector<256x128xf32>
    %20 = tpu.matmul %17, %19, %cst_20 {dimension_numbers = #tpu.dot_dimension_numbers<[1], [0], [0], [1], [0, 0, 1, 1], [], []>} : vector<256x8xbf16>, vector<8x128xbf16>, vector<256x128xf32> -> vector<256x128xf32>
    %21 = arith.addf %14, %20 : vector<256x128xf32>
    %c0_21 = arith.constant 0 : index
    %c1_22 = arith.constant 1 : index
    %c0_23 = arith.constant 0 : index
    %c0_24 = arith.constant 0 : index
    %22 = vector.load %arg1[%c0_21, %c1_22, %c0_23, %c0_24] : memref<1x18x18x8xbf16, #tpu.memory_space<vmem>>, vector<1x16x16x8xbf16>
    %23 = vector.shape_cast %22 : vector<1x16x16x8xbf16> to vector<16x16x8xbf16>
    %24 = vector.shape_cast %23 : vector<16x16x8xbf16> to vector<256x8xbf16>
    %c3 = arith.constant 3 : index
    %c0_25 = arith.constant 0 : index
    %c0_26 = arith.constant 0 : index
    %25 = vector.load %arg2[%c3, %c0_25, %c0_26] : memref<9x8x128xbf16, #tpu.memory_space<vmem>>, vector<1x8x128xbf16>
    %26 = vector.shape_cast %25 : vector<1x8x128xbf16> to vector<8x128xbf16>
    %cst_27 = arith.constant dense<0.000000e+00> : vector<256x128xf32>
    %27 = tpu.matmul %24, %26, %cst_27 {dimension_numbers = #tpu.dot_dimension_numbers<[1], [0], [0], [1], [0, 0, 1, 1], [], []>} : vector<256x8xbf16>, vector<8x128xbf16>, vector<256x128xf32> -> vector<256x128xf32>
    %28 = arith.addf %21, %27 : vector<256x128xf32>
    %c0_28 = arith.constant 0 : index
    %c1_29 = arith.constant 1 : index
    %c1_30 = arith.constant 1 : index
    %c0_31 = arith.constant 0 : index
    %29 = vector.load %arg1[%c0_28, %c1_29, %c1_30, %c0_31] : memref<1x18x18x8xbf16, #tpu.memory_space<vmem>>, vector<1x16x16x8xbf16>
    %30 = vector.shape_cast %29 : vector<1x16x16x8xbf16> to vector<16x16x8xbf16>
    %31 = vector.shape_cast %30 : vector<16x16x8xbf16> to vector<256x8xbf16>
    %c4 = arith.constant 4 : index
    %c0_32 = arith.constant 0 : index
    %c0_33 = arith.constant 0 : index
    %32 = vector.load %arg2[%c4, %c0_32, %c0_33] : memref<9x8x128xbf16, #tpu.memory_space<vmem>>, vector<1x8x128xbf16>
    %33 = vector.shape_cast %32 : vector<1x8x128xbf16> to vector<8x128xbf16>
    %cst_34 = arith.constant dense<0.000000e+00> : vector<256x128xf32>
    %34 = tpu.matmul %31, %33, %cst_34 {dimension_numbers = #tpu.dot_dimension_numbers<[1], [0], [0], [1], [0, 0, 1, 1], [], []>} : vector<256x8xbf16>, vector<8x128xbf16>, vector<256x128xf32> -> vector<256x128xf32>
    %35 = arith.addf %28, %34 : vector<256x128xf32>
    %c0_35 = arith.constant 0 : index
    %c1_36 = arith.constant 1 : index
    %c2_37 = arith.constant 2 : index
    %c0_38 = arith.constant 0 : index
    %36 = vector.load %arg1[%c0_35, %c1_36, %c2_37, %c0_38] : memref<1x18x18x8xbf16, #tpu.memory_space<vmem>>, vector<1x16x16x8xbf16>
    %37 = vector.shape_cast %36 : vector<1x16x16x8xbf16> to vector<16x16x8xbf16>
    %38 = vector.shape_cast %37 : vector<16x16x8xbf16> to vector<256x8xbf16>
    %c5 = arith.constant 5 : index
    %c0_39 = arith.constant 0 : index
    %c0_40 = arith.constant 0 : index
    %39 = vector.load %arg2[%c5, %c0_39, %c0_40] : memref<9x8x128xbf16, #tpu.memory_space<vmem>>, vector<1x8x128xbf16>
    %40 = vector.shape_cast %39 : vector<1x8x128xbf16> to vector<8x128xbf16>
    %cst_41 = arith.constant dense<0.000000e+00> : vector<256x128xf32>
    %41 = tpu.matmul %38, %40, %cst_41 {dimension_numbers = #tpu.dot_dimension_numbers<[1], [0], [0], [1], [0, 0, 1, 1], [], []>} : vector<256x8xbf16>, vector<8x128xbf16>, vector<256x128xf32> -> vector<256x128xf32>
    %42 = arith.addf %35, %41 : vector<256x128xf32>
    %c0_42 = arith.constant 0 : index
    %c2_43 = arith.constant 2 : index
    %c0_44 = arith.constant 0 : index
    %c0_45 = arith.constant 0 : index
    %43 = vector.load %arg1[%c0_42, %c2_43, %c0_44, %c0_45] : memref<1x18x18x8xbf16, #tpu.memory_space<vmem>>, vector<1x16x16x8xbf16>
    %44 = vector.shape_cast %43 : vector<1x16x16x8xbf16> to vector<16x16x8xbf16>
    %45 = vector.shape_cast %44 : vector<16x16x8xbf16> to vector<256x8xbf16>
    %c6 = arith.constant 6 : index
    %c0_46 = arith.constant 0 : index
    %c0_47 = arith.constant 0 : index
    %46 = vector.load %arg2[%c6, %c0_46, %c0_47] : memref<9x8x128xbf16, #tpu.memory_space<vmem>>, vector<1x8x128xbf16>
    %47 = vector.shape_cast %46 : vector<1x8x128xbf16> to vector<8x128xbf16>
    %cst_48 = arith.constant dense<0.000000e+00> : vector<256x128xf32>
    %48 = tpu.matmul %45, %47, %cst_48 {dimension_numbers = #tpu.dot_dimension_numbers<[1], [0], [0], [1], [0, 0, 1, 1], [], []>} : vector<256x8xbf16>, vector<8x128xbf16>, vector<256x128xf32> -> vector<256x128xf32>
    %49 = arith.addf %42, %48 : vector<256x128xf32>
    %c0_49 = arith.constant 0 : index
    %c2_50 = arith.constant 2 : index
    %c1_51 = arith.constant 1 : index
    %c0_52 = arith.constant 0 : index
    %50 = vector.load %arg1[%c0_49, %c2_50, %c1_51, %c0_52] : memref<1x18x18x8xbf16, #tpu.memory_space<vmem>>, vector<1x16x16x8xbf16>
    %51 = vector.shape_cast %50 : vector<1x16x16x8xbf16> to vector<16x16x8xbf16>
    %52 = vector.shape_cast %51 : vector<16x16x8xbf16> to vector<256x8xbf16>
    %c7 = arith.constant 7 : index
    %c0_53 = arith.constant 0 : index
    %c0_54 = arith.constant 0 : index
    %53 = vector.load %arg2[%c7, %c0_53, %c0_54] : memref<9x8x128xbf16, #tpu.memory_space<vmem>>, vector<1x8x128xbf16>
    %54 = vector.shape_cast %53 : vector<1x8x128xbf16> to vector<8x128xbf16>
    %cst_55 = arith.constant dense<0.000000e+00> : vector<256x128xf32>
    %55 = tpu.matmul %52, %54, %cst_55 {dimension_numbers = #tpu.dot_dimension_numbers<[1], [0], [0], [1], [0, 0, 1, 1], [], []>} : vector<256x8xbf16>, vector<8x128xbf16>, vector<256x128xf32> -> vector<256x128xf32>
    %56 = arith.addf %49, %55 : vector<256x128xf32>
    %c0_56 = arith.constant 0 : index
    %c2_57 = arith.constant 2 : index
    %c2_58 = arith.constant 2 : index
    %c0_59 = arith.constant 0 : index
    %57 = vector.load %arg1[%c0_56, %c2_57, %c2_58, %c0_59] : memref<1x18x18x8xbf16, #tpu.memory_space<vmem>>, vector<1x16x16x8xbf16>
    %58 = vector.shape_cast %57 : vector<1x16x16x8xbf16> to vector<16x16x8xbf16>
    %59 = vector.shape_cast %58 : vector<16x16x8xbf16> to vector<256x8xbf16>
    %c8 = arith.constant 8 : index
    %c0_60 = arith.constant 0 : index
    %c0_61 = arith.constant 0 : index
    %60 = vector.load %arg2[%c8, %c0_60, %c0_61] : memref<9x8x128xbf16, #tpu.memory_space<vmem>>, vector<1x8x128xbf16>
    %61 = vector.shape_cast %60 : vector<1x8x128xbf16> to vector<8x128xbf16>
    %cst_62 = arith.constant dense<0.000000e+00> : vector<256x128xf32>
    %62 = tpu.matmul %59, %61, %cst_62 {dimension_numbers = #tpu.dot_dimension_numbers<[1], [0], [0], [1], [0, 0, 1, 1], [], []>} : vector<256x8xbf16>, vector<8x128xbf16>, vector<256x128xf32> -> vector<256x128xf32>
    %63 = arith.addf %56, %62 : vector<256x128xf32>
    %c0_63 = arith.constant 0 : index
    %c0_64 = arith.constant 0 : index
    %64 = vector.load %arg3[%c0_63, %c0_64] : memref<1x128xf32, #tpu.memory_space<vmem>>, vector<1x128xf32>
    %65 = vector.broadcast %64 : vector<1x128xf32> to vector<256x128xf32>
    %66 = arith.mulf %63, %65 : vector<256x128xf32>
    %c0_65 = arith.constant 0 : index
    %c0_66 = arith.constant 0 : index
    %67 = vector.load %arg4[%c0_65, %c0_66] : memref<1x128xf32, #tpu.memory_space<vmem>>, vector<1x128xf32>
    %68 = vector.broadcast %67 : vector<1x128xf32> to vector<256x128xf32>
    %69 = arith.addf %66, %68 : vector<256x128xf32>
    %70 = vector.shape_cast %69 : vector<256x128xf32> to vector<16x16x128xf32>
    %c0_67 = arith.constant 0 : index
    %c0_68 = arith.constant 0 : index
    %c0_69 = arith.constant 0 : index
    %c0_70 = arith.constant 0 : index
    %71 = vector.load %arg5[%c0_67, %c0_68, %c0_69, %c0_70] : memref<1x16x16x128xf32, #tpu.memory_space<vmem>>, vector<1x16x16x128xf32>
    %72 = vector.shape_cast %71 : vector<1x16x16x128xf32> to vector<16x16x128xf32>
    %73 = vector.shape_cast %70 : vector<16x16x128xf32> to vector<1x16x16x128xf32>
    tpu.vector_store %arg5[%c0_67, %c0_68, %c0_69, %c0_70], %73 {strides = array<i32>} : memref<1x16x16x128xf32, #tpu.memory_space<vmem>>, vector<1x16x16x128xf32>,
    return
  }
  func.func @transform_0(%arg0: i32) -> (i32, i32, i32, i32) {
    %c0_i32 = arith.constant 0 : i32
    %c0_i32_0 = arith.constant 0 : i32
    %c0_i32_1 = arith.constant 0 : i32
    %c0_i32_2 = arith.constant 0 : i32
    return %arg0, %c0_i32, %c0_i32_0, %c0_i32_1 : i32, i32, i32, i32
  }
  func.func @transform_1(%arg0: i32) -> (i32, i32, i32) {
    %c0_i32 = arith.constant 0 : i32
    %c0_i32_0 = arith.constant 0 : i32
    %c0_i32_1 = arith.constant 0 : i32
    %c0_i32_2 = arith.constant 0 : i32
    return %c0_i32, %c0_i32_0, %c0_i32_1 : i32, i32, i32
  }
  func.func @transform_2(%arg0: i32) -> (i32, i32) {
    %c0_i32 = arith.constant 0 : i32
    %c0_i32_0 = arith.constant 0 : i32
    %c0_i32_1 = arith.constant 0 : i32
    return %c0_i32, %c0_i32_0 : i32, i32
  }
  func.func @transform_3(%arg0: i32) -> (i32, i32) {
    %c0_i32 = arith.constant 0 : i32
    %c0_i32_0 = arith.constant 0 : i32
    %c0_i32_1 = arith.constant 0 : i32
    return %c0_i32, %c0_i32_0 : i32, i32
  }
  func.func @transform_4(%arg0: i32) -> (i32, i32, i32, i32) {
    %c0_i32 = arith.constant 0 : i32
    %c0_i32_0 = arith.constant 0 : i32
    %c0_i32_1 = arith.constant 0 : i32
    %c0_i32_2 = arith.constant 0 : i32
    return %arg0, %c0_i32, %c0_i32_0, %c0_i32_1 : i32, i32, i32, i32
  }
}

module attributes {stable_mosaic.version = 11 : i64} {
  func.func @_fused_matmul_kernel(%arg0: i32, %arg1: i32, %arg2: memref<256x72xbf16, #tpu.memory_space<vmem>>, %arg3: memref<72x128xbf16, #tpu.memory_space<vmem>>, %arg4: memref<1x128xf32, #tpu.memory_space<vmem>>, %arg5: memref<1x128xf32, #tpu.memory_space<vmem>>, %arg6: memref<256x128xf32, #tpu.memory_space<vmem>>) attributes {dimension_semantics = [#tpu.dimension_semantics<parallel>, #tpu.dimension_semantics<parallel>], iteration_bounds = array<i64: 2, 1>, scalar_prefetch = 0 : i64, scratch_operands = 0 : i64, tpu.core_type = #tpu.core_type<tc>, window_params = [{transform_indices = @transform_0, window_bounds = array<i64: 256, 72>}, {transform_indices = @transform_1, window_bounds = array<i64: 72, 128>}, {transform_indices = @transform_2, window_bounds = array<i64: 1, 128>}, {transform_indices = @transform_3, window_bounds = array<i64: 1, 128>}, {transform_indices = @transform_4, window_bounds = array<i64: 256, 128>}]} {
    %c0 = arith.constant 0 : index
    %c0_0 = arith.constant 0 : index
    %0 = vector.load %arg2[%c0, %c0_0] : memref<256x72xbf16, #tpu.memory_space<vmem>>, vector<256x72xbf16>
    %c0_1 = arith.constant 0 : index
    %c0_2 = arith.constant 0 : index
    %1 = vector.load %arg3[%c0_1, %c0_2] : memref<72x128xbf16, #tpu.memory_space<vmem>>, vector<72x128xbf16>
    %cst = arith.constant dense<0.000000e+00> : vector<256x128xf32>
    %2 = tpu.matmul %0, %1, %cst {dimension_numbers = #tpu.dot_dimension_numbers<[1], [0], [0], [1], [0, 0, 1, 1], [], []>} : vector<256x72xbf16>, vector<72x128xbf16>, vector<256x128xf32> -> vector<256x128xf32>
    %c0_3 = arith.constant 0 : index
    %c0_4 = arith.constant 0 : index
    %3 = vector.load %arg4[%c0_3, %c0_4] : memref<1x128xf32, #tpu.memory_space<vmem>>, vector<1x128xf32>
    %4 = vector.broadcast %3 : vector<1x128xf32> to vector<256x128xf32>
    %5 = arith.mulf %2, %4 : vector<256x128xf32>
    %c0_5 = arith.constant 0 : index
    %c0_6 = arith.constant 0 : index
    %6 = vector.load %arg5[%c0_5, %c0_6] : memref<1x128xf32, #tpu.memory_space<vmem>>, vector<1x128xf32>
    %7 = vector.broadcast %6 : vector<1x128xf32> to vector<256x128xf32>
    %8 = arith.addf %5, %7 : vector<256x128xf32>
    %cst_7 = arith.constant 0.000000e+00 : f32
    %9 = vector.broadcast %cst_7 : f32 to vector<256x128xf32>
    %10 = arith.maximumf %8, %9 : vector<256x128xf32>
    %c0_8 = arith.constant 0 : index
    %c0_9 = arith.constant 0 : index
    %11 = vector.load %arg6[%c0_8, %c0_9] : memref<256x128xf32, #tpu.memory_space<vmem>>, vector<256x128xf32>
    tpu.vector_store %arg6[%c0_8, %c0_9], %10 {strides = array<i32>} : memref<256x128xf32, #tpu.memory_space<vmem>>, vector<256x128xf32>,
    return
  }
  func.func @transform_0(%arg0: i32, %arg1: i32) -> (i32, i32) {
    %c0_i32 = arith.constant 0 : i32
    %c0_i32_0 = arith.constant 0 : i32
    return %arg0, %c0_i32 : i32, i32
  }
  func.func @transform_1(%arg0: i32, %arg1: i32) -> (i32, i32) {
    %c0_i32 = arith.constant 0 : i32
    %c0_i32_0 = arith.constant 0 : i32
    return %c0_i32, %arg1 : i32, i32
  }
  func.func @transform_2(%arg0: i32, %arg1: i32) -> (i32, i32) {
    %c0_i32 = arith.constant 0 : i32
    %c0_i32_0 = arith.constant 0 : i32
    return %c0_i32, %arg1 : i32, i32
  }
  func.func @transform_3(%arg0: i32, %arg1: i32) -> (i32, i32) {
    %c0_i32 = arith.constant 0 : i32
    %c0_i32_0 = arith.constant 0 : i32
    return %c0_i32, %arg1 : i32, i32
  }
  func.func @transform_4(%arg0: i32, %arg1: i32) -> (i32, i32) {
    %c0_i32 = arith.constant 0 : i32
    return %arg0, %arg1 : i32, i32
  }
}

</mosaic_0001>

<llo_original>
// kernel: deform_up_forward.4
$region0: #{deform_up_forward.4}
  #allocation0 [shape = 'u32[]', space=smem, size = 0x4, offset = 0x4, fixed_abs, tag = 'smem constant byte address 0x4 - core index']
  #allocation1 [shape = 'u32[72,128]{1,0:T(1,128)}', space=vmem, size = 0x9000, scoped, tag = 'internal scratch']
  %s0 = inlined_call_operand.vmem [shape: bf16[2,18,18,8], index: 0, kind: input, shape index: {}]
  %s1 = inlined_call_operand.vmem [shape: bf16[9,8,128], index: 1, kind: input, shape index: {}]
  %s2 = inlined_call_operand.vmem [shape: f32[1,128], index: 2, kind: input, shape index: {}]
  %s3 = inlined_call_operand.vmem [shape: f32[1,128], index: 3, kind: input, shape index: {}]
  %s4 = inlined_call_operand.vmem [shape: f32[2,16,16,128], index: 4, kind: output, shape index: {}]
  %s5 = sld [smem:[#allocation0]]
  $region49: #{deform_up_forward.4} parent=0
    _
  %s7 = ssub.s32 1, %s5
  %s8 = scalar_select 0, %s7, %s5
  loop: start=0, step=1, limit=4
  $region2: #{deform_up_forward.4} parent=0 // loop_pre_header
    _
  $region3: #{deform_up_forward.4} parent=0 // loop_header
    %s10 = sphi 0, %s14
    %p11 = scmp.ge.s32.totalorder %s10, 4
    %s20 = sphi 0, %s22
    %s23 = sphi 0, %s20
    %s24 = sphi 0, %s23
    %s40 = sphi 0, %s24
    %s44 = sphi 0, %s44
    %s46 = sphi 0, %s44
    %s47 = sphi 0, %s46
    %s61 = sphi 0, %s47
    %s65 = sphi 0, %s65
    %s67 = sphi 0, %s65
    %s68 = sphi 0, %s67
    %s82 = sphi 0, %s68
    %s86 = sphi 0, %s86
    %s88 = sphi 0, %s86
    %s89 = sphi 0, %s88
    %s103 = sphi 0, %s89
    %s109 = sphi 0, %s111
    %s112 = sphi 0, %s109
    %s113 = sphi 0, %s112
    %s129 = sphi 0, %s113
  $region4: #{deform_up_forward.4} parent=0 // loop_header_branch
    %13 = sbr.rel (%p11) target = $region8
  $region5: #{deform_up_forward.4} parent=0 // loop_body
    %s15 = ssub.s32 %s10, 1
    %s16 = ssub.s32 %s10, 2
    %s17 = sadd.s32 %s10, 1
    %s18 = ssub.s32 %s10, %s17
    %p19 = scmp.eq.s32.totalorder %s18, 0
    %s21 = sadd.s32 %s20, 1
    %s22 = scalar_select %p19, %s20, %s21
    %p25 = pneg %p19
    %p26 = scmp.eq.s32.totalorder %s10, 1
    %p27 = por %p25, %p26
    %p28 = scmp.ne.s32.totalorder %s20, %s23
    %p29 = scmp.eq.s32.totalorder %s10, 0
    %p30 = por %p28, %p29
    %p31 = scmp.ne.s32.totalorder %s20, %s23
    %p32 = scmp.eq.s32.totalorder %s15, 1
    %p33 = por %p31, %p32
    %p34 = scmp.ne.s32.totalorder %s23, %s24
    %p35 = scmp.eq.s32.totalorder %s15, 0
    %p36 = por %p34, %p35
    %p37 = scmp.ne.s32.totalorder %s23, %s24
    %p38 = scmp.eq.s32.totalorder %s16, 1
    %p39 = por %p37, %p38
    %p41 = scmp.ne.s32.totalorder %s24, %s40
    %p42 = scmp.eq.s32.totalorder %s16, 0
    %p43 = por %p41, %p42
    %s45 = sadd.s32 %s44, 1
    %p48 = scmp.eq.s32.totalorder %s10, 1
    %p49 = scmp.ne.s32.totalorder %s44, %s46
    %p50 = scmp.eq.s32.totalorder %s10, 0
    %p51 = por %p49, %p50
    %p52 = scmp.ne.s32.totalorder %s44, %s46
    %p53 = scmp.eq.s32.totalorder %s15, 1
    %p54 = por %p52, %p53
    %p55 = scmp.ne.s32.totalorder %s46, %s47
    %p56 = scmp.eq.s32.totalorder %s15, 0
    %p57 = por %p55, %p56
    %p58 = scmp.ne.s32.totalorder %s46, %s47
    %p59 = scmp.eq.s32.totalorder %s16, 1
    %p60 = por %p58, %p59
    %p62 = scmp.ne.s32.totalorder %s47, %s61
    %p63 = scmp.eq.s32.totalorder %s16, 0
    %p64 = por %p62, %p63
    %s66 = sadd.s32 %s65, 1
    %p69 = scmp.eq.s32.totalorder %s10, 1
    %p70 = scmp.ne.s32.totalorder %s65, %s67
    %p71 = scmp.eq.s32.totalorder %s10, 0
    %p72 = por %p70, %p71
    %p73 = scmp.ne.s32.totalorder %s65, %s67
    %p74 = scmp.eq.s32.totalorder %s15, 1
    %p75 = por %p73, %p74
    %p76 = scmp.ne.s32.totalorder %s67, %s68
    %p77 = scmp.eq.s32.totalorder %s15, 0
    %p78 = por %p76, %p77
    %p79 = scmp.ne.s32.totalorder %s67, %s68
    %p80 = scmp.eq.s32.totalorder %s16, 1
    %p81 = por %p79, %p80
    %p83 = scmp.ne.s32.totalorder %s68, %s82
    %p84 = scmp.eq.s32.totalorder %s16, 0
    %p85 = por %p83, %p84
    %s87 = sadd.s32 %s86, 1
    %p90 = scmp.eq.s32.totalorder %s10, 1
    %p91 = scmp.ne.s32.totalorder %s86, %s88
    %p92 = scmp.eq.s32.totalorder %s10, 0
    %p93 = por %p91, %p92
    %p94 = scmp.ne.s32.totalorder %s86, %s88
    %p95 = scmp.eq.s32.totalorder %s15, 1
    %p96 = por %p94, %p95
    %p97 = scmp.ne.s32.totalorder %s88, %s89
    %p98 = scmp.eq.s32.totalorder %s15, 0
    %p99 = por %p97, %p98
    %p100 = scmp.ne.s32.totalorder %s88, %s89
    %p101 = scmp.eq.s32.totalorder %s16, 1
    %p102 = por %p100, %p101
    %p104 = scmp.ne.s32.totalorder %s89, %s103
    %p105 = scmp.eq.s32.totalorder %s16, 0
    %p106 = por %p104, %p105
    %s107 = ssub.s32 %s10, %s17
    %p108 = scmp.eq.s32.totalorder %s107, 0
    %s110 = sadd.s32 %s109, 1
    %s111 = scalar_select %p108, %s109, %s110
    %p114 = pneg %p108
    %p115 = scmp.eq.s32.totalorder %s10, 1
    %p116 = por %p114, %p115
    %p117 = scmp.ne.s32.totalorder %s109, %s112
    %p118 = scmp.eq.s32.totalorder %s10, 0
    %p119 = por %p117, %p118
    %p120 = scmp.ne.s32.totalorder %s109, %s112
    %p121 = scmp.eq.s32.totalorder %s15, 1
    %p122 = por %p120, %p121
    %p123 = scmp.ne.s32.totalorder %s112, %s113
    %p124 = scmp.eq.s32.totalorder %s15, 0
    %p125 = por %p123, %p124
    %p126 = scmp.ne.s32.totalorder %s112, %s113
    %p127 = scmp.eq.s32.totalorder %s16, 1
    %p128 = por %p126, %p127
    %p130 = scmp.ne.s32.totalorder %s113, %s129
    %p131 = scmp.eq.s32.totalorder %s16, 0
    %p132 = por %p130, %p131
    %p133 = scmp.le.s32.totalorder 1, %s10
    %p134 = scmp.lt.s32.totalorder %s10, 3
    %p135 = pnand %p133, %p134
    %p136 = pneg %p135
    // Predicated region
    $region9: #{deform_up_forward.4} parent=5 // pred_check
      _
    $region10: #{deform_up_forward.4} parent=5 // pred_check_branch
      %138 = sbr.rel (%p135) target = $region12
    $region11: #{deform_up_forward.4} parent=5 // pred_region
      %s139 = ssub.s32 %s10, 1
      // Predicated region
      $region13: #{deform_up_forward.4} parent=11 // pred_check
        %p140 = pneg %p57
      $region14: #{deform_up_forward.4} parent=11 // pred_check_branch
        %142 = sbr.rel (%p140) target = $region16
      $region15: #{deform_up_forward.4} parent=11 // pred_region
        _
      $region16: #{deform_up_forward.4} parent=11 // pred_fallthru
        _
      // Predicated region
      $region17: #{deform_up_forward.4} parent=11 // pred_check
        %p143 = pneg %p78
      $region18: #{deform_up_forward.4} parent=11 // pred_check_branch
        %145 = sbr.rel (%p143) target = $region20
      $region19: #{deform_up_forward.4} parent=11 // pred_region
        _
      $region20: #{deform_up_forward.4} parent=11 // pred_fallthru
        _
      // Predicated region
      $region21: #{deform_up_forward.4} parent=11 // pred_check
        %p146 = pneg %p99
      $region22: #{deform_up_forward.4} parent=11 // pred_check_branch
        %148 = sbr.rel (%p146) target = $region24
      $region23: #{deform_up_forward.4} parent=11 // pred_region
        _
      $region24: #{deform_up_forward.4} parent=11 // pred_fallthru
        _
    $region12: #{deform_up_forward.4} parent=5 // pred_fallthru
      _
    %p149 = scmp.lt.s32.totalorder %s10, 2
    // Predicated region
    $region25: #{deform_up_forward.4} parent=5 // pred_check
      %p150 = pneg %p149
    $region26: #{deform_up_forward.4} parent=5 // pred_check_branch
      %152 = sbr.rel (%p150) target = $region28
    $region27: #{deform_up_forward.4} parent=5 // pred_region
      // Predicated region
      $region29: #{deform_up_forward.4} parent=27 // pred_check
        %p153 = pneg %p30
      $region30: #{deform_up_forward.4} parent=27 // pred_check_branch
        %155 = sbr.rel (%p153) target = $region32
      $region31: #{deform_up_forward.4} parent=27 // pred_region
        %p156 = scmp.lt.s32.totalorder %s10, 1
        %s157 = scalar_select %p156, %s10, 1
        %s158 = smul.addr %s157, 54
        %s159 = smul.addr %s158, 4
        %s160 = scalar_lea.vmem %s0, %s159
      $region32: #{deform_up_forward.4} parent=27 // pred_fallthru
        _
    $region28: #{deform_up_forward.4} parent=5 // pred_fallthru
      _
    %p161 = scmp.le.s32.totalorder 1, %s10
    %p162 = scmp.lt.s32.totalorder %s10, 3
    %p163 = pnand %p161, %p162
    %p164 = pneg %p163
    // Predicated region
    $region33: #{deform_up_forward.4} parent=5 // pred_check
      _
    $region34: #{deform_up_forward.4} parent=5 // pred_check_branch
      %166 = sbr.rel (%p163) target = $region36
    $region35: #{deform_up_forward.4} parent=5 // pred_region
      %s167 = ssub.s32 %s10, 1
      %p168 = scmp.lt.s32.totalorder %s15, 1
      %s169 = scalar_select %p168, %s15, 1
      %s170 = smul.addr %s169, 54
      %s171 = smul.addr %s170, 4
      %s172 = scalar_lea.vmem %s0, %s171
      %p173 = pneg %p36
      %p174 = pneg %p33
      %p175 = pneg %p57
      %p176 = pneg %p54
      %p177 = pneg %p78
      %p178 = pneg %p75
      %p179 = pneg %p99
      %p180 = pneg %p96
      %p181 = pneg %p125
      %p182 = pneg %p122
      %p183 = scmp.lt.s32.totalorder %s15, 1
      %s184 = scalar_select %p183, %s15, 1
      %s185 = smul.addr %s184, 32
      %s186 = smul.addr %s185, 8
      %s187 = scalar_lea.vmem %s4, %s186
      %p188 = scmp.lt.s32.totalorder %s15, 1
      %s189 = scalar_select %p188, %s15, 1
      %s190 = smul.addr %s189, 54
      %s191 = smul.addr %s190, 4
      %s192 = scalar_lea.vmem %s0, %s191
      %p193 = scmp.lt.s32.totalorder %s15, 1
      %s194 = scalar_select %p193, %s15, 1
      %s195 = smul.addr %s194, 32
      %s196 = smul.addr %s195, 8
      %s197 = scalar_lea.vmem %s4, %s196
      %v199 = vld [vmem:[%s192] sm:$0xf]
      %v200 = vld [vmem:[%s192 + $0x4] sm:$0xf]
      %v201 = vld [vmem:[%s192 + $0xc] sm:$0xf]
      %v202 = vld [vmem:[%s192 + $0x10] sm:$0xf]
      %v203 = vld [vmem:[%s192 + $0x18] sm:$0xf]
      %v204 = vld [vmem:[%s192 + $0x1c] sm:$0xf]
      %v205 = vld [vmem:[%s192 + $0x24] sm:$0xf]
      %v206 = vld [vmem:[%s192 + $0x28] sm:$0xf]
      %v207 = vld [vmem:[%s192 + $0x30] sm:$0xf]
      %v208 = vld [vmem:[%s192 + $0x34] sm:$0xf]
      %v209 = vld [vmem:[%s192 + $0x3c] sm:$0xf]
      %v210 = vld [vmem:[%s192 + $0x40] sm:$0xf]
      %v211 = vld [vmem:[%s192 + $0x48] sm:$0xf]
      %v212 = vld [vmem:[%s192 + $0x4c] sm:$0xf]
      %v213 = vld [vmem:[%s192 + $0x54] sm:$0xf]
      %v214 = vld [vmem:[%s192 + $0x58] sm:$0xf]
      %v215 = vld [vmem:[%s192 + $0x60] sm:$0xf]
      %v216 = vld [vmem:[%s192 + $0x64] sm:$0xf]
      %v217 = vld [vmem:[%s192 + $0x6c] sm:$0xf]
      %v218 = vld [vmem:[%s192 + $0x70] sm:$0xf]
      %v219 = vld [vmem:[%s192 + $0x78] sm:$0xf]
      %v220 = vld [vmem:[%s192 + $0x7c] sm:$0xf]
      %v221 = vld [vmem:[%s192 + $0x84] sm:$0xf]
      %v222 = vld [vmem:[%s192 + $0x88] sm:$0xf]
      %v223 = vld [vmem:[%s192 + $0x90] sm:$0xf]
      %v224 = vld [vmem:[%s192 + $0x94] sm:$0xf]
      %v225 = vld [vmem:[%s192 + $0x9c] sm:$0xf]
      %v226 = vld [vmem:[%s192 + $0xa0] sm:$0xf]
      %v227 = vld [vmem:[%s192 + $0xa8] sm:$0xf]
      %v228 = vld [vmem:[%s192 + $0xac] sm:$0xf]
      %v229 = vld [vmem:[%s192 + $0xb4] sm:$0xf]
      %v230 = vld [vmem:[%s192 + $0xb8] sm:$0xf]
      %v231 = vld [vmem:[%s1] sm:$0xf]
      %v232 = vld [vmem:[%s192 + $0x8] sm:$0x1]
      %v233 = vld [vmem:[%s192 + $0x14] sm:$0x1]
      %v234 = vld [vmem:[%s192 + $0x20] sm:$0x1]
      %v235 = vld [vmem:[%s192 + $0x2c] sm:$0x1]
      %v236 = vld [vmem:[%s192 + $0x38] sm:$0x1]
      %v237 = vld [vmem:[%s192 + $0x44] sm:$0x1]
      %v238 = vld [vmem:[%s192 + $0x50] sm:$0x1]
      %v239 = vld [vmem:[%s192 + $0x5c] sm:$0x1]
      %v240 = vld [vmem:[%s192 + $0x68] sm:$0x1]
      %v241 = vld [vmem:[%s192 + $0x74] sm:$0x1]
      %v242 = vld [vmem:[%s192 + $0x80] sm:$0x1]
      %v243 = vld [vmem:[%s192 + $0x8c] sm:$0x1]
      %v244 = vld [vmem:[%s192 + $0x98] sm:$0x1]
      %v245 = vld [vmem:[%s192 + $0xa4] sm:$0x1]
      %v246 = vld [vmem:[%s192 + $0xb0] sm:$0x1]
      %v247 = vld [vmem:[%s192 + $0xbc] sm:$0x1]
      %vm248 = vsmask.f32 3328
      %vm249 = vsmask.f32 7440
      %vm250 = vmor %vm248, %vm249
      %v252 = vshrl.u32 %v199, 16
      %v254 = vrot.slane %v252, 4
      %v255 = vshll.u32 %v199, 16
      %v257 = vrot.slane %v255, 5
      %v258 = vor.u32 %v254, %v257
      %v259 = vrot.slane %v258, 4
      %v261 = vshll.u32 %v200, 16
      %v263 = vrot.slane %v261, 5
      %v264 = vsel %vm250, %v259, %v263
      %v265 = vshrl.u32 %v200, 16
      %v267 = vrot.slane %v265, 4
      %v268 = vor.u32 %v267, %v263
      %v269 = vrot.slane %v268, 4
      %v271 = vshll.u32 %v232, 16
      %v273 = vrot.slane %v271, 5
      %v274 = vsel %vm250, %v269, %v273
      %v276 = vshrl.u32 %v201, 16
      %v278 = vrot.slane %v276, 4
      %v279 = vshll.u32 %v201, 16
      %v281 = vrot.slane %v279, 5
      %v282 = vor.u32 %v278, %v281
      %v283 = vrot.slane %v282, 4
      %v285 = vshll.u32 %v202, 16
      %v287 = vrot.slane %v285, 5
      %v288 = vsel %vm250, %v283, %v287
      %v289 = vshrl.u32 %v202, 16
      %v291 = vrot.slane %v289, 4
      %v292 = vor.u32 %v291, %v287
      %v293 = vrot.slane %v292, 4
      %v295 = vshll.u32 %v233, 16
      %v297 = vrot.slane %v295, 5
      %v298 = vsel %vm250, %v293, %v297
      %v300 = vshrl.u32 %v203, 16
      %v302 = vrot.slane %v300, 4
      %v303 = vshll.u32 %v203, 16
      %v305 = vrot.slane %v303, 5
      %v306 = vor.u32 %v302, %v305
      %v307 = vrot.slane %v306, 4
      %v309 = vshll.u32 %v204, 16
      %v311 = vrot.slane %v309, 5
      %v312 = vsel %vm250, %v307, %v311
      %v313 = vshrl.u32 %v204, 16
      %v315 = vrot.slane %v313, 4
      %v316 = vor.u32 %v315, %v311
      %v317 = vrot.slane %v316, 4
      %v319 = vshll.u32 %v234, 16
      %v321 = vrot.slane %v319, 5
      %v322 = vsel %vm250, %v317, %v321
      %v324 = vshrl.u32 %v205, 16
      %v326 = vrot.slane %v324, 4
      %v327 = vshll.u32 %v205, 16
      %v329 = vrot.slane %v327, 5
      %v330 = vor.u32 %v326, %v329
      %v331 = vrot.slane %v330, 4
      %v333 = vshll.u32 %v206, 16
      %v335 = vrot.slane %v333, 5
      %v336 = vsel %vm250, %v331, %v335
      %v337 = vshrl.u32 %v206, 16
      %v339 = vrot.slane %v337, 4
      %v340 = vor.u32 %v339, %v335
      %v341 = vrot.slane %v340, 4
      %v343 = vshll.u32 %v235, 16
      %v345 = vrot.slane %v343, 5
      %v346 = vsel %vm250, %v341, %v345
      %v348 = vshrl.u32 %v207, 16
      %v350 = vrot.slane %v348, 4
      %v351 = vshll.u32 %v207, 16
      %v353 = vrot.slane %v351, 5
      %v354 = vor.u32 %v350, %v353
      %v355 = vrot.slane %v354, 4
      %v357 = vshll.u32 %v208, 16
      %v359 = vrot.slane %v357, 5
      %v360 = vsel %vm250, %v355, %v359
      %v361 = vshrl.u32 %v208, 16
      %v363 = vrot.slane %v361, 4
      %v364 = vor.u32 %v363, %v359
      %v365 = vrot.slane %v364, 4
      %v367 = vshll.u32 %v236, 16
      %v369 = vrot.slane %v367, 5
      %v370 = vsel %vm250, %v365, %v369
      %v372 = vshrl.u32 %v209, 16
      %v374 = vrot.slane %v372, 4
      %v375 = vshll.u32 %v209, 16
      %v377 = vrot.slane %v375, 5
      %v378 = vor.u32 %v374, %v377
      %v379 = vrot.slane %v378, 4
      %v381 = vshll.u32 %v210, 16
      %v383 = vrot.slane %v381, 5
      %v384 = vsel %vm250, %v379, %v383
      %v385 = vshrl.u32 %v210, 16
      %v387 = vrot.slane %v385, 4
      %v388 = vor.u32 %v387, %v383
      %v389 = vrot.slane %v388, 4
      %v391 = vshll.u32 %v237, 16
      %v393 = vrot.slane %v391, 5
      %v394 = vsel %vm250, %v389, %v393
      %v396 = vshrl.u32 %v211, 16
      %v398 = vrot.slane %v396, 4
      %v399 = vshll.u32 %v211, 16
      %v401 = vrot.slane %v399, 5
      %v402 = vor.u32 %v398, %v401
      %v403 = vrot.slane %v402, 4
      %v405 = vshll.u32 %v212, 16
      %v407 = vrot.slane %v405, 5
      %v408 = vsel %vm250, %v403, %v407
      %v409 = vshrl.u32 %v212, 16
      %v411 = vrot.slane %v409, 4
      %v412 = vor.u32 %v411, %v407
      %v413 = vrot.slane %v412, 4
      %v415 = vshll.u32 %v238, 16
      %v417 = vrot.slane %v415, 5
      %v418 = vsel %vm250, %v413, %v417
      %v420 = vshrl.u32 %v213, 16
      %v422 = vrot.slane %v420, 4
      %v423 = vshll.u32 %v213, 16
      %v425 = vrot.slane %v423, 5
      %v426 = vor.u32 %v422, %v425
      %v427 = vrot.slane %v426, 4
      %v429 = vshll.u32 %v214, 16
      %v431 = vrot.slane %v429, 5
      %v432 = vsel %vm250, %v427, %v431
      %v433 = vshrl.u32 %v214, 16
      %v435 = vrot.slane %v433, 4
      %v436 = vor.u32 %v435, %v431
      %v437 = vrot.slane %v436, 4
      %v439 = vshll.u32 %v239, 16
      %v441 = vrot.slane %v439, 5
      %v442 = vsel %vm250, %v437, %v441
      %v444 = vshrl.u32 %v215, 16
      %v446 = vrot.slane %v444, 4
      %v447 = vshll.u32 %v215, 16
      %v449 = vrot.slane %v447, 5
      %v450 = vor.u32 %v446, %v449
      %v451 = vrot.slane %v450, 4
      %v453 = vshll.u32 %v216, 16
      %v455 = vrot.slane %v453, 5
      %v456 = vsel %vm250, %v451, %v455
      %v457 = vshrl.u32 %v216, 16
      %v459 = vrot.slane %v457, 4
      %v460 = vor.u32 %v459, %v455
      %v461 = vrot.slane %v460, 4
      %v463 = vshll.u32 %v240, 16
      %v465 = vrot.slane %v463, 5
      %v466 = vsel %vm250, %v461, %v465
      %v468 = vshrl.u32 %v217, 16
      %v470 = vrot.slane %v468, 4
      %v471 = vshll.u32 %v217, 16
      %v473 = vrot.slane %v471, 5
      %v474 = vor.u32 %v470, %v473
      %v475 = vrot.slane %v474, 4
      %v477 = vshll.u32 %v218, 16
      %v479 = vrot.slane %v477, 5
      %v480 = vsel %vm250, %v475, %v479
      %v481 = vshrl.u32 %v218, 16
      %v483 = vrot.slane %v481, 4
      %v484 = vor.u32 %v483, %v479
      %v485 = vrot.slane %v484, 4
      %v487 = vshll.u32 %v241, 16
      %v489 = vrot.slane %v487, 5
      %v490 = vsel %vm250, %v485, %v489
      %v492 = vshrl.u32 %v219, 16
      %v494 = vrot.slane %v492, 4
      %v495 = vshll.u32 %v219, 16
      %v497 = vrot.slane %v495, 5
      %v498 = vor.u32 %v494, %v497
      %v499 = vrot.slane %v498, 4
      %v501 = vshll.u32 %v220, 16
      %v503 = vrot.slane %v501, 5
      %v504 = vsel %vm250, %v499, %v503
      %v505 = vshrl.u32 %v220, 16
      %v507 = vrot.slane %v505, 4
      %v508 = vor.u32 %v507, %v503
      %v509 = vrot.slane %v508, 4
      %v511 = vshll.u32 %v242, 16
      %v513 = vrot.slane %v511, 5
      %v514 = vsel %vm250, %v509, %v513
      %v516 = vshrl.u32 %v221, 16
      %v518 = vrot.slane %v516, 4
      %v519 = vshll.u32 %v221, 16
      %v521 = vrot.slane %v519, 5
      %v522 = vor.u32 %v518, %v521
      %v523 = vrot.slane %v522, 4
      %v525 = vshll.u32 %v222, 16
      %v527 = vrot.slane %v525, 5
      %v528 = vsel %vm250, %v523, %v527
      %v529 = vshrl.u32 %v222, 16
      %v531 = vrot.slane %v529, 4
      %v532 = vor.u32 %v531, %v527
      %v533 = vrot.slane %v532, 4
      %v535 = vshll.u32 %v243, 16
      %v537 = vrot.slane %v535, 5
      %v538 = vsel %vm250, %v533, %v537
      %v540 = vshrl.u32 %v223, 16
      %v542 = vrot.slane %v540, 4
      %v543 = vshll.u32 %v223, 16
      %v545 = vrot.slane %v543, 5
      %v546 = vor.u32 %v542, %v545
      %v547 = vrot.slane %v546, 4
      %v549 = vshll.u32 %v224, 16
      %v551 = vrot.slane %v549, 5
      %v552 = vsel %vm250, %v547, %v551
      %v553 = vshrl.u32 %v224, 16
      %v555 = vrot.slane %v553, 4
      %v556 = vor.u32 %v555, %v551
      %v557 = vrot.slane %v556, 4
      %v559 = vshll.u32 %v244, 16
      %v561 = vrot.slane %v559, 5
      %v562 = vsel %vm250, %v557, %v561
      %v564 = vshrl.u32 %v225, 16
      %v566 = vrot.slane %v564, 4
      %v567 = vshll.u32 %v225, 16
      %v569 = vrot.slane %v567, 5
      %v570 = vor.u32 %v566, %v569
      %v571 = vrot.slane %v570, 4
      %v573 = vshll.u32 %v226, 16
      %v575 = vrot.slane %v573, 5
      %v576 = vsel %vm250, %v571, %v575
      %v577 = vshrl.u32 %v226, 16
      %v579 = vrot.slane %v577, 4
      %v580 = vor.u32 %v579, %v575
      %v581 = vrot.slane %v580, 4
      %v583 = vshll.u32 %v245, 16
      %v585 = vrot.slane %v583, 5
      %v586 = vsel %vm250, %v581, %v585
      %v588 = vshrl.u32 %v227, 16
      %v590 = vrot.slane %v588, 4
      %v591 = vshll.u32 %v227, 16
      %v593 = vrot.slane %v591, 5
      %v594 = vor.u32 %v590, %v593
      %v595 = vrot.slane %v594, 4
      %v597 = vshll.u32 %v228, 16
      %v599 = vrot.slane %v597, 5
      %v600 = vsel %vm250, %v595, %v599
      %v601 = vshrl.u32 %v228, 16
      %v603 = vrot.slane %v601, 4
      %v604 = vor.u32 %v603, %v599
      %v605 = vrot.slane %v604, 4
      %v607 = vshll.u32 %v246, 16
      %v609 = vrot.slane %v607, 5
      %v610 = vsel %vm250, %v605, %v609
      %v612 = vshrl.u32 %v229, 16
      %v614 = vrot.slane %v612, 4
      %v615 = vshll.u32 %v229, 16
      %v617 = vrot.slane %v615, 5
      %v618 = vor.u32 %v614, %v617
      %v619 = vrot.slane %v618, 4
      %v621 = vshll.u32 %v230, 16
      %v623 = vrot.slane %v621, 5
      %v624 = vsel %vm250, %v619, %v623
      %v625 = vshrl.u32 %v230, 16
      %v627 = vrot.slane %v625, 4
      %v628 = vor.u32 %v627, %v623
      %v629 = vrot.slane %v628, 4
      %v631 = vshll.u32 %v247, 16
      %v633 = vrot.slane %v631, 5
      %v634 = vsel %vm250, %v629, %v633
      %s635 = scalar_lea.vmem %s1, 4
      %v636 = vld [vmem:[%s635] sm:$0xf]
      %v637 = vunpack.c.l.b16 %v264
      %v638 = vunpack.c.l.b16 %v274
      %v639 = vunpack.c.l.b16 %v288
      %v640 = vunpack.c.l.b16 %v298
      %v641 = vunpack.c.l.b16 %v312
      %v642 = vunpack.c.l.b16 %v322
      %v643 = vunpack.c.l.b16 %v336
      %v644 = vunpack.c.l.b16 %v346
      %v645 = vunpack.c.l.b16 %v360
      %v646 = vunpack.c.l.b16 %v370
      %v647 = vunpack.c.l.b16 %v384
      %v648 = vunpack.c.l.b16 %v394
      %v649 = vunpack.c.l.b16 %v408
      %v650 = vunpack.c.l.b16 %v418
      %v651 = vunpack.c.l.b16 %v432
      %v652 = vunpack.c.l.b16 %v442
      %v653 = vunpack.c.l.b16 %v456
      %v654 = vunpack.c.l.b16 %v466
      %v655 = vunpack.c.l.b16 %v480
      %v656 = vunpack.c.l.b16 %v490
      %v657 = vunpack.c.l.b16 %v504
      %v658 = vunpack.c.l.b16 %v514
      %v659 = vunpack.c.l.b16 %v528
      %v660 = vunpack.c.l.b16 %v538
      %v661 = vunpack.c.l.b16 %v552
      %v662 = vunpack.c.l.b16 %v562
      %v663 = vunpack.c.l.b16 %v576
      %v664 = vunpack.c.l.b16 %v586
      %v665 = vunpack.c.l.b16 %v600
      %v666 = vunpack.c.l.b16 %v610
      %v667 = vunpack.c.l.b16 %v624
      %v668 = vunpack.c.l.b16 %v634
      %v669 = vpack.c.b16 %v638, %v637
      %v670 = vpack.c.b16 %v640, %v639
      %v671 = vpack.c.b16 %v642, %v641
      %v672 = vpack.c.b16 %v644, %v643
      %v673 = vpack.c.b16 %v646, %v645
      %v674 = vpack.c.b16 %v648, %v647
      %v675 = vpack.c.b16 %v650, %v649
      %v676 = vpack.c.b16 %v652, %v651
      %v677 = vpack.c.b16 %v654, %v653
      %v678 = vpack.c.b16 %v656, %v655
      %v679 = vpack.c.b16 %v658, %v657
      %v680 = vpack.c.b16 %v660, %v659
      %v681 = vpack.c.b16 %v662, %v661
      %v682 = vpack.c.b16 %v664, %v663
      %v683 = vpack.c.b16 %v666, %v665
      %v684 = vpack.c.b16 %v668, %v667
      %vm685 = vcmask 64512
      %v687 = vsel %vm685, %v669, 0
      %v690 = vsel %vm685, %v670, 0
      %v693 = vsel %vm685, %v671, 0
      %v696 = vsel %vm685, %v672, 0
      %v699 = vsel %vm685, %v673, 0
      %v702 = vsel %vm685, %v674, 0
      %v705 = vsel %vm685, %v675, 0
      %v708 = vsel %vm685, %v676, 0
      %v711 = vsel %vm685, %v677, 0
      %v714 = vsel %vm685, %v678, 0
      %v717 = vsel %vm685, %v679, 0
      %v720 = vsel %vm685, %v680, 0
      %v723 = vsel %vm685, %v681, 0
      %v726 = vsel %vm685, %v682, 0
      %v729 = vsel %vm685, %v683, 0
      %v732 = vsel %vm685, %v684, 0
      %vm734 = vcmask 1043456
      %v736 = vsel %vm734, %v636, 0
      %738 = vmatpush.bf16.msra.mxu0 0
      %739 = vmatpush.bf16.msra.mxu0 0
      %740 = vmatpush.bf16.msra.mxu0 0
      %741 = vmatpush.bf16.msra.mxu0 0
      %742 = vmatpush.bf16.msra.mxu0 0
      %743 = vmatpush.bf16.msra.mxu0 0
      %744 = vmatpush.bf16.msra.mxu0 0
      %745 = vmatpush.bf16.msra.mxu0 %v736
      %746 = vmatmul.bf16.gmra.mxu0 %v687
      %v747 = vpop.f32.mrf.mxu0
      %v748 = vadd.f32 0.0, %v747
      %v749 = vpop.f32.mrf.mxu0
      %v750 = vadd.f32 0.0, %v749
      %751 = vmatmul.bf16.gmra.mxu0 %v690
      %v752 = vpop.f32.mrf.mxu0
      %v753 = vadd.f32 0.0, %v752
      %v754 = vpop.f32.mrf.mxu0
      %v755 = vadd.f32 0.0, %v754
      %756 = vmatmul.bf16.gmra.mxu0 %v693
      %v757 = vpop.f32.mrf.mxu0
      %v758 = vadd.f32 0.0, %v757
      %v759 = vpop.f32.mrf.mxu0
      %v760 = vadd.f32 0.0, %v759
      %761 = vmatmul.bf16.gmra.mxu0 %v696
      %v762 = vpop.f32.mrf.mxu0
      %v763 = vadd.f32 0.0, %v762
      %v764 = vpop.f32.mrf.mxu0
      %v765 = vadd.f32 0.0, %v764
      %766 = vmatmul.bf16.gmra.mxu0 %v699
      %v767 = vpop.f32.mrf.mxu0
      %v768 = vadd.f32 0.0, %v767
      %v769 = vpop.f32.mrf.mxu0
      %v770 = vadd.f32 0.0, %v769
      %771 = vmatmul.bf16.gmra.mxu0 %v702
      %v772 = vpop.f32.mrf.mxu0
      %v773 = vadd.f32 0.0, %v772
      %v774 = vpop.f32.mrf.mxu0
      %v775 = vadd.f32 0.0, %v774
      %776 = vmatmul.bf16.gmra.mxu0 %v705
      %v777 = vpop.f32.mrf.mxu0
      %v778 = vadd.f32 0.0, %v777
      %v779 = vpop.f32.mrf.mxu0
      %v780 = vadd.f32 0.0, %v779
      %781 = vmatmul.bf16.gmra.mxu0 %v708
      %v782 = vpop.f32.mrf.mxu0
      %v783 = vadd.f32 0.0, %v782
      %v784 = vpop.f32.mrf.mxu0
      %v785 = vadd.f32 0.0, %v784
      %786 = vmatmul.bf16.gmra.mxu0 %v711
      %v787 = vpop.f32.mrf.mxu0
      %v788 = vadd.f32 0.0, %v787
      %v789 = vpop.f32.mrf.mxu0
      %v790 = vadd.f32 0.0, %v789
      %791 = vmatmul.bf16.gmra.mxu0 %v714
      %v792 = vpop.f32.mrf.mxu0
      %v793 = vadd.f32 0.0, %v792
      %v794 = vpop.f32.mrf.mxu0
      %v795 = vadd.f32 0.0, %v794
      %796 = vmatmul.bf16.gmra.mxu0 %v717
      %v797 = vpop.f32.mrf.mxu0
      %v798 = vadd.f32 0.0, %v797
      %v799 = vpop.f32.mrf.mxu0
      %v800 = vadd.f32 0.0, %v799
      %801 = vmatmul.bf16.gmra.mxu0 %v720
      %v802 = vpop.f32.mrf.mxu0
      %v803 = vadd.f32 0.0, %v802
      %v804 = vpop.f32.mrf.mxu0
      %v805 = vadd.f32 0.0, %v804
      %806 = vmatmul.bf16.gmra.mxu0 %v723
      %v807 = vpop.f32.mrf.mxu0
      %v808 = vadd.f32 0.0, %v807
      %v809 = vpop.f32.mrf.mxu0
      %v810 = vadd.f32 0.0, %v809
      %811 = vmatmul.bf16.gmra.mxu0 %v726
      %v812 = vpop.f32.mrf.mxu0
      %v813 = vadd.f32 0.0, %v812
      %v814 = vpop.f32.mrf.mxu0
      %v815 = vadd.f32 0.0, %v814
      %816 = vmatmul.bf16.gmra.mxu0 %v729
      %v817 = vpop.f32.mrf.mxu0
      %v818 = vadd.f32 0.0, %v817
      %v819 = vpop.f32.mrf.mxu0
      %v820 = vadd.f32 0.0, %v819
      %821 = vmatmul.bf16.gmra.mxu0 %v732
      %v822 = vpop.f32.mrf.mxu0
      %v823 = vadd.f32 0.0, %v822
      %v824 = vpop.f32.mrf.mxu0
      %v825 = vadd.f32 0.0, %v824
      %826 = vdwg.mxu0
      %v859 = vunpack.c.l.b16 %v199
      %v860 = vunpack.c.l.b16 %v200
      %v861 = vunpack.c.l.b16 %v201
      %v862 = vunpack.c.l.b16 %v202
      %v863 = vunpack.c.l.b16 %v203
      %v864 = vunpack.c.l.b16 %v204
      %v865 = vunpack.c.l.b16 %v205
      %v866 = vunpack.c.l.b16 %v206
      %v867 = vunpack.c.l.b16 %v207
      %v868 = vunpack.c.l.b16 %v208
      %v869 = vunpack.c.l.b16 %v209
      %v870 = vunpack.c.l.b16 %v210
      %v871 = vunpack.c.l.b16 %v211
      %v872 = vunpack.c.l.b16 %v212
      %v873 = vunpack.c.l.b16 %v213
      %v874 = vunpack.c.l.b16 %v214
      %v875 = vunpack.c.l.b16 %v215
      %v876 = vunpack.c.l.b16 %v216
      %v877 = vunpack.c.l.b16 %v217
      %v878 = vunpack.c.l.b16 %v218
      %v879 = vunpack.c.l.b16 %v219
      %v880 = vunpack.c.l.b16 %v220
      %v881 = vunpack.c.l.b16 %v221
      %v882 = vunpack.c.l.b16 %v222
      %v883 = vunpack.c.l.b16 %v223
      %v884 = vunpack.c.l.b16 %v224
      %v885 = vunpack.c.l.b16 %v225
      %v886 = vunpack.c.l.b16 %v226
      %v887 = vunpack.c.l.b16 %v227
      %v888 = vunpack.c.l.b16 %v228
      %v889 = vunpack.c.l.b16 %v229
      %v890 = vunpack.c.l.b16 %v230
      %v891 = vpack.c.b16 %v860, %v859
      %v892 = vpack.c.b16 %v862, %v861
      %v893 = vpack.c.b16 %v864, %v863
      %v894 = vpack.c.b16 %v866, %v865
      %v895 = vpack.c.b16 %v868, %v867
      %v896 = vpack.c.b16 %v870, %v869
      %v897 = vpack.c.b16 %v872, %v871
      %v898 = vpack.c.b16 %v874, %v873
      %v899 = vpack.c.b16 %v876, %v875
      %v900 = vpack.c.b16 %v878, %v877
      %v901 = vpack.c.b16 %v880, %v879
      %v902 = vpack.c.b16 %v882, %v881
      %v903 = vpack.c.b16 %v884, %v883
      %v904 = vpack.c.b16 %v886, %v885
      %v905 = vpack.c.b16 %v888, %v887
      %v906 = vpack.c.b16 %v890, %v889
      %v908 = vsel %vm685, %v891, 0
      %v911 = vsel %vm685, %v892, 0
      %v914 = vsel %vm685, %v893, 0
      %v917 = vsel %vm685, %v894, 0
      %v920 = vsel %vm685, %v895, 0
      %v923 = vsel %vm685, %v896, 0
      %v926 = vsel %vm685, %v897, 0
      %v929 = vsel %vm685, %v898, 0
      %v932 = vsel %vm685, %v899, 0
      %v935 = vsel %vm685, %v900, 0
      %v938 = vsel %vm685, %v901, 0
      %v941 = vsel %vm685, %v902, 0
      %v944 = vsel %vm685, %v903, 0
      %v947 = vsel %vm685, %v904, 0
      %v950 = vsel %vm685, %v905, 0
      %v953 = vsel %vm685, %v906, 0
      %v956 = vsel %vm734, %v231, 0
      %958 = vmatpush.bf16.msra.mxu0 0
      %959 = vmatpush.bf16.msra.mxu0 0
      %960 = vmatpush.bf16.msra.mxu0 0
      %961 = vmatpush.bf16.msra.mxu0 0
      %962 = vmatpush.bf16.msra.mxu0 0
      %963 = vmatpush.bf16.msra.mxu0 0
      %964 = vmatpush.bf16.msra.mxu0 0
      %965 = vmatpush.bf16.msra.mxu0 %v956
      %966 = vmatmul.bf16.gmra.mxu0 %v908
      %v967 = vpop.f32.mrf.mxu0
      %v968 = vadd.f32 %v748, %v967
      %v969 = vpop.f32.mrf.mxu0
      %v970 = vadd.f32 %v750, %v969
      %971 = vmatmul.bf16.gmra.mxu0 %v911
      %v972 = vpop.f32.mrf.mxu0
      %v973 = vadd.f32 %v753, %v972
      %v974 = vpop.f32.mrf.mxu0
      %v975 = vadd.f32 %v755, %v974
      %976 = vmatmul.bf16.gmra.mxu0 %v914
      %v977 = vpop.f32.mrf.mxu0
      %v978 = vadd.f32 %v758, %v977
      %v979 = vpop.f32.mrf.mxu0
      %v980 = vadd.f32 %v760, %v979
      %981 = vmatmul.bf16.gmra.mxu0 %v917
      %v982 = vpop.f32.mrf.mxu0
      %v983 = vadd.f32 %v763, %v982
      %v984 = vpop.f32.mrf.mxu0
      %v985 = vadd.f32 %v765, %v984
      %986 = vmatmul.bf16.gmra.mxu0 %v920
      %v987 = vpop.f32.mrf.mxu0
      %v988 = vadd.f32 %v768, %v987
      %v989 = vpop.f32.mrf.mxu0
      %v990 = vadd.f32 %v770, %v989
      %991 = vmatmul.bf16.gmra.mxu0 %v923
      %v992 = vpop.f32.mrf.mxu0
      %v993 = vadd.f32 %v773, %v992
      %v994 = vpop.f32.mrf.mxu0
      %v995 = vadd.f32 %v775, %v994
      %996 = vmatmul.bf16.gmra.mxu0 %v926
      %v997 = vpop.f32.mrf.mxu0
      %v998 = vadd.f32 %v778, %v997
      %v999 = vpop.f32.mrf.mxu0
      %v1000 = vadd.f32 %v780, %v999
      %1001 = vmatmul.bf16.gmra.mxu0 %v929
      %v1002 = vpop.f32.mrf.mxu0
      %v1003 = vadd.f32 %v783, %v1002
      %v1004 = vpop.f32.mrf.mxu0
      %v1005 = vadd.f32 %v785, %v1004
      %1006 = vmatmul.bf16.gmra.mxu0 %v932
      %v1007 = vpop.f32.mrf.mxu0
      %v1008 = vadd.f32 %v788, %v1007
      %v1009 = vpop.f32.mrf.mxu0
      %v1010 = vadd.f32 %v790, %v1009
      %1011 = vmatmul.bf16.gmra.mxu0 %v935
      %v1012 = vpop.f32.mrf.mxu0
      %v1013 = vadd.f32 %v793, %v1012
      %v1014 = vpop.f32.mrf.mxu0
      %v1015 = vadd.f32 %v795, %v1014
      %1016 = vmatmul.bf16.gmra.mxu0 %v938
      %v1017 = vpop.f32.mrf.mxu0
      %v1018 = vadd.f32 %v798, %v1017
      %v1019 = vpop.f32.mrf.mxu0
      %v1020 = vadd.f32 %v800, %v1019
      %1021 = vmatmul.bf16.gmra.mxu0 %v941
      %v1022 = vpop.f32.mrf.mxu0
      %v1023 = vadd.f32 %v803, %v1022
      %v1024 = vpop.f32.mrf.mxu0
      %v1025 = vadd.f32 %v805, %v1024
      %1026 = vmatmul.bf16.gmra.mxu0 %v944
      %v1027 = vpop.f32.mrf.mxu0
      %v1028 = vadd.f32 %v808, %v1027
      %v1029 = vpop.f32.mrf.mxu0
      %v1030 = vadd.f32 %v810, %v1029
      %1031 = vmatmul.bf16.gmra.mxu0 %v947
      %v1032 = vpop.f32.mrf.mxu0
      %v1033 = vadd.f32 %v813, %v1032
      %v1034 = vpop.f32.mrf.mxu0
      %v1035 = vadd.f32 %v815, %v1034
      %1036 = vmatmul.bf16.gmra.mxu0 %v950
      %v1037 = vpop.f32.mrf.mxu0
      %v1038 = vadd.f32 %v818, %v1037
      %v1039 = vpop.f32.mrf.mxu0
      %v1040 = vadd.f32 %v820, %v1039
      %1041 = vmatmul.bf16.gmra.mxu0 %v953
      %v1042 = vpop.f32.mrf.mxu0
      %v1043 = vadd.f32 %v823, %v1042
      %v1044 = vpop.f32.mrf.mxu0
      %v1045 = vadd.f32 %v825, %v1044
      %1046 = vdwg.mxu0
      %v1047 = vld [vmem:[%s192] sm:$0xe]
      %v1048 = vld [vmem:[%s192 + $0xc] sm:$0xe]
      %v1049 = vld [vmem:[%s192 + $0x18] sm:$0xe]
      %v1050 = vld [vmem:[%s192 + $0x24] sm:$0xe]
      %v1051 = vld [vmem:[%s192 + $0x30] sm:$0xe]
      %v1052 = vld [vmem:[%s192 + $0x3c] sm:$0xe]
      %v1053 = vld [vmem:[%s192 + $0x48] sm:$0xe]
      %v1054 = vld [vmem:[%s192 + $0x54] sm:$0xe]
      %v1055 = vld [vmem:[%s192 + $0x60] sm:$0xe]
      %v1056 = vld [vmem:[%s192 + $0x6c] sm:$0xe]
      %v1057 = vld [vmem:[%s192 + $0x78] sm:$0xe]
      %v1058 = vld [vmem:[%s192 + $0x84] sm:$0xe]
      %v1059 = vld [vmem:[%s192 + $0x90] sm:$0xe]
      %v1060 = vld [vmem:[%s192 + $0x9c] sm:$0xe]
      %v1061 = vld [vmem:[%s192 + $0xa8] sm:$0xe]
      %v1062 = vld [vmem:[%s192 + $0xb4] sm:$0xe]
      %vm1095 = vcmask 1042432
      %vm1096 = vcmask 1046532
      %vm1097 = vmor %vm1095, %vm1096
      %v1098 = vrot.slane %v1047, 5
      %v1099 = vrot.slane %v1098, 4
      %v1100 = vrot.slane %v200, 5
      %v1101 = vsel %vm1097, %v1099, %v1100
      %v1102 = vrot.slane %v1100, 4
      %v1103 = vrot.slane %v232, 5
      %v1104 = vsel %vm1097, %v1102, %v1103
      %v1105 = vrot.slane %v1048, 5
      %v1106 = vrot.slane %v1105, 4
      %v1107 = vrot.slane %v202, 5
      %v1108 = vsel %vm1097, %v1106, %v1107
      %v1109 = vrot.slane %v1107, 4
      %v1110 = vrot.slane %v233, 5
      %v1111 = vsel %vm1097, %v1109, %v1110
      %v1112 = vrot.slane %v1049, 5
      %v1113 = vrot.slane %v1112, 4
      %v1114 = vrot.slane %v204, 5
      %v1115 = vsel %vm1097, %v1113, %v1114
      %v1116 = vrot.slane %v1114, 4
      %v1117 = vrot.slane %v234, 5
      %v1118 = vsel %vm1097, %v1116, %v1117
      %v1119 = vrot.slane %v1050, 5
      %v1120 = vrot.slane %v1119, 4
      %v1121 = vrot.slane %v206, 5
      %v1122 = vsel %vm1097, %v1120, %v1121
      %v1123 = vrot.slane %v1121, 4
      %v1124 = vrot.slane %v235, 5
      %v1125 = vsel %vm1097, %v1123, %v1124
      %v1126 = vrot.slane %v1051, 5
      %v1127 = vrot.slane %v1126, 4
      %v1128 = vrot.slane %v208, 5
      %v1129 = vsel %vm1097, %v1127, %v1128
      %v1130 = vrot.slane %v1128, 4
      %v1131 = vrot.slane %v236, 5
      %v1132 = vsel %vm1097, %v1130, %v1131
      %v1133 = vrot.slane %v1052, 5
      %v1134 = vrot.slane %v1133, 4
      %v1135 = vrot.slane %v210, 5
      %v1136 = vsel %vm1097, %v1134, %v1135
      %v1137 = vrot.slane %v1135, 4
      %v1138 = vrot.slane %v237, 5
      %v1139 = vsel %vm1097, %v1137, %v1138
      %v1140 = vrot.slane %v1053, 5
      %v1141 = vrot.slane %v1140, 4
      %v1142 = vrot.slane %v212, 5
      %v1143 = vsel %vm1097, %v1141, %v1142
      %v1144 = vrot.slane %v1142, 4
      %v1145 = vrot.slane %v238, 5
      %v1146 = vsel %vm1097, %v1144, %v1145
      %v1147 = vrot.slane %v1054, 5
      %v1148 = vrot.slane %v1147, 4
      %v1149 = vrot.slane %v214, 5
      %v1150 = vsel %vm1097, %v1148, %v1149
      %v1151 = vrot.slane %v1149, 4
      %v1152 = vrot.slane %v239, 5
      %v1153 = vsel %vm1097, %v1151, %v1152
      %v1154 = vrot.slane %v1055, 5
      %v1155 = vrot.slane %v1154, 4
      %v1156 = vrot.slane %v216, 5
      %v1157 = vsel %vm1097, %v1155, %v1156
      %v1158 = vrot.slane %v1156, 4
      %v1159 = vrot.slane %v240, 5
      %v1160 = vsel %vm1097, %v1158, %v1159
      %v1161 = vrot.slane %v1056, 5
      %v1162 = vrot.slane %v1161, 4
      %v1163 = vrot.slane %v218, 5
      %v1164 = vsel %vm1097, %v1162, %v1163
      %v1165 = vrot.slane %v1163, 4
      %v1166 = vrot.slane %v241, 5
      %v1167 = vsel %vm1097, %v1165, %v1166
      %v1168 = vrot.slane %v1057, 5
      %v1169 = vrot.slane %v1168, 4
      %v1170 = vrot.slane %v220, 5
      %v1171 = vsel %vm1097, %v1169, %v1170
      %v1172 = vrot.slane %v1170, 4
      %v1173 = vrot.slane %v242, 5
      %v1174 = vsel %vm1097, %v1172, %v1173
      %v1175 = vrot.slane %v1058, 5
      %v1176 = vrot.slane %v1175, 4
      %v1177 = vrot.slane %v222, 5
      %v1178 = vsel %vm1097, %v1176, %v1177
      %v1179 = vrot.slane %v1177, 4
      %v1180 = vrot.slane %v243, 5
      %v1181 = vsel %vm1097, %v1179, %v1180
      %v1182 = vrot.slane %v1059, 5
      %v1183 = vrot.slane %v1182, 4
      %v1184 = vrot.slane %v224, 5
      %v1185 = vsel %vm1097, %v1183, %v1184
      %v1186 = vrot.slane %v1184, 4
      %v1187 = vrot.slane %v244, 5
      %v1188 = vsel %vm1097, %v1186, %v1187
      %v1189 = vrot.slane %v1060, 5
      %v1190 = vrot.slane %v1189, 4
      %v1191 = vrot.slane %v226, 5
      %v1192 = vsel %vm1097, %v1190, %v1191
      %v1193 = vrot.slane %v1191, 4
      %v1194 = vrot.slane %v245, 5
      %v1195 = vsel %vm1097, %v1193, %v1194
      %v1196 = vrot.slane %v1061, 5
      %v1197 = vrot.slane %v1196, 4
      %v1198 = vrot.slane %v228, 5
      %v1199 = vsel %vm1097, %v1197, %v1198
      %v1200 = vrot.slane %v1198, 4
      %v1201 = vrot.slane %v246, 5
      %v1202 = vsel %vm1097, %v1200, %v1201
      %v1203 = vrot.slane %v1062, 5
      %v1204 = vrot.slane %v1203, 4
      %v1205 = vrot.slane %v230, 5
      %v1206 = vsel %vm1097, %v1204, %v1205
      %v1207 = vrot.slane %v1205, 4
      %v1208 = vrot.slane %v247, 5
      %v1209 = vsel %vm1097, %v1207, %v1208
      %s1210 = scalar_lea.vmem %s1, 8
      %v1211 = vld [vmem:[%s1210] sm:$0xf]
      %v1212 = vunpack.c.l.b16 %v1101
      %v1213 = vunpack.c.l.b16 %v1104
      %v1214 = vunpack.c.l.b16 %v1108
      %v1215 = vunpack.c.l.b16 %v1111
      %v1216 = vunpack.c.l.b16 %v1115
      %v1217 = vunpack.c.l.b16 %v1118
      %v1218 = vunpack.c.l.b16 %v1122
      %v1219 = vunpack.c.l.b16 %v1125
      %v1220 = vunpack.c.l.b16 %v1129
      %v1221 = vunpack.c.l.b16 %v1132
      %v1222 = vunpack.c.l.b16 %v1136
      %v1223 = vunpack.c.l.b16 %v1139
      %v1224 = vunpack.c.l.b16 %v1143
      %v1225 = vunpack.c.l.b16 %v1146
      %v1226 = vunpack.c.l.b16 %v1150
      %v1227 = vunpack.c.l.b16 %v1153
      %v1228 = vunpack.c.l.b16 %v1157
      %v1229 = vunpack.c.l.b16 %v1160
      %v1230 = vunpack.c.l.b16 %v1164
      %v1231 = vunpack.c.l.b16 %v1167
      %v1232 = vunpack.c.l.b16 %v1171
      %v1233 = vunpack.c.l.b16 %v1174
      %v1234 = vunpack.c.l.b16 %v1178
      %v1235 = vunpack.c.l.b16 %v1181
      %v1236 = vunpack.c.l.b16 %v1185
      %v1237 = vunpack.c.l.b16 %v1188
      %v1238 = vunpack.c.l.b16 %v1192
      %v1239 = vunpack.c.l.b16 %v1195
      %v1240 = vunpack.c.l.b16 %v1199
      %v1241 = vunpack.c.l.b16 %v1202
      %v1242 = vunpack.c.l.b16 %v1206
      %v1243 = vunpack.c.l.b16 %v1209
      %v1244 = vpack.c.b16 %v1213, %v1212
      %v1245 = vpack.c.b16 %v1215, %v1214
      %v1246 = vpack.c.b16 %v1217, %v1216
      %v1247 = vpack.c.b16 %v1219, %v1218
      %v1248 = vpack.c.b16 %v1221, %v1220
      %v1249 = vpack.c.b16 %v1223, %v1222
      %v1250 = vpack.c.b16 %v1225, %v1224
      %v1251 = vpack.c.b16 %v1227, %v1226
      %v1252 = vpack.c.b16 %v1229, %v1228
      %v1253 = vpack.c.b16 %v1231, %v1230
      %v1254 = vpack.c.b16 %v1233, %v1232
      %v1255 = vpack.c.b16 %v1235, %v1234
      %v1256 = vpack.c.b16 %v1237, %v1236
      %v1257 = vpack.c.b16 %v1239, %v1238
      %v1258 = vpack.c.b16 %v1241, %v1240
      %v1259 = vpack.c.b16 %v1243, %v1242
      %v1261 = vsel %vm685, %v1244, 0
      %v1264 = vsel %vm685, %v1245, 0
      %v1267 = vsel %vm685, %v1246, 0
      %v1270 = vsel %vm685, %v1247, 0
      %v1273 = vsel %vm685, %v1248, 0
      %v1276 = vsel %vm685, %v1249, 0
      %v1279 = vsel %vm685, %v1250, 0
      %v1282 = vsel %vm685, %v1251, 0
      %v1285 = vsel %vm685, %v1252, 0
      %v1288 = vsel %vm685, %v1253, 0
      %v1291 = vsel %vm685, %v1254, 0
      %v1294 = vsel %vm685, %v1255, 0
      %v1297 = vsel %vm685, %v1256, 0
      %v1300 = vsel %vm685, %v1257, 0
      %v1303 = vsel %vm685, %v1258, 0
      %v1306 = vsel %vm685, %v1259, 0
      %v1309 = vsel %vm734, %v1211, 0
      %1311 = vmatpush.bf16.msra.mxu0 0
      %1312 = vmatpush.bf16.msra.mxu0 0
      %1313 = vmatpush.bf16.msra.mxu0 0
      %1314 = vmatpush.bf16.msra.mxu0 0
      %1315 = vmatpush.bf16.msra.mxu0 0
      %1316 = vmatpush.bf16.msra.mxu0 0
      %1317 = vmatpush.bf16.msra.mxu0 0
      %1318 = vmatpush.bf16.msra.mxu0 %v1309
      %1319 = vmatmul.bf16.gmra.mxu0 %v1261
      %v1320 = vpop.f32.mrf.mxu0
      %v1321 = vadd.f32 0.0, %v1320
      %v1322 = vpop.f32.mrf.mxu0
      %v1323 = vadd.f32 0.0, %v1322
      %1324 = vmatmul.bf16.gmra.mxu0 %v1264
      %v1325 = vpop.f32.mrf.mxu0
      %v1326 = vadd.f32 0.0, %v1325
      %v1327 = vpop.f32.mrf.mxu0
      %v1328 = vadd.f32 0.0, %v1327
      %1329 = vmatmul.bf16.gmra.mxu0 %v1267
      %v1330 = vpop.f32.mrf.mxu0
      %v1331 = vadd.f32 0.0, %v1330
      %v1332 = vpop.f32.mrf.mxu0
      %v1333 = vadd.f32 0.0, %v1332
      %1334 = vmatmul.bf16.gmra.mxu0 %v1270
      %v1335 = vpop.f32.mrf.mxu0
      %v1336 = vadd.f32 0.0, %v1335
      %v1337 = vpop.f32.mrf.mxu0
      %v1338 = vadd.f32 0.0, %v1337
      %1339 = vmatmul.bf16.gmra.mxu0 %v1273
      %v1340 = vpop.f32.mrf.mxu0
      %v1341 = vadd.f32 0.0, %v1340
      %v1342 = vpop.f32.mrf.mxu0
      %v1343 = vadd.f32 0.0, %v1342
      %1344 = vmatmul.bf16.gmra.mxu0 %v1276
      %v1345 = vpop.f32.mrf.mxu0
      %v1346 = vadd.f32 0.0, %v1345
      %v1347 = vpop.f32.mrf.mxu0
      %v1348 = vadd.f32 0.0, %v1347
      %1349 = vmatmul.bf16.gmra.mxu0 %v1279
      %v1350 = vpop.f32.mrf.mxu0
      %v1351 = vadd.f32 0.0, %v1350
      %v1352 = vpop.f32.mrf.mxu0
      %v1353 = vadd.f32 0.0, %v1352
      %1354 = vmatmul.bf16.gmra.mxu0 %v1282
      %v1355 = vpop.f32.mrf.mxu0
      %v1356 = vadd.f32 0.0, %v1355
      %v1357 = vpop.f32.mrf.mxu0
      %v1358 = vadd.f32 0.0, %v1357
      %1359 = vmatmul.bf16.gmra.mxu0 %v1285
      %v1360 = vpop.f32.mrf.mxu0
      %v1361 = vadd.f32 0.0, %v1360
      %v1362 = vpop.f32.mrf.mxu0
      %v1363 = vadd.f32 0.0, %v1362
      %1364 = vmatmul.bf16.gmra.mxu0 %v1288
      %v1365 = vpop.f32.mrf.mxu0
      %v1366 = vadd.f32 0.0, %v1365
      %v1367 = vpop.f32.mrf.mxu0
      %v1368 = vadd.f32 0.0, %v1367
      %1369 = vmatmul.bf16.gmra.mxu0 %v1291
      %v1370 = vpop.f32.mrf.mxu0
      %v1371 = vadd.f32 0.0, %v1370
      %v1372 = vpop.f32.mrf.mxu0
      %v1373 = vadd.f32 0.0, %v1372
      %1374 = vmatmul.bf16.gmra.mxu0 %v1294
      %v1375 = vpop.f32.mrf.mxu0
      %v1376 = vadd.f32 0.0, %v1375
      %v1377 = vpop.f32.mrf.mxu0
      %v1378 = vadd.f32 0.0, %v1377
      %1379 = vmatmul.bf16.gmra.mxu0 %v1297
      %v1380 = vpop.f32.mrf.mxu0
      %v1381 = vadd.f32 0.0, %v1380
      %v1382 = vpop.f32.mrf.mxu0
      %v1383 = vadd.f32 0.0, %v1382
      %1384 = vmatmul.bf16.gmra.mxu0 %v1300
      %v1385 = vpop.f32.mrf.mxu0
      %v1386 = vadd.f32 0.0, %v1385
      %v1387 = vpop.f32.mrf.mxu0
      %v1388 = vadd.f32 0.0, %v1387
      %1389 = vmatmul.bf16.gmra.mxu0 %v1303
      %v1390 = vpop.f32.mrf.mxu0
      %v1391 = vadd.f32 0.0, %v1390
      %v1392 = vpop.f32.mrf.mxu0
      %v1393 = vadd.f32 0.0, %v1392
      %1394 = vmatmul.bf16.gmra.mxu0 %v1306
      %v1395 = vpop.f32.mrf.mxu0
      %v1396 = vadd.f32 0.0, %v1395
      %v1397 = vpop.f32.mrf.mxu0
      %v1398 = vadd.f32 0.0, %v1397
      %1399 = vdwg.mxu0
      %v1400 = vadd.f32 %v968, %v1321
      %v1401 = vadd.f32 %v970, %v1323
      %v1402 = vadd.f32 %v973, %v1326
      %v1403 = vadd.f32 %v975, %v1328
      %v1404 = vadd.f32 %v978, %v1331
      %v1405 = vadd.f32 %v980, %v1333
      %v1406 = vadd.f32 %v983, %v1336
      %v1407 = vadd.f32 %v985, %v1338
      %v1408 = vadd.f32 %v988, %v1341
      %v1409 = vadd.f32 %v990, %v1343
      %v1410 = vadd.f32 %v993, %v1346
      %v1411 = vadd.f32 %v995, %v1348
      %v1412 = vadd.f32 %v998, %v1351
      %v1413 = vadd.f32 %v1000, %v1353
      %v1414 = vadd.f32 %v1003, %v1356
      %v1415 = vadd.f32 %v1005, %v1358
      %v1416 = vadd.f32 %v1008, %v1361
      %v1417 = vadd.f32 %v1010, %v1363
      %v1418 = vadd.f32 %v1013, %v1366
      %v1419 = vadd.f32 %v1015, %v1368
      %v1420 = vadd.f32 %v1018, %v1371
      %v1421 = vadd.f32 %v1020, %v1373
      %v1422 = vadd.f32 %v1023, %v1376
      %v1423 = vadd.f32 %v1025, %v1378
      %v1424 = vadd.f32 %v1028, %v1381
      %v1425 = vadd.f32 %v1030, %v1383
      %v1426 = vadd.f32 %v1033, %v1386
      %v1427 = vadd.f32 %v1035, %v1388
      %v1428 = vadd.f32 %v1038, %v1391
      %v1429 = vadd.f32 %v1040, %v1393
      %v1430 = vadd.f32 %v1043, %v1396
      %v1431 = vadd.f32 %v1045, %v1398
      %s1432 = scalar_lea.vmem %s192, 12
      %v1433 = vld [vmem:[%s1432] sm:$0xf]
      %v1434 = vld [vmem:[%s1432 + $0x4] sm:$0xf]
      %v1435 = vld [vmem:[%s1432 + $0xc] sm:$0xf]
      %v1436 = vld [vmem:[%s1432 + $0x10] sm:$0xf]
      %v1437 = vld [vmem:[%s1432 + $0x18] sm:$0xf]
      %v1438 = vld [vmem:[%s1432 + $0x1c] sm:$0xf]
      %v1439 = vld [vmem:[%s1432 + $0x24] sm:$0xf]
      %v1440 = vld [vmem:[%s1432 + $0x28] sm:$0xf]
      %v1441 = vld [vmem:[%s1432 + $0x30] sm:$0xf]
      %v1442 = vld [vmem:[%s1432 + $0x34] sm:$0xf]
      %v1443 = vld [vmem:[%s1432 + $0x3c] sm:$0xf]
      %v1444 = vld [vmem:[%s1432 + $0x40] sm:$0xf]
      %v1445 = vld [vmem:[%s1432 + $0x48] sm:$0xf]
      %v1446 = vld [vmem:[%s1432 + $0x4c] sm:$0xf]
      %v1447 = vld [vmem:[%s1432 + $0x54] sm:$0xf]
      %v1448 = vld [vmem:[%s1432 + $0x58] sm:$0xf]
      %v1449 = vld [vmem:[%s1432 + $0x60] sm:$0xf]
      %v1450 = vld [vmem:[%s1432 + $0x64] sm:$0xf]
      %v1451 = vld [vmem:[%s1432 + $0x6c] sm:$0xf]
      %v1452 = vld [vmem:[%s1432 + $0x70] sm:$0xf]
      %v1453 = vld [vmem:[%s1432 + $0x78] sm:$0xf]
      %v1454 = vld [vmem:[%s1432 + $0x7c] sm:$0xf]
      %v1455 = vld [vmem:[%s1432 + $0x84] sm:$0xf]
      %v1456 = vld [vmem:[%s1432 + $0x88] sm:$0xf]
      %v1457 = vld [vmem:[%s1432 + $0x90] sm:$0xf]
      %v1458 = vld [vmem:[%s1432 + $0x94] sm:$0xf]
      %v1459 = vld [vmem:[%s1432 + $0x9c] sm:$0xf]
      %v1460 = vld [vmem:[%s1432 + $0xa0] sm:$0xf]
      %v1461 = vld [vmem:[%s1432 + $0xa8] sm:$0xf]
      %v1462 = vld [vmem:[%s1432 + $0xac] sm:$0xf]
      %v1463 = vld [vmem:[%s1432 + $0xb4] sm:$0xf]
      %v1464 = vld [vmem:[%s1432 + $0xb8] sm:$0xf]
      %s1465 = scalar_lea.vmem %s1, 12
      %v1466 = vld [vmem:[%s1465] sm:$0xf]
      %v1499 = vunpack.c.l.b16 %v1433
      %v1500 = vunpack.c.l.b16 %v1434
      %v1501 = vunpack.c.l.b16 %v1435
      %v1502 = vunpack.c.l.b16 %v1436
      %v1503 = vunpack.c.l.b16 %v1437
      %v1504 = vunpack.c.l.b16 %v1438
      %v1505 = vunpack.c.l.b16 %v1439
      %v1506 = vunpack.c.l.b16 %v1440
      %v1507 = vunpack.c.l.b16 %v1441
      %v1508 = vunpack.c.l.b16 %v1442
      %v1509 = vunpack.c.l.b16 %v1443
      %v1510 = vunpack.c.l.b16 %v1444
      %v1511 = vunpack.c.l.b16 %v1445
      %v1512 = vunpack.c.l.b16 %v1446
      %v1513 = vunpack.c.l.b16 %v1447
      %v1514 = vunpack.c.l.b16 %v1448
      %v1515 = vunpack.c.l.b16 %v1449
      %v1516 = vunpack.c.l.b16 %v1450
      %v1517 = vunpack.c.l.b16 %v1451
      %v1518 = vunpack.c.l.b16 %v1452
      %v1519 = vunpack.c.l.b16 %v1453
      %v1520 = vunpack.c.l.b16 %v1454
      %v1521 = vunpack.c.l.b16 %v1455
      %v1522 = vunpack.c.l.b16 %v1456
      %v1523 = vunpack.c.l.b16 %v1457
      %v1524 = vunpack.c.l.b16 %v1458
      %v1525 = vunpack.c.l.b16 %v1459
      %v1526 = vunpack.c.l.b16 %v1460
      %v1527 = vunpack.c.l.b16 %v1461
      %v1528 = vunpack.c.l.b16 %v1462
      %v1529 = vunpack.c.l.b16 %v1463
      %v1530 = vunpack.c.l.b16 %v1464
      %v1531 = vpack.c.b16 %v1500, %v1499
      %v1532 = vpack.c.b16 %v1502, %v1501
      %v1533 = vpack.c.b16 %v1504, %v1503
      %v1534 = vpack.c.b16 %v1506, %v1505
      %v1535 = vpack.c.b16 %v1508, %v1507
      %v1536 = vpack.c.b16 %v1510, %v1509
      %v1537 = vpack.c.b16 %v1512, %v1511
      %v1538 = vpack.c.b16 %v1514, %v1513
      %v1539 = vpack.c.b16 %v1516, %v1515
      %v1540 = vpack.c.b16 %v1518, %v1517
      %v1541 = vpack.c.b16 %v1520, %v1519
      %v1542 = vpack.c.b16 %v1522, %v1521
      %v1543 = vpack.c.b16 %v1524, %v1523
      %v1544 = vpack.c.b16 %v1526, %v1525
      %v1545 = vpack.c.b16 %v1528, %v1527
      %v1546 = vpack.c.b16 %v1530, %v1529
      %v1548 = vsel %vm685, %v1531, 0
      %v1551 = vsel %vm685, %v1532, 0
      %v1554 = vsel %vm685, %v1533, 0
      %v1557 = vsel %vm685, %v1534, 0
      %v1560 = vsel %vm685, %v1535, 0
      %v1563 = vsel %vm685, %v1536, 0
      %v1566 = vsel %vm685, %v1537, 0
      %v1569 = vsel %vm685, %v1538, 0
      %v1572 = vsel %vm685, %v1539, 0
      %v1575 = vsel %vm685, %v1540, 0
      %v1578 = vsel %vm685, %v1541, 0
      %v1581 = vsel %vm685, %v1542, 0
      %v1584 = vsel %vm685, %v1543, 0
      %v1587 = vsel %vm685, %v1544, 0
      %v1590 = vsel %vm685, %v1545, 0
      %v1593 = vsel %vm685, %v1546, 0
      %v1596 = vsel %vm734, %v1466, 0
      %1598 = vmatpush.bf16.msra.mxu0 0
      %1599 = vmatpush.bf16.msra.mxu0 0
      %1600 = vmatpush.bf16.msra.mxu0 0
      %1601 = vmatpush.bf16.msra.mxu0 0
      %1602 = vmatpush.bf16.msra.mxu0 0
      %1603 = vmatpush.bf16.msra.mxu0 0
      %1604 = vmatpush.bf16.msra.mxu0 0
      %1605 = vmatpush.bf16.msra.mxu0 %v1596
      %1606 = vmatmul.bf16.gmra.mxu0 %v1548
      %v1607 = vpop.f32.mrf.mxu0
      %v1608 = vadd.f32 0.0, %v1607
      %v1609 = vpop.f32.mrf.mxu0
      %v1610 = vadd.f32 0.0, %v1609
      %1611 = vmatmul.bf16.gmra.mxu0 %v1551
      %v1612 = vpop.f32.mrf.mxu0
      %v1613 = vadd.f32 0.0, %v1612
      %v1614 = vpop.f32.mrf.mxu0
      %v1615 = vadd.f32 0.0, %v1614
      %1616 = vmatmul.bf16.gmra.mxu0 %v1554
      %v1617 = vpop.f32.mrf.mxu0
      %v1618 = vadd.f32 0.0, %v1617
      %v1619 = vpop.f32.mrf.mxu0
      %v1620 = vadd.f32 0.0, %v1619
      %1621 = vmatmul.bf16.gmra.mxu0 %v1557
      %v1622 = vpop.f32.mrf.mxu0
      %v1623 = vadd.f32 0.0, %v1622
      %v1624 = vpop.f32.mrf.mxu0
      %v1625 = vadd.f32 0.0, %v1624
      %1626 = vmatmul.bf16.gmra.mxu0 %v1560
      %v1627 = vpop.f32.mrf.mxu0
      %v1628 = vadd.f32 0.0, %v1627
      %v1629 = vpop.f32.mrf.mxu0
      %v1630 = vadd.f32 0.0, %v1629
      %1631 = vmatmul.bf16.gmra.mxu0 %v1563
      %v1632 = vpop.f32.mrf.mxu0
      %v1633 = vadd.f32 0.0, %v1632
      %v1634 = vpop.f32.mrf.mxu0
      %v1635 = vadd.f32 0.0, %v1634
      %1636 = vmatmul.bf16.gmra.mxu0 %v1566
      %v1637 = vpop.f32.mrf.mxu0
      %v1638 = vadd.f32 0.0, %v1637
      %v1639 = vpop.f32.mrf.mxu0
      %v1640 = vadd.f32 0.0, %v1639
      %1641 = vmatmul.bf16.gmra.mxu0 %v1569
      %v1642 = vpop.f32.mrf.mxu0
      %v1643 = vadd.f32 0.0, %v1642
      %v1644 = vpop.f32.mrf.mxu0
      %v1645 = vadd.f32 0.0, %v1644
      %1646 = vmatmul.bf16.gmra.mxu0 %v1572
      %v1647 = vpop.f32.mrf.mxu0
      %v1648 = vadd.f32 0.0, %v1647
      %v1649 = vpop.f32.mrf.mxu0
      %v1650 = vadd.f32 0.0, %v1649
      %1651 = vmatmul.bf16.gmra.mxu0 %v1575
      %v1652 = vpop.f32.mrf.mxu0
      %v1653 = vadd.f32 0.0, %v1652
      %v1654 = vpop.f32.mrf.mxu0
      %v1655 = vadd.f32 0.0, %v1654
      %1656 = vmatmul.bf16.gmra.mxu0 %v1578
      %v1657 = vpop.f32.mrf.mxu0
      %v1658 = vadd.f32 0.0, %v1657
      %v1659 = vpop.f32.mrf.mxu0
      %v1660 = vadd.f32 0.0, %v1659
      %1661 = vmatmul.bf16.gmra.mxu0 %v1581
      %v1662 = vpop.f32.mrf.mxu0
      %v1663 = vadd.f32 0.0, %v1662
      %v1664 = vpop.f32.mrf.mxu0
      %v1665 = vadd.f32 0.0, %v1664
      %1666 = vmatmul.bf16.gmra.mxu0 %v1584
      %v1667 = vpop.f32.mrf.mxu0
      %v1668 = vadd.f32 0.0, %v1667
      %v1669 = vpop.f32.mrf.mxu0
      %v1670 = vadd.f32 0.0, %v1669
      %1671 = vmatmul.bf16.gmra.mxu0 %v1587
      %v1672 = vpop.f32.mrf.mxu0
      %v1673 = vadd.f32 0.0, %v1672
      %v1674 = vpop.f32.mrf.mxu0
      %v1675 = vadd.f32 0.0, %v1674
      %1676 = vmatmul.bf16.gmra.mxu0 %v1590
      %v1677 = vpop.f32.mrf.mxu0
      %v1678 = vadd.f32 0.0, %v1677
      %v1679 = vpop.f32.mrf.mxu0
      %v1680 = vadd.f32 0.0, %v1679
      %1681 = vmatmul.bf16.gmra.mxu0 %v1593
      %v1682 = vpop.f32.mrf.mxu0
      %v1683 = vadd.f32 0.0, %v1682
      %v1684 = vpop.f32.mrf.mxu0
      %v1685 = vadd.f32 0.0, %v1684
      %1686 = vdwg.mxu0
      %v1687 = vadd.f32 %v1400, %v1608
      %v1688 = vadd.f32 %v1401, %v1610
      %v1689 = vadd.f32 %v1402, %v1613
      %v1690 = vadd.f32 %v1403, %v1615
      %v1691 = vadd.f32 %v1404, %v1618
      %v1692 = vadd.f32 %v1405, %v1620
      %v1693 = vadd.f32 %v1406, %v1623
      %v1694 = vadd.f32 %v1407, %v1625
      %v1695 = vadd.f32 %v1408, %v1628
      %v1696 = vadd.f32 %v1409, %v1630
      %v1697 = vadd.f32 %v1410, %v1633
      %v1698 = vadd.f32 %v1411, %v1635
      %v1699 = vadd.f32 %v1412, %v1638
      %v1700 = vadd.f32 %v1413, %v1640
      %v1701 = vadd.f32 %v1414, %v1643
      %v1702 = vadd.f32 %v1415, %v1645
      %v1703 = vadd.f32 %v1416, %v1648
      %v1704 = vadd.f32 %v1417, %v1650
      %v1705 = vadd.f32 %v1418, %v1653
      %v1706 = vadd.f32 %v1419, %v1655
      %v1707 = vadd.f32 %v1420, %v1658
      %v1708 = vadd.f32 %v1421, %v1660
      %v1709 = vadd.f32 %v1422, %v1663
      %v1710 = vadd.f32 %v1423, %v1665
      %v1711 = vadd.f32 %v1424, %v1668
      %v1712 = vadd.f32 %v1425, %v1670
      %v1713 = vadd.f32 %v1426, %v1673
      %v1714 = vadd.f32 %v1427, %v1675
      %v1715 = vadd.f32 %v1428, %v1678
      %v1716 = vadd.f32 %v1429, %v1680
      %v1717 = vadd.f32 %v1430, %v1683
      %v1718 = vadd.f32 %v1431, %v1685
      %v1719 = vld [vmem:[%s1432] sm:$0xf]
      %v1720 = vld [vmem:[%s1432 + $0x4] sm:$0xf]
      %v1721 = vld [vmem:[%s1432 + $0x8] sm:$0x1]
      %v1722 = vld [vmem:[%s1432 + $0xc] sm:$0xf]
      %v1723 = vld [vmem:[%s1432 + $0x10] sm:$0xf]
      %v1724 = vld [vmem:[%s1432 + $0x14] sm:$0x1]
      %v1725 = vld [vmem:[%s1432 + $0x18] sm:$0xf]
      %v1726 = vld [vmem:[%s1432 + $0x1c] sm:$0xf]
      %v1727 = vld [vmem:[%s1432 + $0x20] sm:$0x1]
      %v1728 = vld [vmem:[%s1432 + $0x24] sm:$0xf]
      %v1729 = vld [vmem:[%s1432 + $0x28] sm:$0xf]
      %v1730 = vld [vmem:[%s1432 + $0x2c] sm:$0x1]
      %v1731 = vld [vmem:[%s1432 + $0x30] sm:$0xf]
      %v1732 = vld [vmem:[%s1432 + $0x34] sm:$0xf]
      %v1733 = vld [vmem:[%s1432 + $0x38] sm:$0x1]
      %v1734 = vld [vmem:[%s1432 + $0x3c] sm:$0xf]
      %v1735 = vld [vmem:[%s1432 + $0x40] sm:$0xf]
      %v1736 = vld [vmem:[%s1432 + $0x44] sm:$0x1]
      %v1737 = vld [vmem:[%s1432 + $0x48] sm:$0xf]
      %v1738 = vld [vmem:[%s1432 + $0x4c] sm:$0xf]
      %v1739 = vld [vmem:[%s1432 + $0x50] sm:$0x1]
      %v1740 = vld [vmem:[%s1432 + $0x54] sm:$0xf]
      %v1741 = vld [vmem:[%s1432 + $0x58] sm:$0xf]
      %v1742 = vld [vmem:[%s1432 + $0x5c] sm:$0x1]
      %v1743 = vld [vmem:[%s1432 + $0x60] sm:$0xf]
      %v1744 = vld [vmem:[%s1432 + $0x64] sm:$0xf]
      %v1745 = vld [vmem:[%s1432 + $0x68] sm:$0x1]
      %v1746 = vld [vmem:[%s1432 + $0x6c] sm:$0xf]
      %v1747 = vld [vmem:[%s1432 + $0x70] sm:$0xf]
      %v1748 = vld [vmem:[%s1432 + $0x74] sm:$0x1]
      %v1749 = vld [vmem:[%s1432 + $0x78] sm:$0xf]
      %v1750 = vld [vmem:[%s1432 + $0x7c] sm:$0xf]
      %v1751 = vld [vmem:[%s1432 + $0x80] sm:$0x1]
      %v1752 = vld [vmem:[%s1432 + $0x84] sm:$0xf]
      %v1753 = vld [vmem:[%s1432 + $0x88] sm:$0xf]
      %v1754 = vld [vmem:[%s1432 + $0x8c] sm:$0x1]
      %v1755 = vld [vmem:[%s1432 + $0x90] sm:$0xf]
      %v1756 = vld [vmem:[%s1432 + $0x94] sm:$0xf]
      %v1757 = vld [vmem:[%s1432 + $0x98] sm:$0x1]
      %v1758 = vld [vmem:[%s1432 + $0x9c] sm:$0xf]
      %v1759 = vld [vmem:[%s1432 + $0xa0] sm:$0xf]
      %v1760 = vld [vmem:[%s1432 + $0xa4] sm:$0x1]
      %v1761 = vld [vmem:[%s1432 + $0xa8] sm:$0xf]
      %v1762 = vld [vmem:[%s1432 + $0xac] sm:$0xf]
      %v1763 = vld [vmem:[%s1432 + $0xb0] sm:$0x1]
      %v1764 = vld [vmem:[%s1432 + $0xb4] sm:$0xf]
      %v1765 = vld [vmem:[%s1432 + $0xb8] sm:$0xf]
      %v1766 = vld [vmem:[%s1432 + $0xbc] sm:$0x1]
      %v1768 = vshrl.u32 %v1719, 16
      %v1770 = vrot.slane %v1768, 4
      %v1771 = vshll.u32 %v1719, 16
      %v1773 = vrot.slane %v1771, 5
      %v1774 = vor.u32 %v1770, %v1773
      %v1775 = vrot.slane %v1774, 4
      %v1777 = vshll.u32 %v1720, 16
      %v1779 = vrot.slane %v1777, 5
      %v1780 = vsel %vm250, %v1775, %v1779
      %v1781 = vshrl.u32 %v1720, 16
      %v1783 = vrot.slane %v1781, 4
      %v1784 = vor.u32 %v1783, %v1779
      %v1785 = vrot.slane %v1784, 4
      %v1787 = vshll.u32 %v1721, 16
      %v1789 = vrot.slane %v1787, 5
      %v1790 = vsel %vm250, %v1785, %v1789
      %v1792 = vshrl.u32 %v1722, 16
      %v1794 = vrot.slane %v1792, 4
      %v1795 = vshll.u32 %v1722, 16
      %v1797 = vrot.slane %v1795, 5
      %v1798 = vor.u32 %v1794, %v1797
      %v1799 = vrot.slane %v1798, 4
      %v1801 = vshll.u32 %v1723, 16
      %v1803 = vrot.slane %v1801, 5
      %v1804 = vsel %vm250, %v1799, %v1803
      %v1805 = vshrl.u32 %v1723, 16
      %v1807 = vrot.slane %v1805, 4
      %v1808 = vor.u32 %v1807, %v1803
      %v1809 = vrot.slane %v1808, 4
      %v1811 = vshll.u32 %v1724, 16
      %v1813 = vrot.slane %v1811, 5
      %v1814 = vsel %vm250, %v1809, %v1813
      %v1816 = vshrl.u32 %v1725, 16
      %v1818 = vrot.slane %v1816, 4
      %v1819 = vshll.u32 %v1725, 16
      %v1821 = vrot.slane %v1819, 5
      %v1822 = vor.u32 %v1818, %v1821
      %v1823 = vrot.slane %v1822, 4
      %v1825 = vshll.u32 %v1726, 16
      %v1827 = vrot.slane %v1825, 5
      %v1828 = vsel %vm250, %v1823, %v1827
      %v1829 = vshrl.u32 %v1726, 16
      %v1831 = vrot.slane %v1829, 4
      %v1832 = vor.u32 %v1831, %v1827
      %v1833 = vrot.slane %v1832, 4
      %v1835 = vshll.u32 %v1727, 16
      %v1837 = vrot.slane %v1835, 5
      %v1838 = vsel %vm250, %v1833, %v1837
      %v1840 = vshrl.u32 %v1728, 16
      %v1842 = vrot.slane %v1840, 4
      %v1843 = vshll.u32 %v1728, 16
      %v1845 = vrot.slane %v1843, 5
      %v1846 = vor.u32 %v1842, %v1845
      %v1847 = vrot.slane %v1846, 4
      %v1849 = vshll.u32 %v1729, 16
      %v1851 = vrot.slane %v1849, 5
      %v1852 = vsel %vm250, %v1847, %v1851
      %v1853 = vshrl.u32 %v1729, 16
      %v1855 = vrot.slane %v1853, 4
      %v1856 = vor.u32 %v1855, %v1851
      %v1857 = vrot.slane %v1856, 4
      %v1859 = vshll.u32 %v1730, 16
      %v1861 = vrot.slane %v1859, 5
      %v1862 = vsel %vm250, %v1857, %v1861
      %v1864 = vshrl.u32 %v1731, 16
      %v1866 = vrot.slane %v1864, 4
      %v1867 = vshll.u32 %v1731, 16
      %v1869 = vrot.slane %v1867, 5
      %v1870 = vor.u32 %v1866, %v1869
      %v1871 = vrot.slane %v1870, 4
      %v1873 = vshll.u32 %v1732, 16
      %v1875 = vrot.slane %v1873, 5
      %v1876 = vsel %vm250, %v1871, %v1875
      %v1877 = vshrl.u32 %v1732, 16
      %v1879 = vrot.slane %v1877, 4
      %v1880 = vor.u32 %v1879, %v1875
      %v1881 = vrot.slane %v1880, 4
      %v1883 = vshll.u32 %v1733, 16
      %v1885 = vrot.slane %v1883, 5
      %v1886 = vsel %vm250, %v1881, %v1885
      %v1888 = vshrl.u32 %v1734, 16
      %v1890 = vrot.slane %v1888, 4
      %v1891 = vshll.u32 %v1734, 16
      %v1893 = vrot.slane %v1891, 5
      %v1894 = vor.u32 %v1890, %v1893
      %v1895 = vrot.slane %v1894, 4
      %v1897 = vshll.u32 %v1735, 16
      %v1899 = vrot.slane %v1897, 5
      %v1900 = vsel %vm250, %v1895, %v1899
      %v1901 = vshrl.u32 %v1735, 16
      %v1903 = vrot.slane %v1901, 4
      %v1904 = vor.u32 %v1903, %v1899
      %v1905 = vrot.slane %v1904, 4
      %v1907 = vshll.u32 %v1736, 16
      %v1909 = vrot.slane %v1907, 5
      %v1910 = vsel %vm250, %v1905, %v1909
      %v1912 = vshrl.u32 %v1737, 16
      %v1914 = vrot.slane %v1912, 4
      %v1915 = vshll.u32 %v1737, 16
      %v1917 = vrot.slane %v1915, 5
      %v1918 = vor.u32 %v1914, %v1917
      %v1919 = vrot.slane %v1918, 4
      %v1921 = vshll.u32 %v1738, 16
      %v1923 = vrot.slane %v1921, 5
      %v1924 = vsel %vm250, %v1919, %v1923
      %v1925 = vshrl.u32 %v1738, 16
      %v1927 = vrot.slane %v1925, 4
      %v1928 = vor.u32 %v1927, %v1923
      %v1929 = vrot.slane %v1928, 4
      %v1931 = vshll.u32 %v1739, 16
      %v1933 = vrot.slane %v1931, 5
      %v1934 = vsel %vm250, %v1929, %v1933
      %v1936 = vshrl.u32 %v1740, 16
      %v1938 = vrot.slane %v1936, 4
      %v1939 = vshll.u32 %v1740, 16
      %v1941 = vrot.slane %v1939, 5
      %v1942 = vor.u32 %v1938, %v1941
      %v1943 = vrot.slane %v1942, 4
      %v1945 = vshll.u32 %v1741, 16
      %v1947 = vrot.slane %v1945, 5
      %v1948 = vsel %vm250, %v1943, %v1947
      %v1949 = vshrl.u32 %v1741, 16
      %v1951 = vrot.slane %v1949, 4
      %v1952 = vor.u32 %v1951, %v1947
      %v1953 = vrot.slane %v1952, 4
      %v1955 = vshll.u32 %v1742, 16
      %v1957 = vrot.slane %v1955, 5
      %v1958 = vsel %vm250, %v1953, %v1957
      %v1960 = vshrl.u32 %v1743, 16
      %v1962 = vrot.slane %v1960, 4
      %v1963 = vshll.u32 %v1743, 16
      %v1965 = vrot.slane %v1963, 5
      %v1966 = vor.u32 %v1962, %v1965
      %v1967 = vrot.slane %v1966, 4
      %v1969 = vshll.u32 %v1744, 16
      %v1971 = vrot.slane %v1969, 5
      %v1972 = vsel %vm250, %v1967, %v1971
      %v1973 = vshrl.u32 %v1744, 16
      %v1975 = vrot.slane %v1973, 4
      %v1976 = vor.u32 %v1975, %v1971
      %v1977 = vrot.slane %v1976, 4
      %v1979 = vshll.u32 %v1745, 16
      %v1981 = vrot.slane %v1979, 5
      %v1982 = vsel %vm250, %v1977, %v1981
      %v1984 = vshrl.u32 %v1746, 16
      %v1986 = vrot.slane %v1984, 4
      %v1987 = vshll.u32 %v1746, 16
      %v1989 = vrot.slane %v1987, 5
      %v1990 = vor.u32 %v1986, %v1989
      %v1991 = vrot.slane %v1990, 4
      %v1993 = vshll.u32 %v1747, 16
      %v1995 = vrot.slane %v1993, 5
      %v1996 = vsel %vm250, %v1991, %v1995
      %v1997 = vshrl.u32 %v1747, 16
      %v1999 = vrot.slane %v1997, 4
      %v2000 = vor.u32 %v1999, %v1995
      %v2001 = vrot.slane %v2000, 4
      %v2003 = vshll.u32 %v1748, 16
      %v2005 = vrot.slane %v2003, 5
      %v2006 = vsel %vm250, %v2001, %v2005
      %v2008 = vshrl.u32 %v1749, 16
      %v2010 = vrot.slane %v2008, 4
      %v2011 = vshll.u32 %v1749, 16
      %v2013 = vrot.slane %v2011, 5
      %v2014 = vor.u32 %v2010, %v2013
      %v2015 = vrot.slane %v2014, 4
      %v2017 = vshll.u32 %v1750, 16
      %v2019 = vrot.slane %v2017, 5
      %v2020 = vsel %vm250, %v2015, %v2019
      %v2021 = vshrl.u32 %v1750, 16
      %v2023 = vrot.slane %v2021, 4
      %v2024 = vor.u32 %v2023, %v2019
      %v2025 = vrot.slane %v2024, 4
      %v2027 = vshll.u32 %v1751, 16
      %v2029 = vrot.slane %v2027, 5
      %v2030 = vsel %vm250, %v2025, %v2029
      %v2032 = vshrl.u32 %v1752, 16
      %v2034 = vrot.slane %v2032, 4
      %v2035 = vshll.u32 %v1752, 16
      %v2037 = vrot.slane %v2035, 5
      %v2038 = vor.u32 %v2034, %v2037
      %v2039 = vrot.slane %v2038, 4
      %v2041 = vshll.u32 %v1753, 16
      %v2043 = vrot.slane %v2041, 5
      %v2044 = vsel %vm250, %v2039, %v2043
      %v2045 = vshrl.u32 %v1753, 16
      %v2047 = vrot.slane %v2045, 4
      %v2048 = vor.u32 %v2047, %v2043
      %v2049 = vrot.slane %v2048, 4
      %v2051 = vshll.u32 %v1754, 16
      %v2053 = vrot.slane %v2051, 5
      %v2054 = vsel %vm250, %v2049, %v2053
      %v2056 = vshrl.u32 %v1755, 16
      %v2058 = vrot.slane %v2056, 4
      %v2059 = vshll.u32 %v1755, 16
      %v2061 = vrot.slane %v2059, 5
      %v2062 = vor.u32 %v2058, %v2061
      %v2063 = vrot.slane %v2062, 4
      %v2065 = vshll.u32 %v1756, 16
      %v2067 = vrot.slane %v2065, 5
      %v2068 = vsel %vm250, %v2063, %v2067
      %v2069 = vshrl.u32 %v1756, 16
      %v2071 = vrot.slane %v2069, 4
      %v2072 = vor.u32 %v2071, %v2067
      %v2073 = vrot.slane %v2072, 4
      %v2075 = vshll.u32 %v1757, 16
      %v2077 = vrot.slane %v2075, 5
      %v2078 = vsel %vm250, %v2073, %v2077
      %v2080 = vshrl.u32 %v1758, 16
      %v2082 = vrot.slane %v2080, 4
      %v2083 = vshll.u32 %v1758, 16
      %v2085 = vrot.slane %v2083, 5
      %v2086 = vor.u32 %v2082, %v2085
      %v2087 = vrot.slane %v2086, 4
      %v2089 = vshll.u32 %v1759, 16
      %v2091 = vrot.slane %v2089, 5
      %v2092 = vsel %vm250, %v2087, %v2091
      %v2093 = vshrl.u32 %v1759, 16
      %v2095 = vrot.slane %v2093, 4
      %v2096 = vor.u32 %v2095, %v2091
      %v2097 = vrot.slane %v2096, 4
      %v2099 = vshll.u32 %v1760, 16
      %v2101 = vrot.slane %v2099, 5
      %v2102 = vsel %vm250, %v2097, %v2101
      %v2104 = vshrl.u32 %v1761, 16
      %v2106 = vrot.slane %v2104, 4
      %v2107 = vshll.u32 %v1761, 16
      %v2109 = vrot.slane %v2107, 5
      %v2110 = vor.u32 %v2106, %v2109
      %v2111 = vrot.slane %v2110, 4
      %v2113 = vshll.u32 %v1762, 16
      %v2115 = vrot.slane %v2113, 5
      %v2116 = vsel %vm250, %v2111, %v2115
      %v2117 = vshrl.u32 %v1762, 16
      %v2119 = vrot.slane %v2117, 4
      %v2120 = vor.u32 %v2119, %v2115
      %v2121 = vrot.slane %v2120, 4
      %v2123 = vshll.u32 %v1763, 16
      %v2125 = vrot.slane %v2123, 5
      %v2126 = vsel %vm250, %v2121, %v2125
      %v2128 = vshrl.u32 %v1764, 16
      %v2130 = vrot.slane %v2128, 4
      %v2131 = vshll.u32 %v1764, 16
      %v2133 = vrot.slane %v2131, 5
      %v2134 = vor.u32 %v2130, %v2133
      %v2135 = vrot.slane %v2134, 4
      %v2137 = vshll.u32 %v1765, 16
      %v2139 = vrot.slane %v2137, 5
      %v2140 = vsel %vm250, %v2135, %v2139
      %v2141 = vshrl.u32 %v1765, 16
      %v2143 = vrot.slane %v2141, 4
      %v2144 = vor.u32 %v2143, %v2139
      %v2145 = vrot.slane %v2144, 4
      %v2147 = vshll.u32 %v1766, 16
      %v2149 = vrot.slane %v2147, 5
      %v2150 = vsel %vm250, %v2145, %v2149
      %s2151 = scalar_lea.vmem %s1, 16
      %v2152 = vld [vmem:[%s2151] sm:$0xf]
      %v2153 = vunpack.c.l.b16 %v1780
      %v2154 = vunpack.c.l.b16 %v1790
      %v2155 = vunpack.c.l.b16 %v1804
      %v2156 = vunpack.c.l.b16 %v1814
      %v2157 = vunpack.c.l.b16 %v1828
      %v2158 = vunpack.c.l.b16 %v1838
      %v2159 = vunpack.c.l.b16 %v1852
      %v2160 = vunpack.c.l.b16 %v1862
      %v2161 = vunpack.c.l.b16 %v1876
      %v2162 = vunpack.c.l.b16 %v1886
      %v2163 = vunpack.c.l.b16 %v1900
      %v2164 = vunpack.c.l.b16 %v1910
      %v2165 = vunpack.c.l.b16 %v1924
      %v2166 = vunpack.c.l.b16 %v1934
      %v2167 = vunpack.c.l.b16 %v1948
      %v2168 = vunpack.c.l.b16 %v1958
      %v2169 = vunpack.c.l.b16 %v1972
      %v2170 = vunpack.c.l.b16 %v1982
      %v2171 = vunpack.c.l.b16 %v1996
      %v2172 = vunpack.c.l.b16 %v2006
      %v2173 = vunpack.c.l.b16 %v2020
      %v2174 = vunpack.c.l.b16 %v2030
      %v2175 = vunpack.c.l.b16 %v2044
      %v2176 = vunpack.c.l.b16 %v2054
      %v2177 = vunpack.c.l.b16 %v2068
      %v2178 = vunpack.c.l.b16 %v2078
      %v2179 = vunpack.c.l.b16 %v2092
      %v2180 = vunpack.c.l.b16 %v2102
      %v2181 = vunpack.c.l.b16 %v2116
      %v2182 = vunpack.c.l.b16 %v2126
      %v2183 = vunpack.c.l.b16 %v2140
      %v2184 = vunpack.c.l.b16 %v2150
      %v2185 = vpack.c.b16 %v2154, %v2153
      %v2186 = vpack.c.b16 %v2156, %v2155
      %v2187 = vpack.c.b16 %v2158, %v2157
      %v2188 = vpack.c.b16 %v2160, %v2159
      %v2189 = vpack.c.b16 %v2162, %v2161
      %v2190 = vpack.c.b16 %v2164, %v2163
      %v2191 = vpack.c.b16 %v2166, %v2165
      %v2192 = vpack.c.b16 %v2168, %v2167
      %v2193 = vpack.c.b16 %v2170, %v2169
      %v2194 = vpack.c.b16 %v2172, %v2171
      %v2195 = vpack.c.b16 %v2174, %v2173
      %v2196 = vpack.c.b16 %v2176, %v2175
      %v2197 = vpack.c.b16 %v2178, %v2177
      %v2198 = vpack.c.b16 %v2180, %v2179
      %v2199 = vpack.c.b16 %v2182, %v2181
      %v2200 = vpack.c.b16 %v2184, %v2183
      %v2202 = vsel %vm685, %v2185, 0
      %v2205 = vsel %vm685, %v2186, 0
      %v2208 = vsel %vm685, %v2187, 0
      %v2211 = vsel %vm685, %v2188, 0
      %v2214 = vsel %vm685, %v2189, 0
      %v2217 = vsel %vm685, %v2190, 0
      %v2220 = vsel %vm685, %v2191, 0
      %v2223 = vsel %vm685, %v2192, 0
      %v2226 = vsel %vm685, %v2193, 0
      %v2229 = vsel %vm685, %v2194, 0
      %v2232 = vsel %vm685, %v2195, 0
      %v2235 = vsel %vm685, %v2196, 0
      %v2238 = vsel %vm685, %v2197, 0
      %v2241 = vsel %vm685, %v2198, 0
      %v2244 = vsel %vm685, %v2199, 0
      %v2247 = vsel %vm685, %v2200, 0
      %v2250 = vsel %vm734, %v2152, 0
      %2252 = vmatpush.bf16.msra.mxu0 0
      %2253 = vmatpush.bf16.msra.mxu0 0
      %2254 = vmatpush.bf16.msra.mxu0 0
      %2255 = vmatpush.bf16.msra.mxu0 0
      %2256 = vmatpush.bf16.msra.mxu0 0
      %2257 = vmatpush.bf16.msra.mxu0 0
      %2258 = vmatpush.bf16.msra.mxu0 0
      %2259 = vmatpush.bf16.msra.mxu0 %v2250
      %2260 = vmatmul.bf16.gmra.mxu0 %v2202
      %v2261 = vpop.f32.mrf.mxu0
      %v2262 = vadd.f32 0.0, %v2261
      %v2263 = vpop.f32.mrf.mxu0
      %v2264 = vadd.f32 0.0, %v2263
      %2265 = vmatmul.bf16.gmra.mxu0 %v2205
      %v2266 = vpop.f32.mrf.mxu0
      %v2267 = vadd.f32 0.0, %v2266
      %v2268 = vpop.f32.mrf.mxu0
      %v2269 = vadd.f32 0.0, %v2268
      %2270 = vmatmul.bf16.gmra.mxu0 %v2208
      %v2271 = vpop.f32.mrf.mxu0
      %v2272 = vadd.f32 0.0, %v2271
      %v2273 = vpop.f32.mrf.mxu0
      %v2274 = vadd.f32 0.0, %v2273
      %2275 = vmatmul.bf16.gmra.mxu0 %v2211
      %v2276 = vpop.f32.mrf.mxu0
      %v2277 = vadd.f32 0.0, %v2276
      %v2278 = vpop.f32.mrf.mxu0
      %v2279 = vadd.f32 0.0, %v2278
      %2280 = vmatmul.bf16.gmra.mxu0 %v2214
      %v2281 = vpop.f32.mrf.mxu0
      %v2282 = vadd.f32 0.0, %v2281
      %v2283 = vpop.f32.mrf.mxu0
      %v2284 = vadd.f32 0.0, %v2283
      %2285 = vmatmul.bf16.gmra.mxu0 %v2217
      %v2286 = vpop.f32.mrf.mxu0
      %v2287 = vadd.f32 0.0, %v2286
      %v2288 = vpop.f32.mrf.mxu0
      %v2289 = vadd.f32 0.0, %v2288
      %2290 = vmatmul.bf16.gmra.mxu0 %v2220
      %v2291 = vpop.f32.mrf.mxu0
      %v2292 = vadd.f32 0.0, %v2291
      %v2293 = vpop.f32.mrf.mxu0
      %v2294 = vadd.f32 0.0, %v2293
      %2295 = vmatmul.bf16.gmra.mxu0 %v2223
      %v2296 = vpop.f32.mrf.mxu0
      %v2297 = vadd.f32 0.0, %v2296
      %v2298 = vpop.f32.mrf.mxu0
      %v2299 = vadd.f32 0.0, %v2298
      %2300 = vmatmul.bf16.gmra.mxu0 %v2226
      %v2301 = vpop.f32.mrf.mxu0
      %v2302 = vadd.f32 0.0, %v2301
      %v2303 = vpop.f32.mrf.mxu0
      %v2304 = vadd.f32 0.0, %v2303
      %2305 = vmatmul.bf16.gmra.mxu0 %v2229
      %v2306 = vpop.f32.mrf.mxu0
      %v2307 = vadd.f32 0.0, %v2306
      %v2308 = vpop.f32.mrf.mxu0
      %v2309 = vadd.f32 0.0, %v2308
      %2310 = vmatmul.bf16.gmra.mxu0 %v2232
      %v2311 = vpop.f32.mrf.mxu0
      %v2312 = vadd.f32 0.0, %v2311
      %v2313 = vpop.f32.mrf.mxu0
      %v2314 = vadd.f32 0.0, %v2313
      %2315 = vmatmul.bf16.gmra.mxu0 %v2235
      %v2316 = vpop.f32.mrf.mxu0
      %v2317 = vadd.f32 0.0, %v2316
      %v2318 = vpop.f32.mrf.mxu0
      %v2319 = vadd.f32 0.0, %v2318
      %2320 = vmatmul.bf16.gmra.mxu0 %v2238
      %v2321 = vpop.f32.mrf.mxu0
      %v2322 = vadd.f32 0.0, %v2321
      %v2323 = vpop.f32.mrf.mxu0
      %v2324 = vadd.f32 0.0, %v2323
      %2325 = vmatmul.bf16.gmra.mxu0 %v2241
      %v2326 = vpop.f32.mrf.mxu0
      %v2327 = vadd.f32 0.0, %v2326
      %v2328 = vpop.f32.mrf.mxu0
      %v2329 = vadd.f32 0.0, %v2328
      %2330 = vmatmul.bf16.gmra.mxu0 %v2244
      %v2331 = vpop.f32.mrf.mxu0
      %v2332 = vadd.f32 0.0, %v2331
      %v2333 = vpop.f32.mrf.mxu0
      %v2334 = vadd.f32 0.0, %v2333
      %2335 = vmatmul.bf16.gmra.mxu0 %v2247
      %v2336 = vpop.f32.mrf.mxu0
      %v2337 = vadd.f32 0.0, %v2336
      %v2338 = vpop.f32.mrf.mxu0
      %v2339 = vadd.f32 0.0, %v2338
      %2340 = vdwg.mxu0
      %v2341 = vadd.f32 %v1687, %v2262
      %v2342 = vadd.f32 %v1688, %v2264
      %v2343 = vadd.f32 %v1689, %v2267
      %v2344 = vadd.f32 %v1690, %v2269
      %v2345 = vadd.f32 %v1691, %v2272
      %v2346 = vadd.f32 %v1692, %v2274
      %v2347 = vadd.f32 %v1693, %v2277
      %v2348 = vadd.f32 %v1694, %v2279
      %v2349 = vadd.f32 %v1695, %v2282
      %v2350 = vadd.f32 %v1696, %v2284
      %v2351 = vadd.f32 %v1697, %v2287
      %v2352 = vadd.f32 %v1698, %v2289
      %v2353 = vadd.f32 %v1699, %v2292
      %v2354 = vadd.f32 %v1700, %v2294
      %v2355 = vadd.f32 %v1701, %v2297
      %v2356 = vadd.f32 %v1702, %v2299
      %v2357 = vadd.f32 %v1703, %v2302
      %v2358 = vadd.f32 %v1704, %v2304
      %v2359 = vadd.f32 %v1705, %v2307
      %v2360 = vadd.f32 %v1706, %v2309
      %v2361 = vadd.f32 %v1707, %v2312
      %v2362 = vadd.f32 %v1708, %v2314
      %v2363 = vadd.f32 %v1709, %v2317
      %v2364 = vadd.f32 %v1710, %v2319
      %v2365 = vadd.f32 %v1711, %v2322
      %v2366 = vadd.f32 %v1712, %v2324
      %v2367 = vadd.f32 %v1713, %v2327
      %v2368 = vadd.f32 %v1714, %v2329
      %v2369 = vadd.f32 %v1715, %v2332
      %v2370 = vadd.f32 %v1716, %v2334
      %v2371 = vadd.f32 %v1717, %v2337
      %v2372 = vadd.f32 %v1718, %v2339
      %v2373 = vld [vmem:[%s1432] sm:$0xe]
      %v2374 = vld [vmem:[%s1432 + $0xc] sm:$0xe]
      %v2375 = vld [vmem:[%s1432 + $0x18] sm:$0xe]
      %v2376 = vld [vmem:[%s1432 + $0x24] sm:$0xe]
      %v2377 = vld [vmem:[%s1432 + $0x30] sm:$0xe]
      %v2378 = vld [vmem:[%s1432 + $0x3c] sm:$0xe]
      %v2379 = vld [vmem:[%s1432 + $0x48] sm:$0xe]
      %v2380 = vld [vmem:[%s1432 + $0x54] sm:$0xe]
      %v2381 = vld [vmem:[%s1432 + $0x60] sm:$0xe]
      %v2382 = vld [vmem:[%s1432 + $0x6c] sm:$0xe]
      %v2383 = vld [vmem:[%s1432 + $0x78] sm:$0xe]
      %v2384 = vld [vmem:[%s1432 + $0x84] sm:$0xe]
      %v2385 = vld [vmem:[%s1432 + $0x90] sm:$0xe]
      %v2386 = vld [vmem:[%s1432 + $0x9c] sm:$0xe]
      %v2387 = vld [vmem:[%s1432 + $0xa8] sm:$0xe]
      %v2388 = vld [vmem:[%s1432 + $0xb4] sm:$0xe]
      %v2437 = vrot.slane %v2373, 5
      %v2438 = vrot.slane %v2437, 4
      %v2439 = vrot.slane %v1720, 5
      %v2440 = vsel %vm1097, %v2438, %v2439
      %v2441 = vrot.slane %v2439, 4
      %v2442 = vrot.slane %v1721, 5
      %v2443 = vsel %vm1097, %v2441, %v2442
      %v2444 = vrot.slane %v2374, 5
      %v2445 = vrot.slane %v2444, 4
      %v2446 = vrot.slane %v1723, 5
      %v2447 = vsel %vm1097, %v2445, %v2446
      %v2448 = vrot.slane %v2446, 4
      %v2449 = vrot.slane %v1724, 5
      %v2450 = vsel %vm1097, %v2448, %v2449
      %v2451 = vrot.slane %v2375, 5
      %v2452 = vrot.slane %v2451, 4
      %v2453 = vrot.slane %v1726, 5
      %v2454 = vsel %vm1097, %v2452, %v2453
      %v2455 = vrot.slane %v2453, 4
      %v2456 = vrot.slane %v1727, 5
      %v2457 = vsel %vm1097, %v2455, %v2456
      %v2458 = vrot.slane %v2376, 5
      %v2459 = vrot.slane %v2458, 4
      %v2460 = vrot.slane %v1729, 5
      %v2461 = vsel %vm1097, %v2459, %v2460
      %v2462 = vrot.slane %v2460, 4
      %v2463 = vrot.slane %v1730, 5
      %v2464 = vsel %vm1097, %v2462, %v2463
      %v2465 = vrot.slane %v2377, 5
      %v2466 = vrot.slane %v2465, 4
      %v2467 = vrot.slane %v1732, 5
      %v2468 = vsel %vm1097, %v2466, %v2467
      %v2469 = vrot.slane %v2467, 4
      %v2470 = vrot.slane %v1733, 5
      %v2471 = vsel %vm1097, %v2469, %v2470
      %v2472 = vrot.slane %v2378, 5
      %v2473 = vrot.slane %v2472, 4
      %v2474 = vrot.slane %v1735, 5
      %v2475 = vsel %vm1097, %v2473, %v2474
      %v2476 = vrot.slane %v2474, 4
      %v2477 = vrot.slane %v1736, 5
      %v2478 = vsel %vm1097, %v2476, %v2477
      %v2479 = vrot.slane %v2379, 5
      %v2480 = vrot.slane %v2479, 4
      %v2481 = vrot.slane %v1738, 5
      %v2482 = vsel %vm1097, %v2480, %v2481
      %v2483 = vrot.slane %v2481, 4
      %v2484 = vrot.slane %v1739, 5
      %v2485 = vsel %vm1097, %v2483, %v2484
      %v2486 = vrot.slane %v2380, 5
      %v2487 = vrot.slane %v2486, 4
      %v2488 = vrot.slane %v1741, 5
      %v2489 = vsel %vm1097, %v2487, %v2488
      %v2490 = vrot.slane %v2488, 4
      %v2491 = vrot.slane %v1742, 5
      %v2492 = vsel %vm1097, %v2490, %v2491
      %v2493 = vrot.slane %v2381, 5
      %v2494 = vrot.slane %v2493, 4
      %v2495 = vrot.slane %v1744, 5
      %v2496 = vsel %vm1097, %v2494, %v2495
      %v2497 = vrot.slane %v2495, 4
      %v2498 = vrot.slane %v1745, 5
      %v2499 = vsel %vm1097, %v2497, %v2498
      %v2500 = vrot.slane %v2382, 5
      %v2501 = vrot.slane %v2500, 4
      %v2502 = vrot.slane %v1747, 5
      %v2503 = vsel %vm1097, %v2501, %v2502
      %v2504 = vrot.slane %v2502, 4
      %v2505 = vrot.slane %v1748, 5
      %v2506 = vsel %vm1097, %v2504, %v2505
      %v2507 = vrot.slane %v2383, 5
      %v2508 = vrot.slane %v2507, 4
      %v2509 = vrot.slane %v1750, 5
      %v2510 = vsel %vm1097, %v2508, %v2509
      %v2511 = vrot.slane %v2509, 4
      %v2512 = vrot.slane %v1751, 5
      %v2513 = vsel %vm1097, %v2511, %v2512
      %v2514 = vrot.slane %v2384, 5
      %v2515 = vrot.slane %v2514, 4
      %v2516 = vrot.slane %v1753, 5
      %v2517 = vsel %vm1097, %v2515, %v2516
      %v2518 = vrot.slane %v2516, 4
      %v2519 = vrot.slane %v1754, 5
      %v2520 = vsel %vm1097, %v2518, %v2519
      %v2521 = vrot.slane %v2385, 5
      %v2522 = vrot.slane %v2521, 4
      %v2523 = vrot.slane %v1756, 5
      %v2524 = vsel %vm1097, %v2522, %v2523
      %v2525 = vrot.slane %v2523, 4
      %v2526 = vrot.slane %v1757, 5
      %v2527 = vsel %vm1097, %v2525, %v2526
      %v2528 = vrot.slane %v2386, 5
      %v2529 = vrot.slane %v2528, 4
      %v2530 = vrot.slane %v1759, 5
      %v2531 = vsel %vm1097, %v2529, %v2530
      %v2532 = vrot.slane %v2530, 4
      %v2533 = vrot.slane %v1760, 5
      %v2534 = vsel %vm1097, %v2532, %v2533
      %v2535 = vrot.slane %v2387, 5
      %v2536 = vrot.slane %v2535, 4
      %v2537 = vrot.slane %v1762, 5
      %v2538 = vsel %vm1097, %v2536, %v2537
      %v2539 = vrot.slane %v2537, 4
      %v2540 = vrot.slane %v1763, 5
      %v2541 = vsel %vm1097, %v2539, %v2540
      %v2542 = vrot.slane %v2388, 5
      %v2543 = vrot.slane %v2542, 4
      %v2544 = vrot.slane %v1765, 5
      %v2545 = vsel %vm1097, %v2543, %v2544
      %v2546 = vrot.slane %v2544, 4
      %v2547 = vrot.slane %v1766, 5
      %v2548 = vsel %vm1097, %v2546, %v2547
      %s2549 = scalar_lea.vmem %s1, 20
      %v2550 = vld [vmem:[%s2549] sm:$0xf]
      %v2551 = vunpack.c.l.b16 %v2440
      %v2552 = vunpack.c.l.b16 %v2443
      %v2553 = vunpack.c.l.b16 %v2447
      %v2554 = vunpack.c.l.b16 %v2450
      %v2555 = vunpack.c.l.b16 %v2454
      %v2556 = vunpack.c.l.b16 %v2457
      %v2557 = vunpack.c.l.b16 %v2461
      %v2558 = vunpack.c.l.b16 %v2464
      %v2559 = vunpack.c.l.b16 %v2468
      %v2560 = vunpack.c.l.b16 %v2471
      %v2561 = vunpack.c.l.b16 %v2475
      %v2562 = vunpack.c.l.b16 %v2478
      %v2563 = vunpack.c.l.b16 %v2482
      %v2564 = vunpack.c.l.b16 %v2485
      %v2565 = vunpack.c.l.b16 %v2489
      %v2566 = vunpack.c.l.b16 %v2492
      %v2567 = vunpack.c.l.b16 %v2496
      %v2568 = vunpack.c.l.b16 %v2499
      %v2569 = vunpack.c.l.b16 %v2503
      %v2570 = vunpack.c.l.b16 %v2506
      %v2571 = vunpack.c.l.b16 %v2510
      %v2572 = vunpack.c.l.b16 %v2513
      %v2573 = vunpack.c.l.b16 %v2517
      %v2574 = vunpack.c.l.b16 %v2520
      %v2575 = vunpack.c.l.b16 %v2524
      %v2576 = vunpack.c.l.b16 %v2527
      %v2577 = vunpack.c.l.b16 %v2531
      %v2578 = vunpack.c.l.b16 %v2534
      %v2579 = vunpack.c.l.b16 %v2538
      %v2580 = vunpack.c.l.b16 %v2541
      %v2581 = vunpack.c.l.b16 %v2545
      %v2582 = vunpack.c.l.b16 %v2548
      %v2583 = vpack.c.b16 %v2552, %v2551
      %v2584 = vpack.c.b16 %v2554, %v2553
      %v2585 = vpack.c.b16 %v2556, %v2555
      %v2586 = vpack.c.b16 %v2558, %v2557
      %v2587 = vpack.c.b16 %v2560, %v2559
      %v2588 = vpack.c.b16 %v2562, %v2561
      %v2589 = vpack.c.b16 %v2564, %v2563
      %v2590 = vpack.c.b16 %v2566, %v2565
      %v2591 = vpack.c.b16 %v2568, %v2567
      %v2592 = vpack.c.b16 %v2570, %v2569
      %v2593 = vpack.c.b16 %v2572, %v2571
      %v2594 = vpack.c.b16 %v2574, %v2573
      %v2595 = vpack.c.b16 %v2576, %v2575
      %v2596 = vpack.c.b16 %v2578, %v2577
      %v2597 = vpack.c.b16 %v2580, %v2579
      %v2598 = vpack.c.b16 %v2582, %v2581
      %v2600 = vsel %vm685, %v2583, 0
      %v2603 = vsel %vm685, %v2584, 0
      %v2606 = vsel %vm685, %v2585, 0
      %v2609 = vsel %vm685, %v2586, 0
      %v2612 = vsel %vm685, %v2587, 0
      %v2615 = vsel %vm685, %v2588, 0
      %v2618 = vsel %vm685, %v2589, 0
      %v2621 = vsel %vm685, %v2590, 0
      %v2624 = vsel %vm685, %v2591, 0
      %v2627 = vsel %vm685, %v2592, 0
      %v2630 = vsel %vm685, %v2593, 0
      %v2633 = vsel %vm685, %v2594, 0
      %v2636 = vsel %vm685, %v2595, 0
      %v2639 = vsel %vm685, %v2596, 0
      %v2642 = vsel %vm685, %v2597, 0
      %v2645 = vsel %vm685, %v2598, 0
      %v2648 = vsel %vm734, %v2550, 0
      %2650 = vmatpush.bf16.msra.mxu0 0
      %2651 = vmatpush.bf16.msra.mxu0 0
      %2652 = vmatpush.bf16.msra.mxu0 0
      %2653 = vmatpush.bf16.msra.mxu0 0
      %2654 = vmatpush.bf16.msra.mxu0 0
      %2655 = vmatpush.bf16.msra.mxu0 0
      %2656 = vmatpush.bf16.msra.mxu0 0
      %2657 = vmatpush.bf16.msra.mxu0 %v2648
      %2658 = vmatmul.bf16.gmra.mxu0 %v2600
      %v2659 = vpop.f32.mrf.mxu0
      %v2660 = vadd.f32 0.0, %v2659
      %v2661 = vpop.f32.mrf.mxu0
      %v2662 = vadd.f32 0.0, %v2661
      %2663 = vmatmul.bf16.gmra.mxu0 %v2603
      %v2664 = vpop.f32.mrf.mxu0
      %v2665 = vadd.f32 0.0, %v2664
      %v2666 = vpop.f32.mrf.mxu0
      %v2667 = vadd.f32 0.0, %v2666
      %2668 = vmatmul.bf16.gmra.mxu0 %v2606
      %v2669 = vpop.f32.mrf.mxu0
      %v2670 = vadd.f32 0.0, %v2669
      %v2671 = vpop.f32.mrf.mxu0
      %v2672 = vadd.f32 0.0, %v2671
      %2673 = vmatmul.bf16.gmra.mxu0 %v2609
      %v2674 = vpop.f32.mrf.mxu0
      %v2675 = vadd.f32 0.0, %v2674
      %v2676 = vpop.f32.mrf.mxu0
      %v2677 = vadd.f32 0.0, %v2676
      %2678 = vmatmul.bf16.gmra.mxu0 %v2612
      %v2679 = vpop.f32.mrf.mxu0
      %v2680 = vadd.f32 0.0, %v2679
      %v2681 = vpop.f32.mrf.mxu0
      %v2682 = vadd.f32 0.0, %v2681
      %2683 = vmatmul.bf16.gmra.mxu0 %v2615
      %v2684 = vpop.f32.mrf.mxu0
      %v2685 = vadd.f32 0.0, %v2684
      %v2686 = vpop.f32.mrf.mxu0
      %v2687 = vadd.f32 0.0, %v2686
      %2688 = vmatmul.bf16.gmra.mxu0 %v2618
      %v2689 = vpop.f32.mrf.mxu0
      %v2690 = vadd.f32 0.0, %v2689
      %v2691 = vpop.f32.mrf.mxu0
      %v2692 = vadd.f32 0.0, %v2691
      %2693 = vmatmul.bf16.gmra.mxu0 %v2621
      %v2694 = vpop.f32.mrf.mxu0
      %v2695 = vadd.f32 0.0, %v2694
      %v2696 = vpop.f32.mrf.mxu0
      %v2697 = vadd.f32 0.0, %v2696
      %2698 = vmatmul.bf16.gmra.mxu0 %v2624
      %v2699 = vpop.f32.mrf.mxu0
      %v2700 = vadd.f32 0.0, %v2699
      %v2701 = vpop.f32.mrf.mxu0
      %v2702 = vadd.f32 0.0, %v2701
      %2703 = vmatmul.bf16.gmra.mxu0 %v2627
      %v2704 = vpop.f32.mrf.mxu0
      %v2705 = vadd.f32 0.0, %v2704
      %v2706 = vpop.f32.mrf.mxu0
      %v2707 = vadd.f32 0.0, %v2706
      %2708 = vmatmul.bf16.gmra.mxu0 %v2630
      %v2709 = vpop.f32.mrf.mxu0
      %v2710 = vadd.f32 0.0, %v2709
      %v2711 = vpop.f32.mrf.mxu0
      %v2712 = vadd.f32 0.0, %v2711
      %2713 = vmatmul.bf16.gmra.mxu0 %v2633
      %v2714 = vpop.f32.mrf.mxu0
      %v2715 = vadd.f32 0.0, %v2714
      %v2716 = vpop.f32.mrf.mxu0
      %v2717 = vadd.f32 0.0, %v2716
      %2718 = vmatmul.bf16.gmra.mxu0 %v2636
      %v2719 = vpop.f32.mrf.mxu0
      %v2720 = vadd.f32 0.0, %v2719
      %v2721 = vpop.f32.mrf.mxu0
      %v2722 = vadd.f32 0.0, %v2721
      %2723 = vmatmul.bf16.gmra.mxu0 %v2639
      %v2724 = vpop.f32.mrf.mxu0
      %v2725 = vadd.f32 0.0, %v2724
      %v2726 = vpop.f32.mrf.mxu0
      %v2727 = vadd.f32 0.0, %v2726
      %2728 = vmatmul.bf16.gmra.mxu0 %v2642
      %v2729 = vpop.f32.mrf.mxu0
      %v2730 = vadd.f32 0.0, %v2729
      %v2731 = vpop.f32.mrf.mxu0
      %v2732 = vadd.f32 0.0, %v2731
      %2733 = vmatmul.bf16.gmra.mxu0 %v2645
      %v2734 = vpop.f32.mrf.mxu0
      %v2735 = vadd.f32 0.0, %v2734
      %v2736 = vpop.f32.mrf.mxu0
      %v2737 = vadd.f32 0.0, %v2736
      %2738 = vdwg.mxu0
      %v2739 = vadd.f32 %v2341, %v2660
      %v2740 = vadd.f32 %v2342, %v2662
      %v2741 = vadd.f32 %v2343, %v2665
      %v2742 = vadd.f32 %v2344, %v2667
      %v2743 = vadd.f32 %v2345, %v2670
      %v2744 = vadd.f32 %v2346, %v2672
      %v2745 = vadd.f32 %v2347, %v2675
      %v2746 = vadd.f32 %v2348, %v2677
      %v2747 = vadd.f32 %v2349, %v2680
      %v2748 = vadd.f32 %v2350, %v2682
      %v2749 = vadd.f32 %v2351, %v2685
      %v2750 = vadd.f32 %v2352, %v2687
      %v2751 = vadd.f32 %v2353, %v2690
      %v2752 = vadd.f32 %v2354, %v2692
      %v2753 = vadd.f32 %v2355, %v2695
      %v2754 = vadd.f32 %v2356, %v2697
      %v2755 = vadd.f32 %v2357, %v2700
      %v2756 = vadd.f32 %v2358, %v2702
      %v2757 = vadd.f32 %v2359, %v2705
      %v2758 = vadd.f32 %v2360, %v2707
      %v2759 = vadd.f32 %v2361, %v2710
      %v2760 = vadd.f32 %v2362, %v2712
      %v2761 = vadd.f32 %v2363, %v2715
      %v2762 = vadd.f32 %v2364, %v2717
      %v2763 = vadd.f32 %v2365, %v2720
      %v2764 = vadd.f32 %v2366, %v2722
      %v2765 = vadd.f32 %v2367, %v2725
      %v2766 = vadd.f32 %v2368, %v2727
      %v2767 = vadd.f32 %v2369, %v2730
      %v2768 = vadd.f32 %v2370, %v2732
      %v2769 = vadd.f32 %v2371, %v2735
      %v2770 = vadd.f32 %v2372, %v2737
      %s2771 = scalar_lea.vmem %s192, 24
      %v2772 = vld [vmem:[%s2771] sm:$0xf]
      %v2773 = vld [vmem:[%s2771 + $0x4] sm:$0xf]
      %v2774 = vld [vmem:[%s2771 + $0xc] sm:$0xf]
      %v2775 = vld [vmem:[%s2771 + $0x10] sm:$0xf]
      %v2776 = vld [vmem:[%s2771 + $0x18] sm:$0xf]
      %v2777 = vld [vmem:[%s2771 + $0x1c] sm:$0xf]
      %v2778 = vld [vmem:[%s2771 + $0x24] sm:$0xf]
      %v2779 = vld [vmem:[%s2771 + $0x28] sm:$0xf]
      %v2780 = vld [vmem:[%s2771 + $0x30] sm:$0xf]
      %v2781 = vld [vmem:[%s2771 + $0x34] sm:$0xf]
      %v2782 = vld [vmem:[%s2771 + $0x3c] sm:$0xf]
      %v2783 = vld [vmem:[%s2771 + $0x40] sm:$0xf]
      %v2784 = vld [vmem:[%s2771 + $0x48] sm:$0xf]
      %v2785 = vld [vmem:[%s2771 + $0x4c] sm:$0xf]
      %v2786 = vld [vmem:[%s2771 + $0x54] sm:$0xf]
      %v2787 = vld [vmem:[%s2771 + $0x58] sm:$0xf]
      %v2788 = vld [vmem:[%s2771 + $0x60] sm:$0xf]
      %v2789 = vld [vmem:[%s2771 + $0x64] sm:$0xf]
      %v2790 = vld [vmem:[%s2771 + $0x6c] sm:$0xf]
      %v2791 = vld [vmem:[%s2771 + $0x70] sm:$0xf]
      %v2792 = vld [vmem:[%s2771 + $0x78] sm:$0xf]
      %v2793 = vld [vmem:[%s2771 + $0x7c] sm:$0xf]
      %v2794 = vld [vmem:[%s2771 + $0x84] sm:$0xf]
      %v2795 = vld [vmem:[%s2771 + $0x88] sm:$0xf]
      %v2796 = vld [vmem:[%s2771 + $0x90] sm:$0xf]
      %v2797 = vld [vmem:[%s2771 + $0x94] sm:$0xf]
      %v2798 = vld [vmem:[%s2771 + $0x9c] sm:$0xf]
      %v2799 = vld [vmem:[%s2771 + $0xa0] sm:$0xf]
      %v2800 = vld [vmem:[%s2771 + $0xa8] sm:$0xf]
      %v2801 = vld [vmem:[%s2771 + $0xac] sm:$0xf]
      %v2802 = vld [vmem:[%s2771 + $0xb4] sm:$0xf]
      %v2803 = vld [vmem:[%s2771 + $0xb8] sm:$0xf]
      %s2804 = scalar_lea.vmem %s1, 24
      %v2805 = vld [vmem:[%s2804] sm:$0xf]
      %v2838 = vunpack.c.l.b16 %v2772
      %v2839 = vunpack.c.l.b16 %v2773
      %v2840 = vunpack.c.l.b16 %v2774
      %v2841 = vunpack.c.l.b16 %v2775
      %v2842 = vunpack.c.l.b16 %v2776
      %v2843 = vunpack.c.l.b16 %v2777
      %v2844 = vunpack.c.l.b16 %v2778
      %v2845 = vunpack.c.l.b16 %v2779
      %v2846 = vunpack.c.l.b16 %v2780
      %v2847 = vunpack.c.l.b16 %v2781
      %v2848 = vunpack.c.l.b16 %v2782
      %v2849 = vunpack.c.l.b16 %v2783
      %v2850 = vunpack.c.l.b16 %v2784
      %v2851 = vunpack.c.l.b16 %v2785
      %v2852 = vunpack.c.l.b16 %v2786
      %v2853 = vunpack.c.l.b16 %v2787
      %v2854 = vunpack.c.l.b16 %v2788
      %v2855 = vunpack.c.l.b16 %v2789
      %v2856 = vunpack.c.l.b16 %v2790
      %v2857 = vunpack.c.l.b16 %v2791
      %v2858 = vunpack.c.l.b16 %v2792
      %v2859 = vunpack.c.l.b16 %v2793
      %v2860 = vunpack.c.l.b16 %v2794
      %v2861 = vunpack.c.l.b16 %v2795
      %v2862 = vunpack.c.l.b16 %v2796
      %v2863 = vunpack.c.l.b16 %v2797
      %v2864 = vunpack.c.l.b16 %v2798
      %v2865 = vunpack.c.l.b16 %v2799
      %v2866 = vunpack.c.l.b16 %v2800
      %v2867 = vunpack.c.l.b16 %v2801
      %v2868 = vunpack.c.l.b16 %v2802
      %v2869 = vunpack.c.l.b16 %v2803
      %v2870 = vpack.c.b16 %v2839, %v2838
      %v2871 = vpack.c.b16 %v2841, %v2840
      %v2872 = vpack.c.b16 %v2843, %v2842
      %v2873 = vpack.c.b16 %v2845, %v2844
      %v2874 = vpack.c.b16 %v2847, %v2846
      %v2875 = vpack.c.b16 %v2849, %v2848
      %v2876 = vpack.c.b16 %v2851, %v2850
      %v2877 = vpack.c.b16 %v2853, %v2852
      %v2878 = vpack.c.b16 %v2855, %v2854
      %v2879 = vpack.c.b16 %v2857, %v2856
      %v2880 = vpack.c.b16 %v2859, %v2858
      %v2881 = vpack.c.b16 %v2861, %v2860
      %v2882 = vpack.c.b16 %v2863, %v2862
      %v2883 = vpack.c.b16 %v2865, %v2864
      %v2884 = vpack.c.b16 %v2867, %v2866
      %v2885 = vpack.c.b16 %v2869, %v2868
      %v2887 = vsel %vm685, %v2870, 0
      %v2890 = vsel %vm685, %v2871, 0
      %v2893 = vsel %vm685, %v2872, 0
      %v2896 = vsel %vm685, %v2873, 0
      %v2899 = vsel %vm685, %v2874, 0
      %v2902 = vsel %vm685, %v2875, 0
      %v2905 = vsel %vm685, %v2876, 0
      %v2908 = vsel %vm685, %v2877, 0
      %v2911 = vsel %vm685, %v2878, 0
      %v2914 = vsel %vm685, %v2879, 0
      %v2917 = vsel %vm685, %v2880, 0
      %v2920 = vsel %vm685, %v2881, 0
      %v2923 = vsel %vm685, %v2882, 0
      %v2926 = vsel %vm685, %v2883, 0
      %v2929 = vsel %vm685, %v2884, 0
      %v2932 = vsel %vm685, %v2885, 0
      %v2935 = vsel %vm734, %v2805, 0
      %2937 = vmatpush.bf16.msra.mxu0 0
      %2938 = vmatpush.bf16.msra.mxu0 0
      %2939 = vmatpush.bf16.msra.mxu0 0
      %2940 = vmatpush.bf16.msra.mxu0 0
      %2941 = vmatpush.bf16.msra.mxu0 0
      %2942 = vmatpush.bf16.msra.mxu0 0
      %2943 = vmatpush.bf16.msra.mxu0 0
      %2944 = vmatpush.bf16.msra.mxu0 %v2935
      %2945 = vmatmul.bf16.gmra.mxu0 %v2887
      %v2946 = vpop.f32.mrf.mxu0
      %v2947 = vadd.f32 0.0, %v2946
      %v2948 = vpop.f32.mrf.mxu0
      %v2949 = vadd.f32 0.0, %v2948
      %2950 = vmatmul.bf16.gmra.mxu0 %v2890
      %v2951 = vpop.f32.mrf.mxu0
      %v2952 = vadd.f32 0.0, %v2951
      %v2953 = vpop.f32.mrf.mxu0
      %v2954 = vadd.f32 0.0, %v2953
      %2955 = vmatmul.bf16.gmra.mxu0 %v2893
      %v2956 = vpop.f32.mrf.mxu0
      %v2957 = vadd.f32 0.0, %v2956
      %v2958 = vpop.f32.mrf.mxu0
      %v2959 = vadd.f32 0.0, %v2958
      %2960 = vmatmul.bf16.gmra.mxu0 %v2896
      %v2961 = vpop.f32.mrf.mxu0
      %v2962 = vadd.f32 0.0, %v2961
      %v2963 = vpop.f32.mrf.mxu0
      %v2964 = vadd.f32 0.0, %v2963
      %2965 = vmatmul.bf16.gmra.mxu0 %v2899
      %v2966 = vpop.f32.mrf.mxu0
      %v2967 = vadd.f32 0.0, %v2966
      %v2968 = vpop.f32.mrf.mxu0
      %v2969 = vadd.f32 0.0, %v2968
      %2970 = vmatmul.bf16.gmra.mxu0 %v2902
      %v2971 = vpop.f32.mrf.mxu0
      %v2972 = vadd.f32 0.0, %v2971
      %v2973 = vpop.f32.mrf.mxu0
      %v2974 = vadd.f32 0.0, %v2973
      %2975 = vmatmul.bf16.gmra.mxu0 %v2905
      %v2976 = vpop.f32.mrf.mxu0
      %v2977 = vadd.f32 0.0, %v2976
      %v2978 = vpop.f32.mrf.mxu0
      %v2979 = vadd.f32 0.0, %v2978
      %2980 = vmatmul.bf16.gmra.mxu0 %v2908
      %v2981 = vpop.f32.mrf.mxu0
      %v2982 = vadd.f32 0.0, %v2981
      %v2983 = vpop.f32.mrf.mxu0
      %v2984 = vadd.f32 0.0, %v2983
      %2985 = vmatmul.bf16.gmra.mxu0 %v2911
      %v2986 = vpop.f32.mrf.mxu0
      %v2987 = vadd.f32 0.0, %v2986
      %v2988 = vpop.f32.mrf.mxu0
      %v2989 = vadd.f32 0.0, %v2988
      %2990 = vmatmul.bf16.gmra.mxu0 %v2914
      %v2991 = vpop.f32.mrf.mxu0
      %v2992 = vadd.f32 0.0, %v2991
      %v2993 = vpop.f32.mrf.mxu0
      %v2994 = vadd.f32 0.0, %v2993
      %2995 = vmatmul.bf16.gmra.mxu0 %v2917
      %v2996 = vpop.f32.mrf.mxu0
      %v2997 = vadd.f32 0.0, %v2996
      %v2998 = vpop.f32.mrf.mxu0
      %v2999 = vadd.f32 0.0, %v2998
      %3000 = vmatmul.bf16.gmra.mxu0 %v2920
      %v3001 = vpop.f32.mrf.mxu0
      %v3002 = vadd.f32 0.0, %v3001
      %v3003 = vpop.f32.mrf.mxu0
      %v3004 = vadd.f32 0.0, %v3003
      %3005 = vmatmul.bf16.gmra.mxu0 %v2923
      %v3006 = vpop.f32.mrf.mxu0
      %v3007 = vadd.f32 0.0, %v3006
      %v3008 = vpop.f32.mrf.mxu0
      %v3009 = vadd.f32 0.0, %v3008
      %3010 = vmatmul.bf16.gmra.mxu0 %v2926
      %v3011 = vpop.f32.mrf.mxu0
      %v3012 = vadd.f32 0.0, %v3011
      %v3013 = vpop.f32.mrf.mxu0
      %v3014 = vadd.f32 0.0, %v3013
      %3015 = vmatmul.bf16.gmra.mxu0 %v2929
      %v3016 = vpop.f32.mrf.mxu0
      %v3017 = vadd.f32 0.0, %v3016
      %v3018 = vpop.f32.mrf.mxu0
      %v3019 = vadd.f32 0.0, %v3018
      %3020 = vmatmul.bf16.gmra.mxu0 %v2932
      %v3021 = vpop.f32.mrf.mxu0
      %v3022 = vadd.f32 0.0, %v3021
      %v3023 = vpop.f32.mrf.mxu0
      %v3024 = vadd.f32 0.0, %v3023
      %3025 = vdwg.mxu0
      %v3026 = vadd.f32 %v2739, %v2947
      %v3027 = vadd.f32 %v2740, %v2949
      %v3028 = vadd.f32 %v2741, %v2952
      %v3029 = vadd.f32 %v2742, %v2954
      %v3030 = vadd.f32 %v2743, %v2957
      %v3031 = vadd.f32 %v2744, %v2959
      %v3032 = vadd.f32 %v2745, %v2962
      %v3033 = vadd.f32 %v2746, %v2964
      %v3034 = vadd.f32 %v2747, %v2967
      %v3035 = vadd.f32 %v2748, %v2969
      %v3036 = vadd.f32 %v2749, %v2972
      %v3037 = vadd.f32 %v2750, %v2974
      %v3038 = vadd.f32 %v2751, %v2977
      %v3039 = vadd.f32 %v2752, %v2979
      %v3040 = vadd.f32 %v2753, %v2982
      %v3041 = vadd.f32 %v2754, %v2984
      %v3042 = vadd.f32 %v2755, %v2987
      %v3043 = vadd.f32 %v2756, %v2989
      %v3044 = vadd.f32 %v2757, %v2992
      %v3045 = vadd.f32 %v2758, %v2994
      %v3046 = vadd.f32 %v2759, %v2997
      %v3047 = vadd.f32 %v2760, %v2999
      %v3048 = vadd.f32 %v2761, %v3002
      %v3049 = vadd.f32 %v2762, %v3004
      %v3050 = vadd.f32 %v2763, %v3007
      %v3051 = vadd.f32 %v2764, %v3009
      %v3052 = vadd.f32 %v2765, %v3012
      %v3053 = vadd.f32 %v2766, %v3014
      %v3054 = vadd.f32 %v2767, %v3017
      %v3055 = vadd.f32 %v2768, %v3019
      %v3056 = vadd.f32 %v2769, %v3022
      %v3057 = vadd.f32 %v2770, %v3024
      %v3058 = vld [vmem:[%s2771] sm:$0xf]
      %v3059 = vld [vmem:[%s2771 + $0x4] sm:$0xf]
      %v3060 = vld [vmem:[%s2771 + $0x8] sm:$0x1]
      %v3061 = vld [vmem:[%s2771 + $0xc] sm:$0xf]
      %v3062 = vld [vmem:[%s2771 + $0x10] sm:$0xf]
      %v3063 = vld [vmem:[%s2771 + $0x14] sm:$0x1]
      %v3064 = vld [vmem:[%s2771 + $0x18] sm:$0xf]
      %v3065 = vld [vmem:[%s2771 + $0x1c] sm:$0xf]
      %v3066 = vld [vmem:[%s2771 + $0x20] sm:$0x1]
      %v3067 = vld [vmem:[%s2771 + $0x24] sm:$0xf]
      %v3068 = vld [vmem:[%s2771 + $0x28] sm:$0xf]
      %v3069 = vld [vmem:[%s2771 + $0x2c] sm:$0x1]
      %v3070 = vld [vmem:[%s2771 + $0x30] sm:$0xf]
      %v3071 = vld [vmem:[%s2771 + $0x34] sm:$0xf]
      %v3072 = vld [vmem:[%s2771 + $0x38] sm:$0x1]
      %v3073 = vld [vmem:[%s2771 + $0x3c] sm:$0xf]
      %v3074 = vld [vmem:[%s2771 + $0x40] sm:$0xf]
      %v3075 = vld [vmem:[%s2771 + $0x44] sm:$0x1]
      %v3076 = vld [vmem:[%s2771 + $0x48] sm:$0xf]
      %v3077 = vld [vmem:[%s2771 + $0x4c] sm:$0xf]
      %v3078 = vld [vmem:[%s2771 + $0x50] sm:$0x1]
      %v3079 = vld [vmem:[%s2771 + $0x54] sm:$0xf]
      %v3080 = vld [vmem:[%s2771 + $0x58] sm:$0xf]
      %v3081 = vld [vmem:[%s2771 + $0x5c] sm:$0x1]
      %v3082 = vld [vmem:[%s2771 + $0x60] sm:$0xf]
      %v3083 = vld [vmem:[%s2771 + $0x64] sm:$0xf]
      %v3084 = vld [vmem:[%s2771 + $0x68] sm:$0x1]
      %v3085 = vld [vmem:[%s2771 + $0x6c] sm:$0xf]
      %v3086 = vld [vmem:[%s2771 + $0x70] sm:$0xf]
      %v3087 = vld [vmem:[%s2771 + $0x74] sm:$0x1]
      %v3088 = vld [vmem:[%s2771 + $0x78] sm:$0xf]
      %v3089 = vld [vmem:[%s2771 + $0x7c] sm:$0xf]
      %v3090 = vld [vmem:[%s2771 + $0x80] sm:$0x1]
      %v3091 = vld [vmem:[%s2771 + $0x84] sm:$0xf]
      %v3092 = vld [vmem:[%s2771 + $0x88] sm:$0xf]
      %v3093 = vld [vmem:[%s2771 + $0x8c] sm:$0x1]
      %v3094 = vld [vmem:[%s2771 + $0x90] sm:$0xf]
      %v3095 = vld [vmem:[%s2771 + $0x94] sm:$0xf]
      %v3096 = vld [vmem:[%s2771 + $0x98] sm:$0x1]
      %v3097 = vld [vmem:[%s2771 + $0x9c] sm:$0xf]
      %v3098 = vld [vmem:[%s2771 + $0xa0] sm:$0xf]
      %v3099 = vld [vmem:[%s2771 + $0xa4] sm:$0x1]
      %v3100 = vld [vmem:[%s2771 + $0xa8] sm:$0xf]
      %v3101 = vld [vmem:[%s2771 + $0xac] sm:$0xf]
      %v3102 = vld [vmem:[%s2771 + $0xb0] sm:$0x1]
      %v3103 = vld [vmem:[%s2771 + $0xb4] sm:$0xf]
      %v3104 = vld [vmem:[%s2771 + $0xb8] sm:$0xf]
      %v3105 = vld [vmem:[%s2771 + $0xbc] sm:$0x1]
      %v3107 = vshrl.u32 %v3058, 16
      %v3109 = vrot.slane %v3107, 4
      %v3110 = vshll.u32 %v3058, 16
      %v3112 = vrot.slane %v3110, 5
      %v3113 = vor.u32 %v3109, %v3112
      %v3114 = vrot.slane %v3113, 4
      %v3116 = vshll.u32 %v3059, 16
      %v3118 = vrot.slane %v3116, 5
      %v3119 = vsel %vm250, %v3114, %v3118
      %v3120 = vshrl.u32 %v3059, 16
      %v3122 = vrot.slane %v3120, 4
      %v3123 = vor.u32 %v3122, %v3118
      %v3124 = vrot.slane %v3123, 4
      %v3126 = vshll.u32 %v3060, 16
      %v3128 = vrot.slane %v3126, 5
      %v3129 = vsel %vm250, %v3124, %v3128
      %v3131 = vshrl.u32 %v3061, 16
      %v3133 = vrot.slane %v3131, 4
      %v3134 = vshll.u32 %v3061, 16
      %v3136 = vrot.slane %v3134, 5
      %v3137 = vor.u32 %v3133, %v3136
      %v3138 = vrot.slane %v3137, 4
      %v3140 = vshll.u32 %v3062, 16
      %v3142 = vrot.slane %v3140, 5
      %v3143 = vsel %vm250, %v3138, %v3142
      %v3144 = vshrl.u32 %v3062, 16
      %v3146 = vrot.slane %v3144, 4
      %v3147 = vor.u32 %v3146, %v3142
      %v3148 = vrot.slane %v3147, 4
      %v3150 = vshll.u32 %v3063, 16
      %v3152 = vrot.slane %v3150, 5
      %v3153 = vsel %vm250, %v3148, %v3152
      %v3155 = vshrl.u32 %v3064, 16
      %v3157 = vrot.slane %v3155, 4
      %v3158 = vshll.u32 %v3064, 16
      %v3160 = vrot.slane %v3158, 5
      %v3161 = vor.u32 %v3157, %v3160
      %v3162 = vrot.slane %v3161, 4
      %v3164 = vshll.u32 %v3065, 16
      %v3166 = vrot.slane %v3164, 5
      %v3167 = vsel %vm250, %v3162, %v3166
      %v3168 = vshrl.u32 %v3065, 16
      %v3170 = vrot.slane %v3168, 4
      %v3171 = vor.u32 %v3170, %v3166
      %v3172 = vrot.slane %v3171, 4
      %v3174 = vshll.u32 %v3066, 16
      %v3176 = vrot.slane %v3174, 5
      %v3177 = vsel %vm250, %v3172, %v3176
      %v3179 = vshrl.u32 %v3067, 16
      %v3181 = vrot.slane %v3179, 4
      %v3182 = vshll.u32 %v3067, 16
      %v3184 = vrot.slane %v3182, 5
      %v3185 = vor.u32 %v3181, %v3184
      %v3186 = vrot.slane %v3185, 4
      %v3188 = vshll.u32 %v3068, 16
      %v3190 = vrot.slane %v3188, 5
      %v3191 = vsel %vm250, %v3186, %v3190
      %v3192 = vshrl.u32 %v3068, 16
      %v3194 = vrot.slane %v3192, 4
      %v3195 = vor.u32 %v3194, %v3190
      %v3196 = vrot.slane %v3195, 4
      %v3198 = vshll.u32 %v3069, 16
      %v3200 = vrot.slane %v3198, 5
      %v3201 = vsel %vm250, %v3196, %v3200
      %v3203 = vshrl.u32 %v3070, 16
      %v3205 = vrot.slane %v3203, 4
      %v3206 = vshll.u32 %v3070, 16
      %v3208 = vrot.slane %v3206, 5
      %v3209 = vor.u32 %v3205, %v3208
      %v3210 = vrot.slane %v3209, 4
      %v3212 = vshll.u32 %v3071, 16
      %v3214 = vrot.slane %v3212, 5
      %v3215 = vsel %vm250, %v3210, %v3214
      %v3216 = vshrl.u32 %v3071, 16
      %v3218 = vrot.slane %v3216, 4
      %v3219 = vor.u32 %v3218, %v3214
      %v3220 = vrot.slane %v3219, 4
      %v3222 = vshll.u32 %v3072, 16
      %v3224 = vrot.slane %v3222, 5
      %v3225 = vsel %vm250, %v3220, %v3224
      %v3227 = vshrl.u32 %v3073, 16
      %v3229 = vrot.slane %v3227, 4
      %v3230 = vshll.u32 %v3073, 16
      %v3232 = vrot.slane %v3230, 5
      %v3233 = vor.u32 %v3229, %v3232
      %v3234 = vrot.slane %v3233, 4
      %v3236 = vshll.u32 %v3074, 16
      %v3238 = vrot.slane %v3236, 5
      %v3239 = vsel %vm250, %v3234, %v3238
      %v3240 = vshrl.u32 %v3074, 16
      %v3242 = vrot.slane %v3240, 4
      %v3243 = vor.u32 %v3242, %v3238
      %v3244 = vrot.slane %v3243, 4
      %v3246 = vshll.u32 %v3075, 16
      %v3248 = vrot.slane %v3246, 5
      %v3249 = vsel %vm250, %v3244, %v3248
      %v3251 = vshrl.u32 %v3076, 16
      %v3253 = vrot.slane %v3251, 4
      %v3254 = vshll.u32 %v3076, 16
      %v3256 = vrot.slane %v3254, 5
      %v3257 = vor.u32 %v3253, %v3256
      %v3258 = vrot.slane %v3257, 4
      %v3260 = vshll.u32 %v3077, 16
      %v3262 = vrot.slane %v3260, 5
      %v3263 = vsel %vm250, %v3258, %v3262
      %v3264 = vshrl.u32 %v3077, 16
      %v3266 = vrot.slane %v3264, 4
      %v3267 = vor.u32 %v3266, %v3262
      %v3268 = vrot.slane %v3267, 4
      %v3270 = vshll.u32 %v3078, 16
      %v3272 = vrot.slane %v3270, 5
      %v3273 = vsel %vm250, %v3268, %v3272
      %v3275 = vshrl.u32 %v3079, 16
      %v3277 = vrot.slane %v3275, 4
      %v3278 = vshll.u32 %v3079, 16
      %v3280 = vrot.slane %v3278, 5
      %v3281 = vor.u32 %v3277, %v3280
      %v3282 = vrot.slane %v3281, 4
      %v3284 = vshll.u32 %v3080, 16
      %v3286 = vrot.slane %v3284, 5
      %v3287 = vsel %vm250, %v3282, %v3286
      %v3288 = vshrl.u32 %v3080, 16
      %v3290 = vrot.slane %v3288, 4
      %v3291 = vor.u32 %v3290, %v3286
      %v3292 = vrot.slane %v3291, 4
      %v3294 = vshll.u32 %v3081, 16
      %v3296 = vrot.slane %v3294, 5
      %v3297 = vsel %vm250, %v3292, %v3296
      %v3299 = vshrl.u32 %v3082, 16
      %v3301 = vrot.slane %v3299, 4
      %v3302 = vshll.u32 %v3082, 16
      %v3304 = vrot.slane %v3302, 5
      %v3305 = vor.u32 %v3301, %v3304
      %v3306 = vrot.slane %v3305, 4
      %v3308 = vshll.u32 %v3083, 16
      %v3310 = vrot.slane %v3308, 5
      %v3311 = vsel %vm250, %v3306, %v3310
      %v3312 = vshrl.u32 %v3083, 16
      %v3314 = vrot.slane %v3312, 4
      %v3315 = vor.u32 %v3314, %v3310
      %v3316 = vrot.slane %v3315, 4
      %v3318 = vshll.u32 %v3084, 16
      %v3320 = vrot.slane %v3318, 5
      %v3321 = vsel %vm250, %v3316, %v3320
      %v3323 = vshrl.u32 %v3085, 16
      %v3325 = vrot.slane %v3323, 4
      %v3326 = vshll.u32 %v3085, 16
      %v3328 = vrot.slane %v3326, 5
      %v3329 = vor.u32 %v3325, %v3328
      %v3330 = vrot.slane %v3329, 4
      %v3332 = vshll.u32 %v3086, 16
      %v3334 = vrot.slane %v3332, 5
      %v3335 = vsel %vm250, %v3330, %v3334
      %v3336 = vshrl.u32 %v3086, 16
      %v3338 = vrot.slane %v3336, 4
      %v3339 = vor.u32 %v3338, %v3334
      %v3340 = vrot.slane %v3339, 4
      %v3342 = vshll.u32 %v3087, 16
      %v3344 = vrot.slane %v3342, 5
      %v3345 = vsel %vm250, %v3340, %v3344
      %v3347 = vshrl.u32 %v3088, 16
      %v3349 = vrot.slane %v3347, 4
      %v3350 = vshll.u32 %v3088, 16
      %v3352 = vrot.slane %v3350, 5
      %v3353 = vor.u32 %v3349, %v3352
      %v3354 = vrot.slane %v3353, 4
      %v3356 = vshll.u32 %v3089, 16
      %v3358 = vrot.slane %v3356, 5
      %v3359 = vsel %vm250, %v3354, %v3358
      %v3360 = vshrl.u32 %v3089, 16
      %v3362 = vrot.slane %v3360, 4
      %v3363 = vor.u32 %v3362, %v3358
      %v3364 = vrot.slane %v3363, 4
      %v3366 = vshll.u32 %v3090, 16
      %v3368 = vrot.slane %v3366, 5
      %v3369 = vsel %vm250, %v3364, %v3368
      %v3371 = vshrl.u32 %v3091, 16
      %v3373 = vrot.slane %v3371, 4
      %v3374 = vshll.u32 %v3091, 16
      %v3376 = vrot.slane %v3374, 5
      %v3377 = vor.u32 %v3373, %v3376
      %v3378 = vrot.slane %v3377, 4
      %v3380 = vshll.u32 %v3092, 16
      %v3382 = vrot.slane %v3380, 5
      %v3383 = vsel %vm250, %v3378, %v3382
      %v3384 = vshrl.u32 %v3092, 16
      %v3386 = vrot.slane %v3384, 4
      %v3387 = vor.u32 %v3386, %v3382
      %v3388 = vrot.slane %v3387, 4
      %v3390 = vshll.u32 %v3093, 16
      %v3392 = vrot.slane %v3390, 5
      %v3393 = vsel %vm250, %v3388, %v3392
      %v3395 = vshrl.u32 %v3094, 16
      %v3397 = vrot.slane %v3395, 4
      %v3398 = vshll.u32 %v3094, 16
      %v3400 = vrot.slane %v3398, 5
      %v3401 = vor.u32 %v3397, %v3400
      %v3402 = vrot.slane %v3401, 4
      %v3404 = vshll.u32 %v3095, 16
      %v3406 = vrot.slane %v3404, 5
      %v3407 = vsel %vm250, %v3402, %v3406
      %v3408 = vshrl.u32 %v3095, 16
      %v3410 = vrot.slane %v3408, 4
      %v3411 = vor.u32 %v3410, %v3406
      %v3412 = vrot.slane %v3411, 4
      %v3414 = vshll.u32 %v3096, 16
      %v3416 = vrot.slane %v3414, 5
      %v3417 = vsel %vm250, %v3412, %v3416
      %v3419 = vshrl.u32 %v3097, 16
      %v3421 = vrot.slane %v3419, 4
      %v3422 = vshll.u32 %v3097, 16
      %v3424 = vrot.slane %v3422, 5
      %v3425 = vor.u32 %v3421, %v3424
      %v3426 = vrot.slane %v3425, 4
      %v3428 = vshll.u32 %v3098, 16
      %v3430 = vrot.slane %v3428, 5
      %v3431 = vsel %vm250, %v3426, %v3430
      %v3432 = vshrl.u32 %v3098, 16
      %v3434 = vrot.slane %v3432, 4
      %v3435 = vor.u32 %v3434, %v3430
      %v3436 = vrot.slane %v3435, 4
      %v3438 = vshll.u32 %v3099, 16
      %v3440 = vrot.slane %v3438, 5
      %v3441 = vsel %vm250, %v3436, %v3440
      %v3443 = vshrl.u32 %v3100, 16
      %v3445 = vrot.slane %v3443, 4
      %v3446 = vshll.u32 %v3100, 16
      %v3448 = vrot.slane %v3446, 5
      %v3449 = vor.u32 %v3445, %v3448
      %v3450 = vrot.slane %v3449, 4
      %v3452 = vshll.u32 %v3101, 16
      %v3454 = vrot.slane %v3452, 5
      %v3455 = vsel %vm250, %v3450, %v3454
      %v3456 = vshrl.u32 %v3101, 16
      %v3458 = vrot.slane %v3456, 4
      %v3459 = vor.u32 %v3458, %v3454
      %v3460 = vrot.slane %v3459, 4
      %v3462 = vshll.u32 %v3102, 16
      %v3464 = vrot.slane %v3462, 5
      %v3465 = vsel %vm250, %v3460, %v3464
      %v3467 = vshrl.u32 %v3103, 16
      %v3469 = vrot.slane %v3467, 4
      %v3470 = vshll.u32 %v3103, 16
      %v3472 = vrot.slane %v3470, 5
      %v3473 = vor.u32 %v3469, %v3472
      %v3474 = vrot.slane %v3473, 4
      %v3476 = vshll.u32 %v3104, 16
      %v3478 = vrot.slane %v3476, 5
      %v3479 = vsel %vm250, %v3474, %v3478
      %v3480 = vshrl.u32 %v3104, 16
      %v3482 = vrot.slane %v3480, 4
      %v3483 = vor.u32 %v3482, %v3478
      %v3484 = vrot.slane %v3483, 4
      %v3486 = vshll.u32 %v3105, 16
      %v3488 = vrot.slane %v3486, 5
      %v3489 = vsel %vm250, %v3484, %v3488
      %s3490 = scalar_lea.vmem %s1, 28
      %v3491 = vld [vmem:[%s3490] sm:$0xf]
      %v3492 = vunpack.c.l.b16 %v3119
      %v3493 = vunpack.c.l.b16 %v3129
      %v3494 = vunpack.c.l.b16 %v3143
      %v3495 = vunpack.c.l.b16 %v3153
      %v3496 = vunpack.c.l.b16 %v3167
      %v3497 = vunpack.c.l.b16 %v3177
      %v3498 = vunpack.c.l.b16 %v3191
      %v3499 = vunpack.c.l.b16 %v3201
      %v3500 = vunpack.c.l.b16 %v3215
      %v3501 = vunpack.c.l.b16 %v3225
      %v3502 = vunpack.c.l.b16 %v3239
      %v3503 = vunpack.c.l.b16 %v3249
      %v3504 = vunpack.c.l.b16 %v3263
      %v3505 = vunpack.c.l.b16 %v3273
      %v3506 = vunpack.c.l.b16 %v3287
      %v3507 = vunpack.c.l.b16 %v3297
      %v3508 = vunpack.c.l.b16 %v3311
      %v3509 = vunpack.c.l.b16 %v3321
      %v3510 = vunpack.c.l.b16 %v3335
      %v3511 = vunpack.c.l.b16 %v3345
      %v3512 = vunpack.c.l.b16 %v3359
      %v3513 = vunpack.c.l.b16 %v3369
      %v3514 = vunpack.c.l.b16 %v3383
      %v3515 = vunpack.c.l.b16 %v3393
      %v3516 = vunpack.c.l.b16 %v3407
      %v3517 = vunpack.c.l.b16 %v3417
      %v3518 = vunpack.c.l.b16 %v3431
      %v3519 = vunpack.c.l.b16 %v3441
      %v3520 = vunpack.c.l.b16 %v3455
      %v3521 = vunpack.c.l.b16 %v3465
      %v3522 = vunpack.c.l.b16 %v3479
      %v3523 = vunpack.c.l.b16 %v3489
      %v3524 = vpack.c.b16 %v3493, %v3492
      %v3525 = vpack.c.b16 %v3495, %v3494
      %v3526 = vpack.c.b16 %v3497, %v3496
      %v3527 = vpack.c.b16 %v3499, %v3498
      %v3528 = vpack.c.b16 %v3501, %v3500
      %v3529 = vpack.c.b16 %v3503, %v3502
      %v3530 = vpack.c.b16 %v3505, %v3504
      %v3531 = vpack.c.b16 %v3507, %v3506
      %v3532 = vpack.c.b16 %v3509, %v3508
      %v3533 = vpack.c.b16 %v3511, %v3510
      %v3534 = vpack.c.b16 %v3513, %v3512
      %v3535 = vpack.c.b16 %v3515, %v3514
      %v3536 = vpack.c.b16 %v3517, %v3516
      %v3537 = vpack.c.b16 %v3519, %v3518
      %v3538 = vpack.c.b16 %v3521, %v3520
      %v3539 = vpack.c.b16 %v3523, %v3522
      %v3541 = vsel %vm685, %v3524, 0
      %v3544 = vsel %vm685, %v3525, 0
      %v3547 = vsel %vm685, %v3526, 0
      %v3550 = vsel %vm685, %v3527, 0
      %v3553 = vsel %vm685, %v3528, 0
      %v3556 = vsel %vm685, %v3529, 0
      %v3559 = vsel %vm685, %v3530, 0
      %v3562 = vsel %vm685, %v3531, 0
      %v3565 = vsel %vm685, %v3532, 0
      %v3568 = vsel %vm685, %v3533, 0
      %v3571 = vsel %vm685, %v3534, 0
      %v3574 = vsel %vm685, %v3535, 0
      %v3577 = vsel %vm685, %v3536, 0
      %v3580 = vsel %vm685, %v3537, 0
      %v3583 = vsel %vm685, %v3538, 0
      %v3586 = vsel %vm685, %v3539, 0
      %v3589 = vsel %vm734, %v3491, 0
      %3591 = vmatpush.bf16.msra.mxu0 0
      %3592 = vmatpush.bf16.msra.mxu0 0
      %3593 = vmatpush.bf16.msra.mxu0 0
      %3594 = vmatpush.bf16.msra.mxu0 0
      %3595 = vmatpush.bf16.msra.mxu0 0
      %3596 = vmatpush.bf16.msra.mxu0 0
      %3597 = vmatpush.bf16.msra.mxu0 0
      %3598 = vmatpush.bf16.msra.mxu0 %v3589
      %3599 = vmatmul.bf16.gmra.mxu0 %v3541
      %v3600 = vpop.f32.mrf.mxu0
      %v3601 = vadd.f32 0.0, %v3600
      %v3602 = vpop.f32.mrf.mxu0
      %v3603 = vadd.f32 0.0, %v3602
      %3604 = vmatmul.bf16.gmra.mxu0 %v3544
      %v3605 = vpop.f32.mrf.mxu0
      %v3606 = vadd.f32 0.0, %v3605
      %v3607 = vpop.f32.mrf.mxu0
      %v3608 = vadd.f32 0.0, %v3607
      %3609 = vmatmul.bf16.gmra.mxu0 %v3547
      %v3610 = vpop.f32.mrf.mxu0
      %v3611 = vadd.f32 0.0, %v3610
      %v3612 = vpop.f32.mrf.mxu0
      %v3613 = vadd.f32 0.0, %v3612
      %3614 = vmatmul.bf16.gmra.mxu0 %v3550
      %v3615 = vpop.f32.mrf.mxu0
      %v3616 = vadd.f32 0.0, %v3615
      %v3617 = vpop.f32.mrf.mxu0
      %v3618 = vadd.f32 0.0, %v3617
      %3619 = vmatmul.bf16.gmra.mxu0 %v3553
      %v3620 = vpop.f32.mrf.mxu0
      %v3621 = vadd.f32 0.0, %v3620
      %v3622 = vpop.f32.mrf.mxu0
      %v3623 = vadd.f32 0.0, %v3622
      %3624 = vmatmul.bf16.gmra.mxu0 %v3556
      %v3625 = vpop.f32.mrf.mxu0
      %v3626 = vadd.f32 0.0, %v3625
      %v3627 = vpop.f32.mrf.mxu0
      %v3628 = vadd.f32 0.0, %v3627
      %3629 = vmatmul.bf16.gmra.mxu0 %v3559
      %v3630 = vpop.f32.mrf.mxu0
      %v3631 = vadd.f32 0.0, %v3630
      %v3632 = vpop.f32.mrf.mxu0
      %v3633 = vadd.f32 0.0, %v3632
      %3634 = vmatmul.bf16.gmra.mxu0 %v3562
      %v3635 = vpop.f32.mrf.mxu0
      %v3636 = vadd.f32 0.0, %v3635
      %v3637 = vpop.f32.mrf.mxu0
      %v3638 = vadd.f32 0.0, %v3637
      %3639 = vmatmul.bf16.gmra.mxu0 %v3565
      %v3640 = vpop.f32.mrf.mxu0
      %v3641 = vadd.f32 0.0, %v3640
      %v3642 = vpop.f32.mrf.mxu0
      %v3643 = vadd.f32 0.0, %v3642
      %3644 = vmatmul.bf16.gmra.mxu0 %v3568
      %v3645 = vpop.f32.mrf.mxu0
      %v3646 = vadd.f32 0.0, %v3645
      %v3647 = vpop.f32.mrf.mxu0
      %v3648 = vadd.f32 0.0, %v3647
      %3649 = vmatmul.bf16.gmra.mxu0 %v3571
      %v3650 = vpop.f32.mrf.mxu0
      %v3651 = vadd.f32 0.0, %v3650
      %v3652 = vpop.f32.mrf.mxu0
      %v3653 = vadd.f32 0.0, %v3652
      %3654 = vmatmul.bf16.gmra.mxu0 %v3574
      %v3655 = vpop.f32.mrf.mxu0
      %v3656 = vadd.f32 0.0, %v3655
      %v3657 = vpop.f32.mrf.mxu0
      %v3658 = vadd.f32 0.0, %v3657
      %3659 = vmatmul.bf16.gmra.mxu0 %v3577
      %v3660 = vpop.f32.mrf.mxu0
      %v3661 = vadd.f32 0.0, %v3660
      %v3662 = vpop.f32.mrf.mxu0
      %v3663 = vadd.f32 0.0, %v3662
      %3664 = vmatmul.bf16.gmra.mxu0 %v3580
      %v3665 = vpop.f32.mrf.mxu0
      %v3666 = vadd.f32 0.0, %v3665
      %v3667 = vpop.f32.mrf.mxu0
      %v3668 = vadd.f32 0.0, %v3667
      %3669 = vmatmul.bf16.gmra.mxu0 %v3583
      %v3670 = vpop.f32.mrf.mxu0
      %v3671 = vadd.f32 0.0, %v3670
      %v3672 = vpop.f32.mrf.mxu0
      %v3673 = vadd.f32 0.0, %v3672
      %3674 = vmatmul.bf16.gmra.mxu0 %v3586
      %v3675 = vpop.f32.mrf.mxu0
      %v3676 = vadd.f32 0.0, %v3675
      %v3677 = vpop.f32.mrf.mxu0
      %v3678 = vadd.f32 0.0, %v3677
      %3679 = vdwg.mxu0
      %v3680 = vadd.f32 %v3026, %v3601
      %v3681 = vadd.f32 %v3027, %v3603
      %v3682 = vadd.f32 %v3028, %v3606
      %v3683 = vadd.f32 %v3029, %v3608
      %v3684 = vadd.f32 %v3030, %v3611
      %v3685 = vadd.f32 %v3031, %v3613
      %v3686 = vadd.f32 %v3032, %v3616
      %v3687 = vadd.f32 %v3033, %v3618
      %v3688 = vadd.f32 %v3034, %v3621
      %v3689 = vadd.f32 %v3035, %v3623
      %v3690 = vadd.f32 %v3036, %v3626
      %v3691 = vadd.f32 %v3037, %v3628
      %v3692 = vadd.f32 %v3038, %v3631
      %v3693 = vadd.f32 %v3039, %v3633
      %v3694 = vadd.f32 %v3040, %v3636
      %v3695 = vadd.f32 %v3041, %v3638
      %v3696 = vadd.f32 %v3042, %v3641
      %v3697 = vadd.f32 %v3043, %v3643
      %v3698 = vadd.f32 %v3044, %v3646
      %v3699 = vadd.f32 %v3045, %v3648
      %v3700 = vadd.f32 %v3046, %v3651
      %v3701 = vadd.f32 %v3047, %v3653
      %v3702 = vadd.f32 %v3048, %v3656
      %v3703 = vadd.f32 %v3049, %v3658
      %v3704 = vadd.f32 %v3050, %v3661
      %v3705 = vadd.f32 %v3051, %v3663
      %v3706 = vadd.f32 %v3052, %v3666
      %v3707 = vadd.f32 %v3053, %v3668
      %v3708 = vadd.f32 %v3054, %v3671
      %v3709 = vadd.f32 %v3055, %v3673
      %v3710 = vadd.f32 %v3056, %v3676
      %v3711 = vadd.f32 %v3057, %v3678
      %v3712 = vld [vmem:[%s2771] sm:$0xe]
      %v3713 = vld [vmem:[%s2771 + $0xc] sm:$0xe]
      %v3714 = vld [vmem:[%s2771 + $0x18] sm:$0xe]
      %v3715 = vld [vmem:[%s2771 + $0x24] sm:$0xe]
      %v3716 = vld [vmem:[%s2771 + $0x30] sm:$0xe]
      %v3717 = vld [vmem:[%s2771 + $0x3c] sm:$0xe]
      %v3718 = vld [vmem:[%s2771 + $0x48] sm:$0xe]
      %v3719 = vld [vmem:[%s2771 + $0x54] sm:$0xe]
      %v3720 = vld [vmem:[%s2771 + $0x60] sm:$0xe]
      %v3721 = vld [vmem:[%s2771 + $0x6c] sm:$0xe]
      %v3722 = vld [vmem:[%s2771 + $0x78] sm:$0xe]
      %v3723 = vld [vmem:[%s2771 + $0x84] sm:$0xe]
      %v3724 = vld [vmem:[%s2771 + $0x90] sm:$0xe]
      %v3725 = vld [vmem:[%s2771 + $0x9c] sm:$0xe]
      %v3726 = vld [vmem:[%s2771 + $0xa8] sm:$0xe]
      %v3727 = vld [vmem:[%s2771 + $0xb4] sm:$0xe]
      %v3776 = vrot.slane %v3712, 5
      %v3777 = vrot.slane %v3776, 4
      %v3778 = vrot.slane %v3059, 5
      %v3779 = vsel %vm1097, %v3777, %v3778
      %v3780 = vrot.slane %v3778, 4
      %v3781 = vrot.slane %v3060, 5
      %v3782 = vsel %vm1097, %v3780, %v3781
      %v3783 = vrot.slane %v3713, 5
      %v3784 = vrot.slane %v3783, 4
      %v3785 = vrot.slane %v3062, 5
      %v3786 = vsel %vm1097, %v3784, %v3785
      %v3787 = vrot.slane %v3785, 4
      %v3788 = vrot.slane %v3063, 5
      %v3789 = vsel %vm1097, %v3787, %v3788
      %v3790 = vrot.slane %v3714, 5
      %v3791 = vrot.slane %v3790, 4
      %v3792 = vrot.slane %v3065, 5
      %v3793 = vsel %vm1097, %v3791, %v3792
      %v3794 = vrot.slane %v3792, 4
      %v3795 = vrot.slane %v3066, 5
      %v3796 = vsel %vm1097, %v3794, %v3795
      %v3797 = vrot.slane %v3715, 5
      %v3798 = vrot.slane %v3797, 4
      %v3799 = vrot.slane %v3068, 5
      %v3800 = vsel %vm1097, %v3798, %v3799
      %v3801 = vrot.slane %v3799, 4
      %v3802 = vrot.slane %v3069, 5
      %v3803 = vsel %vm1097, %v3801, %v3802
      %v3804 = vrot.slane %v3716, 5
      %v3805 = vrot.slane %v3804, 4
      %v3806 = vrot.slane %v3071, 5
      %v3807 = vsel %vm1097, %v3805, %v3806
      %v3808 = vrot.slane %v3806, 4
      %v3809 = vrot.slane %v3072, 5
      %v3810 = vsel %vm1097, %v3808, %v3809
      %v3811 = vrot.slane %v3717, 5
      %v3812 = vrot.slane %v3811, 4
      %v3813 = vrot.slane %v3074, 5
      %v3814 = vsel %vm1097, %v3812, %v3813
      %v3815 = vrot.slane %v3813, 4
      %v3816 = vrot.slane %v3075, 5
      %v3817 = vsel %vm1097, %v3815, %v3816
      %v3818 = vrot.slane %v3718, 5
      %v3819 = vrot.slane %v3818, 4
      %v3820 = vrot.slane %v3077, 5
      %v3821 = vsel %vm1097, %v3819, %v3820
      %v3822 = vrot.slane %v3820, 4
      %v3823 = vrot.slane %v3078, 5
      %v3824 = vsel %vm1097, %v3822, %v3823
      %v3825 = vrot.slane %v3719, 5
      %v3826 = vrot.slane %v3825, 4
      %v3827 = vrot.slane %v3080, 5
      %v3828 = vsel %vm1097, %v3826, %v3827
      %v3829 = vrot.slane %v3827, 4
      %v3830 = vrot.slane %v3081, 5
      %v3831 = vsel %vm1097, %v3829, %v3830
      %v3832 = vrot.slane %v3720, 5
      %v3833 = vrot.slane %v3832, 4
      %v3834 = vrot.slane %v3083, 5
      %v3835 = vsel %vm1097, %v3833, %v3834
      %v3836 = vrot.slane %v3834, 4
      %v3837 = vrot.slane %v3084, 5
      %v3838 = vsel %vm1097, %v3836, %v3837
      %v3839 = vrot.slane %v3721, 5
      %v3840 = vrot.slane %v3839, 4
      %v3841 = vrot.slane %v3086, 5
      %v3842 = vsel %vm1097, %v3840, %v3841
      %v3843 = vrot.slane %v3841, 4
      %v3844 = vrot.slane %v3087, 5
      %v3845 = vsel %vm1097, %v3843, %v3844
      %v3846 = vrot.slane %v3722, 5
      %v3847 = vrot.slane %v3846, 4
      %v3848 = vrot.slane %v3089, 5
      %v3849 = vsel %vm1097, %v3847, %v3848
      %v3850 = vrot.slane %v3848, 4
      %v3851 = vrot.slane %v3090, 5
      %v3852 = vsel %vm1097, %v3850, %v3851
      %v3853 = vrot.slane %v3723, 5
      %v3854 = vrot.slane %v3853, 4
      %v3855 = vrot.slane %v3092, 5
      %v3856 = vsel %vm1097, %v3854, %v3855
      %v3857 = vrot.slane %v3855, 4
      %v3858 = vrot.slane %v3093, 5
      %v3859 = vsel %vm1097, %v3857, %v3858
      %v3860 = vrot.slane %v3724, 5
      %v3861 = vrot.slane %v3860, 4
      %v3862 = vrot.slane %v3095, 5
      %v3863 = vsel %vm1097, %v3861, %v3862
      %v3864 = vrot.slane %v3862, 4
      %v3865 = vrot.slane %v3096, 5
      %v3866 = vsel %vm1097, %v3864, %v3865
      %v3867 = vrot.slane %v3725, 5
      %v3868 = vrot.slane %v3867, 4
      %v3869 = vrot.slane %v3098, 5
      %v3870 = vsel %vm1097, %v3868, %v3869
      %v3871 = vrot.slane %v3869, 4
      %v3872 = vrot.slane %v3099, 5
      %v3873 = vsel %vm1097, %v3871, %v3872
      %v3874 = vrot.slane %v3726, 5
      %v3875 = vrot.slane %v3874, 4
      %v3876 = vrot.slane %v3101, 5
      %v3877 = vsel %vm1097, %v3875, %v3876
      %v3878 = vrot.slane %v3876, 4
      %v3879 = vrot.slane %v3102, 5
      %v3880 = vsel %vm1097, %v3878, %v3879
      %v3881 = vrot.slane %v3727, 5
      %v3882 = vrot.slane %v3881, 4
      %v3883 = vrot.slane %v3104, 5
      %v3884 = vsel %vm1097, %v3882, %v3883
      %v3885 = vrot.slane %v3883, 4
      %v3886 = vrot.slane %v3105, 5
      %v3887 = vsel %vm1097, %v3885, %v3886
      %s3888 = scalar_lea.vmem %s1, 32
      %v3889 = vld [vmem:[%s3888] sm:$0xf]
      %v3890 = vunpack.c.l.b16 %v3779
      %v3891 = vunpack.c.l.b16 %v3782
      %v3892 = vunpack.c.l.b16 %v3786
      %v3893 = vunpack.c.l.b16 %v3789
      %v3894 = vunpack.c.l.b16 %v3793
      %v3895 = vunpack.c.l.b16 %v3796
      %v3896 = vunpack.c.l.b16 %v3800
      %v3897 = vunpack.c.l.b16 %v3803
      %v3898 = vunpack.c.l.b16 %v3807
      %v3899 = vunpack.c.l.b16 %v3810
      %v3900 = vunpack.c.l.b16 %v3814
      %v3901 = vunpack.c.l.b16 %v3817
      %v3902 = vunpack.c.l.b16 %v3821
      %v3903 = vunpack.c.l.b16 %v3824
      %v3904 = vunpack.c.l.b16 %v3828
      %v3905 = vunpack.c.l.b16 %v3831
      %v3906 = vunpack.c.l.b16 %v3835
      %v3907 = vunpack.c.l.b16 %v3838
      %v3908 = vunpack.c.l.b16 %v3842
      %v3909 = vunpack.c.l.b16 %v3845
      %v3910 = vunpack.c.l.b16 %v3849
      %v3911 = vunpack.c.l.b16 %v3852
      %v3912 = vunpack.c.l.b16 %v3856
      %v3913 = vunpack.c.l.b16 %v3859
      %v3914 = vunpack.c.l.b16 %v3863
      %v3915 = vunpack.c.l.b16 %v3866
      %v3916 = vunpack.c.l.b16 %v3870
      %v3917 = vunpack.c.l.b16 %v3873
      %v3918 = vunpack.c.l.b16 %v3877
      %v3919 = vunpack.c.l.b16 %v3880
      %v3920 = vunpack.c.l.b16 %v3884
      %v3921 = vunpack.c.l.b16 %v3887
      %v3922 = vpack.c.b16 %v3891, %v3890
      %v3923 = vpack.c.b16 %v3893, %v3892
      %v3924 = vpack.c.b16 %v3895, %v3894
      %v3925 = vpack.c.b16 %v3897, %v3896
      %v3926 = vpack.c.b16 %v3899, %v3898
      %v3927 = vpack.c.b16 %v3901, %v3900
      %v3928 = vpack.c.b16 %v3903, %v3902
      %v3929 = vpack.c.b16 %v3905, %v3904
      %v3930 = vpack.c.b16 %v3907, %v3906
      %v3931 = vpack.c.b16 %v3909, %v3908
      %v3932 = vpack.c.b16 %v3911, %v3910
      %v3933 = vpack.c.b16 %v3913, %v3912
      %v3934 = vpack.c.b16 %v3915, %v3914
      %v3935 = vpack.c.b16 %v3917, %v3916
      %v3936 = vpack.c.b16 %v3919, %v3918
      %v3937 = vpack.c.b16 %v3921, %v3920
      %v3939 = vsel %vm685, %v3922, 0
      %v3942 = vsel %vm685, %v3923, 0
      %v3945 = vsel %vm685, %v3924, 0
      %v3948 = vsel %vm685, %v3925, 0
      %v3951 = vsel %vm685, %v3926, 0
      %v3954 = vsel %vm685, %v3927, 0
      %v3957 = vsel %vm685, %v3928, 0
      %v3960 = vsel %vm685, %v3929, 0
      %v3963 = vsel %vm685, %v3930, 0
      %v3966 = vsel %vm685, %v3931, 0
      %v3969 = vsel %vm685, %v3932, 0
      %v3972 = vsel %vm685, %v3933, 0
      %v3975 = vsel %vm685, %v3934, 0
      %v3978 = vsel %vm685, %v3935, 0
      %v3981 = vsel %vm685, %v3936, 0
      %v3984 = vsel %vm685, %v3937, 0
      %v3987 = vsel %vm734, %v3889, 0
      %3989 = vmatpush.bf16.msra.mxu0 0
      %3990 = vmatpush.bf16.msra.mxu0 0
      %3991 = vmatpush.bf16.msra.mxu0 0
      %3992 = vmatpush.bf16.msra.mxu0 0
      %3993 = vmatpush.bf16.msra.mxu0 0
      %3994 = vmatpush.bf16.msra.mxu0 0
      %3995 = vmatpush.bf16.msra.mxu0 0
      %3996 = vmatpush.bf16.msra.mxu0 %v3987
      %3997 = vmatmul.bf16.gmra.mxu0 %v3939
      %v3998 = vpop.f32.mrf.mxu0
      %v3999 = vadd.f32 0.0, %v3998
      %v4000 = vpop.f32.mrf.mxu0
      %v4001 = vadd.f32 0.0, %v4000
      %4002 = vmatmul.bf16.gmra.mxu0 %v3942
      %v4003 = vpop.f32.mrf.mxu0
      %v4004 = vadd.f32 0.0, %v4003
      %v4005 = vpop.f32.mrf.mxu0
      %v4006 = vadd.f32 0.0, %v4005
      %4007 = vmatmul.bf16.gmra.mxu0 %v3945
      %v4008 = vpop.f32.mrf.mxu0
      %v4009 = vadd.f32 0.0, %v4008
      %v4010 = vpop.f32.mrf.mxu0
      %v4011 = vadd.f32 0.0, %v4010
      %4012 = vmatmul.bf16.gmra.mxu0 %v3948
      %v4013 = vpop.f32.mrf.mxu0
      %v4014 = vadd.f32 0.0, %v4013
      %v4015 = vpop.f32.mrf.mxu0
      %v4016 = vadd.f32 0.0, %v4015
      %4017 = vmatmul.bf16.gmra.mxu0 %v3951
      %v4018 = vpop.f32.mrf.mxu0
      %v4019 = vadd.f32 0.0, %v4018
      %v4020 = vpop.f32.mrf.mxu0
      %v4021 = vadd.f32 0.0, %v4020
      %4022 = vmatmul.bf16.gmra.mxu0 %v3954
      %v4023 = vpop.f32.mrf.mxu0
      %v4024 = vadd.f32 0.0, %v4023
      %v4025 = vpop.f32.mrf.mxu0
      %v4026 = vadd.f32 0.0, %v4025
      %4027 = vmatmul.bf16.gmra.mxu0 %v3957
      %v4028 = vpop.f32.mrf.mxu0
      %v4029 = vadd.f32 0.0, %v4028
      %v4030 = vpop.f32.mrf.mxu0
      %v4031 = vadd.f32 0.0, %v4030
      %4032 = vmatmul.bf16.gmra.mxu0 %v3960
      %v4033 = vpop.f32.mrf.mxu0
      %v4034 = vadd.f32 0.0, %v4033
      %v4035 = vpop.f32.mrf.mxu0
      %v4036 = vadd.f32 0.0, %v4035
      %4037 = vmatmul.bf16.gmra.mxu0 %v3963
      %v4038 = vpop.f32.mrf.mxu0
      %v4039 = vadd.f32 0.0, %v4038
      %v4040 = vpop.f32.mrf.mxu0
      %v4041 = vadd.f32 0.0, %v4040
      %4042 = vmatmul.bf16.gmra.mxu0 %v3966
      %v4043 = vpop.f32.mrf.mxu0
      %v4044 = vadd.f32 0.0, %v4043
      %v4045 = vpop.f32.mrf.mxu0
      %v4046 = vadd.f32 0.0, %v4045
      %4047 = vmatmul.bf16.gmra.mxu0 %v3969
      %v4048 = vpop.f32.mrf.mxu0
      %v4049 = vadd.f32 0.0, %v4048
      %v4050 = vpop.f32.mrf.mxu0
      %v4051 = vadd.f32 0.0, %v4050
      %4052 = vmatmul.bf16.gmra.mxu0 %v3972
      %v4053 = vpop.f32.mrf.mxu0
      %v4054 = vadd.f32 0.0, %v4053
      %v4055 = vpop.f32.mrf.mxu0
      %v4056 = vadd.f32 0.0, %v4055
      %4057 = vmatmul.bf16.gmra.mxu0 %v3975
      %v4058 = vpop.f32.mrf.mxu0
      %v4059 = vadd.f32 0.0, %v4058
      %v4060 = vpop.f32.mrf.mxu0
      %v4061 = vadd.f32 0.0, %v4060
      %4062 = vmatmul.bf16.gmra.mxu0 %v3978
      %v4063 = vpop.f32.mrf.mxu0
      %v4064 = vadd.f32 0.0, %v4063
      %v4065 = vpop.f32.mrf.mxu0
      %v4066 = vadd.f32 0.0, %v4065
      %4067 = vmatmul.bf16.gmra.mxu0 %v3981
      %v4068 = vpop.f32.mrf.mxu0
      %v4069 = vadd.f32 0.0, %v4068
      %v4070 = vpop.f32.mrf.mxu0
      %v4071 = vadd.f32 0.0, %v4070
      %4072 = vmatmul.bf16.gmra.mxu0 %v3984
      %v4073 = vpop.f32.mrf.mxu0
      %v4074 = vadd.f32 0.0, %v4073
      %v4075 = vpop.f32.mrf.mxu0
      %v4076 = vadd.f32 0.0, %v4075
      %4077 = vdwg.mxu0
      %v4078 = vadd.f32 %v3680, %v3999
      %v4079 = vadd.f32 %v3681, %v4001
      %v4080 = vadd.f32 %v3682, %v4004
      %v4081 = vadd.f32 %v3683, %v4006
      %v4082 = vadd.f32 %v3684, %v4009
      %v4083 = vadd.f32 %v3685, %v4011
      %v4084 = vadd.f32 %v3686, %v4014
      %v4085 = vadd.f32 %v3687, %v4016
      %v4086 = vadd.f32 %v3688, %v4019
      %v4087 = vadd.f32 %v3689, %v4021
      %v4088 = vadd.f32 %v3690, %v4024
      %v4089 = vadd.f32 %v3691, %v4026
      %v4090 = vadd.f32 %v3692, %v4029
      %v4091 = vadd.f32 %v3693, %v4031
      %v4092 = vadd.f32 %v3694, %v4034
      %v4093 = vadd.f32 %v3695, %v4036
      %v4094 = vadd.f32 %v3696, %v4039
      %v4095 = vadd.f32 %v3697, %v4041
      %v4096 = vadd.f32 %v3698, %v4044
      %v4097 = vadd.f32 %v3699, %v4046
      %v4098 = vadd.f32 %v3700, %v4049
      %v4099 = vadd.f32 %v3701, %v4051
      %v4100 = vadd.f32 %v3702, %v4054
      %v4101 = vadd.f32 %v3703, %v4056
      %v4102 = vadd.f32 %v3704, %v4059
      %v4103 = vadd.f32 %v3705, %v4061
      %v4104 = vadd.f32 %v3706, %v4064
      %v4105 = vadd.f32 %v3707, %v4066
      %v4106 = vadd.f32 %v3708, %v4069
      %v4107 = vadd.f32 %v3709, %v4071
      %v4108 = vadd.f32 %v3710, %v4074
      %v4109 = vadd.f32 %v3711, %v4076
      %v4110 = vld [vmem:[%s2] sm:$0x1]
      %v4112 = vperm.slane %v4110, 0
      %v4114 = vmul.f32 %v4078, %v4112
      %v4115 = vmul.f32 %v4079, %v4112
      %v4116 = vmul.f32 %v4080, %v4112
      %v4117 = vmul.f32 %v4081, %v4112
      %v4118 = vmul.f32 %v4082, %v4112
      %v4119 = vmul.f32 %v4083, %v4112
      %v4120 = vmul.f32 %v4084, %v4112
      %v4121 = vmul.f32 %v4085, %v4112
      %v4122 = vmul.f32 %v4086, %v4112
      %v4123 = vmul.f32 %v4087, %v4112
      %v4124 = vmul.f32 %v4088, %v4112
      %v4125 = vmul.f32 %v4089, %v4112
      %v4126 = vmul.f32 %v4090, %v4112
      %v4127 = vmul.f32 %v4091, %v4112
      %v4128 = vmul.f32 %v4092, %v4112
      %v4129 = vmul.f32 %v4093, %v4112
      %v4130 = vmul.f32 %v4094, %v4112
      %v4131 = vmul.f32 %v4095, %v4112
      %v4132 = vmul.f32 %v4096, %v4112
      %v4133 = vmul.f32 %v4097, %v4112
      %v4134 = vmul.f32 %v4098, %v4112
      %v4135 = vmul.f32 %v4099, %v4112
      %v4136 = vmul.f32 %v4100, %v4112
      %v4137 = vmul.f32 %v4101, %v4112
      %v4138 = vmul.f32 %v4102, %v4112
      %v4139 = vmul.f32 %v4103, %v4112
      %v4140 = vmul.f32 %v4104, %v4112
      %v4141 = vmul.f32 %v4105, %v4112
      %v4142 = vmul.f32 %v4106, %v4112
      %v4143 = vmul.f32 %v4107, %v4112
      %v4144 = vmul.f32 %v4108, %v4112
      %v4145 = vmul.f32 %v4109, %v4112
      %v4146 = vld [vmem:[%s3] sm:$0x1]
      %v4148 = vperm.slane %v4146, 0
      %v4150 = vadd.f32 %v4114, %v4148
      %v4151 = vadd.f32 %v4115, %v4148
      %v4152 = vadd.f32 %v4116, %v4148
      %v4153 = vadd.f32 %v4117, %v4148
      %v4154 = vadd.f32 %v4118, %v4148
      %v4155 = vadd.f32 %v4119, %v4148
      %v4156 = vadd.f32 %v4120, %v4148
      %v4157 = vadd.f32 %v4121, %v4148
      %v4158 = vadd.f32 %v4122, %v4148
      %v4159 = vadd.f32 %v4123, %v4148
      %v4160 = vadd.f32 %v4124, %v4148
      %v4161 = vadd.f32 %v4125, %v4148
      %v4162 = vadd.f32 %v4126, %v4148
      %v4163 = vadd.f32 %v4127, %v4148
      %v4164 = vadd.f32 %v4128, %v4148
      %v4165 = vadd.f32 %v4129, %v4148
      %v4166 = vadd.f32 %v4130, %v4148
      %v4167 = vadd.f32 %v4131, %v4148
      %v4168 = vadd.f32 %v4132, %v4148
      %v4169 = vadd.f32 %v4133, %v4148
      %v4170 = vadd.f32 %v4134, %v4148
      %v4171 = vadd.f32 %v4135, %v4148
      %v4172 = vadd.f32 %v4136, %v4148
      %v4173 = vadd.f32 %v4137, %v4148
      %v4174 = vadd.f32 %v4138, %v4148
      %v4175 = vadd.f32 %v4139, %v4148
      %v4176 = vadd.f32 %v4140, %v4148
      %v4177 = vadd.f32 %v4141, %v4148
      %v4178 = vadd.f32 %v4142, %v4148
      %v4179 = vadd.f32 %v4143, %v4148
      %v4180 = vadd.f32 %v4144, %v4148
      %v4181 = vadd.f32 %v4145, %v4148
      %4182 = vst [vmem:[%s197] sm:$0xff] %v4150
      %4183 = vst [vmem:[%s197 + $0x8] sm:$0xff] %v4151
      %4184 = vst [vmem:[%s197 + $0x10] sm:$0xff] %v4152
      %4185 = vst [vmem:[%s197 + $0x18] sm:$0xff] %v4153
      %4186 = vst [vmem:[%s197 + $0x20] sm:$0xff] %v4154
      %4187 = vst [vmem:[%s197 + $0x28] sm:$0xff] %v4155
      %4188 = vst [vmem:[%s197 + $0x30] sm:$0xff] %v4156
      %4189 = vst [vmem:[%s197 + $0x38] sm:$0xff] %v4157
      %4190 = vst [vmem:[%s197 + $0x40] sm:$0xff] %v4158
      %4191 = vst [vmem:[%s197 + $0x48] sm:$0xff] %v4159
      %4192 = vst [vmem:[%s197 + $0x50] sm:$0xff] %v4160
      %4193 = vst [vmem:[%s197 + $0x58] sm:$0xff] %v4161
      %4194 = vst [vmem:[%s197 + $0x60] sm:$0xff] %v4162
      %4195 = vst [vmem:[%s197 + $0x68] sm:$0xff] %v4163
      %4196 = vst [vmem:[%s197 + $0x70] sm:$0xff] %v4164
      %4197 = vst [vmem:[%s197 + $0x78] sm:$0xff] %v4165
      %4198 = vst [vmem:[%s197 + $0x80] sm:$0xff] %v4166
      %4199 = vst [vmem:[%s197 + $0x88] sm:$0xff] %v4167
      %4200 = vst [vmem:[%s197 + $0x90] sm:$0xff] %v4168
      %4201 = vst [vmem:[%s197 + $0x98] sm:$0xff] %v4169
      %4202 = vst [vmem:[%s197 + $0xa0] sm:$0xff] %v4170
      %4203 = vst [vmem:[%s197 + $0xa8] sm:$0xff] %v4171
      %4204 = vst [vmem:[%s197 + $0xb0] sm:$0xff] %v4172
      %4205 = vst [vmem:[%s197 + $0xb8] sm:$0xff] %v4173
      %4206 = vst [vmem:[%s197 + $0xc0] sm:$0xff] %v4174
      %4207 = vst [vmem:[%s197 + $0xc8] sm:$0xff] %v4175
      %4208 = vst [vmem:[%s197 + $0xd0] sm:$0xff] %v4176
      %4209 = vst [vmem:[%s197 + $0xd8] sm:$0xff] %v4177
      %4210 = vst [vmem:[%s197 + $0xe0] sm:$0xff] %v4178
      %4211 = vst [vmem:[%s197 + $0xe8] sm:$0xff] %v4179
      %4212 = vst [vmem:[%s197 + $0xf0] sm:$0xff] %v4180
      %4213 = vst [vmem:[%s197 + $0xf8] sm:$0xff] %v4181
      %p4214 = scmp.lt.s32.totalorder %s15, 1
      %s4215 = scalar_select %p4214, %s15, 1
      %s4216 = smul.addr %s4215, 32
      %s4217 = smul.addr %s4216, 8
      %s4218 = scalar_lea.vmem %s4, %s4217
      // Predicated region
      $region37: #{deform_up_forward.4} parent=35 // pred_check
        %p4219 = pneg %p122
      $region38: #{deform_up_forward.4} parent=35 // pred_check_branch
        %4221 = sbr.rel (%p4219) target = $region40
      $region39: #{deform_up_forward.4} parent=35 // pred_region
        _
      $region40: #{deform_up_forward.4} parent=35 // pred_fallthru
        _
    $region36: #{deform_up_forward.4} parent=5 // pred_fallthru
      _
    %p4222 = scmp.le.s32.totalorder 2, %s10
    // Predicated region
    $region41: #{deform_up_forward.4} parent=5 // pred_check
      %p4223 = pneg %p4222
    $region42: #{deform_up_forward.4} parent=5 // pred_check_branch
      %4225 = sbr.rel (%p4223) target = $region44
    $region43: #{deform_up_forward.4} parent=5 // pred_region
      %s4226 = ssub.s32 %s10, 2
      // Predicated region
      $region45: #{deform_up_forward.4} parent=43 // pred_check
        %p4227 = pneg %p128
      $region46: #{deform_up_forward.4} parent=43 // pred_check_branch
        %4229 = sbr.rel (%p4227) target = $region48
      $region47: #{deform_up_forward.4} parent=43 // pred_region
        %p4230 = scmp.lt.s32.totalorder %s16, 1
        %s4231 = scalar_select %p4230, %s16, 1
        %s4232 = smul.addr %s4231, 32
        %s4233 = smul.addr %s4232, 8
        %s4234 = scalar_lea.vmem %s4, %s4233
      $region48: #{deform_up_forward.4} parent=43 // pred_fallthru
        _
    $region44: #{deform_up_forward.4} parent=5 // pred_fallthru
      _
  $region6: #{deform_up_forward.4} parent=0 // loop_footer
    %s14 = sadd.s32 1, %s10
  $region7: #{deform_up_forward.4} parent=0 // loop_footer_branch
    %9 = sbr.rel target = $region3
  $region8: #{deform_up_forward.4} parent=0 // loop_exit
    _

// kernel: deform_up_forward.5
$region0: #{deform_up_forward.5}
  #allocation0 [shape = 'u32[]', space=smem, size = 0x4, offset = 0x4, fixed_abs, tag = 'smem constant byte address 0x4 - core index']
  #allocation1 [shape = 'u32[72,128]{1,0:T(1,128)}', space=vmem, size = 0x9000, scoped, tag = 'internal scratch']
  %s0 = inlined_call_operand.vmem [shape: bf16[512,72], index: 0, kind: input, shape index: {}]
  %s1 = inlined_call_operand.vmem [shape: bf16[72,128], index: 1, kind: input, shape index: {}]
  %s2 = inlined_call_operand.vmem [shape: f32[1,128], index: 2, kind: input, shape index: {}]
  %s3 = inlined_call_operand.vmem [shape: f32[1,128], index: 3, kind: input, shape index: {}]
  %s4 = inlined_call_operand.vmem [shape: f32[512,128], index: 4, kind: output, shape index: {}]
  %s5 = sld [smem:[#allocation0]]
  $region49: #{deform_up_forward.5} parent=0
    _
  %s7 = ssub.s32 1, %s5
  %s8 = scalar_select 0, %s7, %s5
  loop: start=0, step=1, limit=4
  $region2: #{deform_up_forward.5} parent=0 // loop_pre_header
    _
  $region3: #{deform_up_forward.5} parent=0 // loop_header
    %s10 = sphi 0, %s14
    %p11 = scmp.ge.s32.totalorder %s10, 4
    %s17 = sphi 0, %s29
    %s18 = sphi 0, %s25
    %s19 = sphi 0, %s17
    %s20 = sphi 0, %s18
    %s21 = sphi 0, %s19
    %s22 = sphi 0, %s20
    %s32 = sphi 0, %s34
    %s35 = sphi 0, %s32
    %s36 = sphi 0, %s35
    %s52 = sphi 0, %s36
    %s58 = sphi 0, %s60
    %s61 = sphi 0, %s58
    %s62 = sphi 0, %s61
    %s78 = sphi 0, %s62
    %s84 = sphi 0, %s86
    %s87 = sphi 0, %s84
    %s88 = sphi 0, %s87
    %s104 = sphi 0, %s88
    %s110 = sphi 0, %s112
    %s113 = sphi 0, %s110
    %s114 = sphi 0, %s113
    %s130 = sphi 0, %s114
    %s138 = sphi 0, %s140
    %s141 = sphi 0, %s138
    %s142 = sphi 0, %s141
    %s158 = sphi 0, %s142
  $region4: #{deform_up_forward.5} parent=0 // loop_header_branch
    %13 = sbr.rel (%p11) target = $region8
  $region5: #{deform_up_forward.5} parent=0 // loop_body
    %s15 = ssub.s32 %s10, 1
    %s16 = ssub.s32 %s10, 2
    %s23 = sadd.s32 1, %s18
    %p24 = scmp.ge.s32.totalorder %s23, 1
    %s25 = scalar_select %p24, 0, %s23
    %s26 = sadd.s32 1, %s17
    %s27 = scalar_select %p24, %s26, %s17
    %p28 = scmp.ge.s32.totalorder %s27, 2
    %s29 = scalar_select %p28, 0, %s27
    %s30 = ssub.s32 %s17, %s29
    %p31 = scmp.eq.s32.totalorder %s30, 0
    %s33 = sadd.s32 %s32, 1
    %s34 = scalar_select %p31, %s32, %s33
    %p37 = pneg %p31
    %p38 = scmp.eq.s32.totalorder %s10, 1
    %p39 = por %p37, %p38
    %p40 = scmp.ne.s32.totalorder %s32, %s35
    %p41 = scmp.eq.s32.totalorder %s10, 0
    %p42 = por %p40, %p41
    %p43 = scmp.ne.s32.totalorder %s32, %s35
    %p44 = scmp.eq.s32.totalorder %s15, 1
    %p45 = por %p43, %p44
    %p46 = scmp.ne.s32.totalorder %s35, %s36
    %p47 = scmp.eq.s32.totalorder %s15, 0
    %p48 = por %p46, %p47
    %p49 = scmp.ne.s32.totalorder %s35, %s36
    %p50 = scmp.eq.s32.totalorder %s16, 1
    %p51 = por %p49, %p50
    %p53 = scmp.ne.s32.totalorder %s36, %s52
    %p54 = scmp.eq.s32.totalorder %s16, 0
    %p55 = por %p53, %p54
    %s56 = ssub.s32 %s18, %s25
    %p57 = scmp.eq.s32.totalorder %s56, 0
    %s59 = sadd.s32 %s58, 1
    %s60 = scalar_select %p57, %s58, %s59
    %p63 = pneg %p57
    %p64 = scmp.eq.s32.totalorder %s10, 1
    %p65 = por %p63, %p64
    %p66 = scmp.ne.s32.totalorder %s58, %s61
    %p67 = scmp.eq.s32.totalorder %s10, 0
    %p68 = por %p66, %p67
    %p69 = scmp.ne.s32.totalorder %s58, %s61
    %p70 = scmp.eq.s32.totalorder %s15, 1
    %p71 = por %p69, %p70
    %p72 = scmp.ne.s32.totalorder %s61, %s62
    %p73 = scmp.eq.s32.totalorder %s15, 0
    %p74 = por %p72, %p73
    %p75 = scmp.ne.s32.totalorder %s61, %s62
    %p76 = scmp.eq.s32.totalorder %s16, 1
    %p77 = por %p75, %p76
    %p79 = scmp.ne.s32.totalorder %s62, %s78
    %p80 = scmp.eq.s32.totalorder %s16, 0
    %p81 = por %p79, %p80
    %s82 = ssub.s32 %s18, %s25
    %p83 = scmp.eq.s32.totalorder %s82, 0
    %s85 = sadd.s32 %s84, 1
    %s86 = scalar_select %p83, %s84, %s85
    %p89 = pneg %p83
    %p90 = scmp.eq.s32.totalorder %s10, 1
    %p91 = por %p89, %p90
    %p92 = scmp.ne.s32.totalorder %s84, %s87
    %p93 = scmp.eq.s32.totalorder %s10, 0
    %p94 = por %p92, %p93
    %p95 = scmp.ne.s32.totalorder %s84, %s87
    %p96 = scmp.eq.s32.totalorder %s15, 1
    %p97 = por %p95, %p96
    %p98 = scmp.ne.s32.totalorder %s87, %s88
    %p99 = scmp.eq.s32.totalorder %s15, 0
    %p100 = por %p98, %p99
    %p101 = scmp.ne.s32.totalorder %s87, %s88
    %p102 = scmp.eq.s32.totalorder %s16, 1
    %p103 = por %p101, %p102
    %p105 = scmp.ne.s32.totalorder %s88, %s104
    %p106 = scmp.eq.s32.totalorder %s16, 0
    %p107 = por %p105, %p106
    %s108 = ssub.s32 %s18, %s25
    %p109 = scmp.eq.s32.totalorder %s108, 0
    %s111 = sadd.s32 %s110, 1
    %s112 = scalar_select %p109, %s110, %s111
    %p115 = pneg %p109
    %p116 = scmp.eq.s32.totalorder %s10, 1
    %p117 = por %p115, %p116
    %p118 = scmp.ne.s32.totalorder %s110, %s113
    %p119 = scmp.eq.s32.totalorder %s10, 0
    %p120 = por %p118, %p119
    %p121 = scmp.ne.s32.totalorder %s110, %s113
    %p122 = scmp.eq.s32.totalorder %s15, 1
    %p123 = por %p121, %p122
    %p124 = scmp.ne.s32.totalorder %s113, %s114
    %p125 = scmp.eq.s32.totalorder %s15, 0
    %p126 = por %p124, %p125
    %p127 = scmp.ne.s32.totalorder %s113, %s114
    %p128 = scmp.eq.s32.totalorder %s16, 1
    %p129 = por %p127, %p128
    %p131 = scmp.ne.s32.totalorder %s114, %s130
    %p132 = scmp.eq.s32.totalorder %s16, 0
    %p133 = por %p131, %p132
    %s134 = ssub.s32 %s17, %s29
    %s135 = ssub.s32 %s18, %s25
    %s136 = sor.u32 %s134, %s135
    %p137 = scmp.eq.s32.totalorder %s136, 0
    %s139 = sadd.s32 %s138, 1
    %s140 = scalar_select %p137, %s138, %s139
    %p143 = pneg %p137
    %p144 = scmp.eq.s32.totalorder %s10, 1
    %p145 = por %p143, %p144
    %p146 = scmp.ne.s32.totalorder %s138, %s141
    %p147 = scmp.eq.s32.totalorder %s10, 0
    %p148 = por %p146, %p147
    %p149 = scmp.ne.s32.totalorder %s138, %s141
    %p150 = scmp.eq.s32.totalorder %s15, 1
    %p151 = por %p149, %p150
    %p152 = scmp.ne.s32.totalorder %s141, %s142
    %p153 = scmp.eq.s32.totalorder %s15, 0
    %p154 = por %p152, %p153
    %p155 = scmp.ne.s32.totalorder %s141, %s142
    %p156 = scmp.eq.s32.totalorder %s16, 1
    %p157 = por %p155, %p156
    %p159 = scmp.ne.s32.totalorder %s142, %s158
    %p160 = scmp.eq.s32.totalorder %s16, 0
    %p161 = por %p159, %p160
    %p162 = scmp.le.s32.totalorder 1, %s10
    %p163 = scmp.lt.s32.totalorder %s10, 3
    %p164 = pnand %p162, %p163
    %p165 = pneg %p164
    // Predicated region
    $region9: #{deform_up_forward.5} parent=5 // pred_check
      _
    $region10: #{deform_up_forward.5} parent=5 // pred_check_branch
      %167 = sbr.rel (%p164) target = $region12
    $region11: #{deform_up_forward.5} parent=5 // pred_region
      %s168 = ssub.s32 %s10, 1
      // Predicated region
      $region13: #{deform_up_forward.5} parent=11 // pred_check
        %p169 = pneg %p74
      $region14: #{deform_up_forward.5} parent=11 // pred_check_branch
        %171 = sbr.rel (%p169) target = $region16
      $region15: #{deform_up_forward.5} parent=11 // pred_region
        %p172 = scmp.lt.s32.totalorder %s20, 0
        %s173 = scalar_select %p172, %s20, 0
        %s174 = smul.addr %s173, 4
        %s175 = scalar_lea.vmem %s1, %s174
      $region16: #{deform_up_forward.5} parent=11 // pred_fallthru
        _
      // Predicated region
      $region17: #{deform_up_forward.5} parent=11 // pred_check
        %p176 = pneg %p100
      $region18: #{deform_up_forward.5} parent=11 // pred_check_branch
        %178 = sbr.rel (%p176) target = $region20
      $region19: #{deform_up_forward.5} parent=11 // pred_region
        %p179 = scmp.lt.s32.totalorder %s20, 0
        %s180 = scalar_select %p179, %s20, 0
        %s181 = scalar_lea.vmem %s2, %s180
      $region20: #{deform_up_forward.5} parent=11 // pred_fallthru
        _
      // Predicated region
      $region21: #{deform_up_forward.5} parent=11 // pred_check
        %p182 = pneg %p126
      $region22: #{deform_up_forward.5} parent=11 // pred_check_branch
        %184 = sbr.rel (%p182) target = $region24
      $region23: #{deform_up_forward.5} parent=11 // pred_region
        %p185 = scmp.lt.s32.totalorder %s20, 0
        %s186 = scalar_select %p185, %s20, 0
        %s187 = scalar_lea.vmem %s3, %s186
      $region24: #{deform_up_forward.5} parent=11 // pred_fallthru
        _
    $region12: #{deform_up_forward.5} parent=5 // pred_fallthru
      _
    %p188 = scmp.lt.s32.totalorder %s10, 2
    // Predicated region
    $region25: #{deform_up_forward.5} parent=5 // pred_check
      %p189 = pneg %p188
    $region26: #{deform_up_forward.5} parent=5 // pred_check_branch
      %191 = sbr.rel (%p189) target = $region28
    $region27: #{deform_up_forward.5} parent=5 // pred_region
      // Predicated region
      $region29: #{deform_up_forward.5} parent=27 // pred_check
        %p192 = pneg %p42
      $region30: #{deform_up_forward.5} parent=27 // pred_check_branch
        %194 = sbr.rel (%p192) target = $region32
      $region31: #{deform_up_forward.5} parent=27 // pred_region
        %s195 = smul.u32 32, %s17
        %p196 = scmp.lt.s32.totalorder %s195, 63
        %s197 = scalar_select %p196, %s195, 63
        %s198 = smul.addr %s197, 4
        %s199 = scalar_lea.vmem %s0, %s198
        %s200 = smul.u32 32, %s17
      $region32: #{deform_up_forward.5} parent=27 // pred_fallthru
        _
    $region28: #{deform_up_forward.5} parent=5 // pred_fallthru
      _
    %p201 = scmp.le.s32.totalorder 1, %s10
    %p202 = scmp.lt.s32.totalorder %s10, 3
    %p203 = pnand %p201, %p202
    %p204 = pneg %p203
    // Predicated region
    $region33: #{deform_up_forward.5} parent=5 // pred_check
      _
    $region34: #{deform_up_forward.5} parent=5 // pred_check_branch
      %206 = sbr.rel (%p203) target = $region36
    $region35: #{deform_up_forward.5} parent=5 // pred_region
      %s207 = ssub.s32 %s10, 1
      %s208 = smul.u32 32, %s19
      %p209 = scmp.lt.s32.totalorder %s208, 63
      %s210 = scalar_select %p209, %s208, 63
      %s211 = smul.addr %s210, 4
      %s212 = scalar_lea.vmem %s0, %s211
      %p213 = pneg %p48
      %p214 = pneg %p45
      %p215 = scmp.lt.s32.totalorder %s20, 0
      %s216 = scalar_select %p215, %s20, 0
      %s217 = smul.addr %s216, 4
      %s218 = scalar_lea.vmem %s1, %s217
      %p219 = pneg %p74
      %p220 = pneg %p71
      %p221 = scmp.lt.s32.totalorder %s20, 0
      %s222 = scalar_select %p221, %s20, 0
      %s223 = scalar_lea.vmem %s2, %s222
      %p224 = pneg %p100
      %p225 = pneg %p97
      %p226 = scmp.lt.s32.totalorder %s20, 0
      %s227 = scalar_select %p226, %s20, 0
      %s228 = scalar_lea.vmem %s3, %s227
      %p229 = pneg %p126
      %p230 = pneg %p123
      %p231 = pneg %p154
      %p232 = pneg %p151
      %s233 = smul.u32 32, %s19
      %p234 = scmp.lt.s32.totalorder %s233, 63
      %s235 = scalar_select %p234, %s233, 63
      %p236 = scmp.lt.s32.totalorder %s20, 0
      %s237 = scalar_select %p236, %s20, 0
      %s238 = sadd.s32 %s237, %s235
      %s239 = smul.addr %s238, 8
      %s240 = scalar_lea.vmem %s4, %s239
      %s241 = smul.u32 32, %s19
      %p242 = scmp.lt.s32.totalorder %s241, 63
      %s243 = scalar_select %p242, %s241, 63
      %s244 = smul.addr %s243, 4
      %s245 = scalar_lea.vmem %s0, %s244
      %s246 = smul.u32 32, %s19
      %p247 = scmp.lt.s32.totalorder %s20, 0
      %s248 = scalar_select %p247, %s20, 0
      %s249 = smul.addr %s248, 4
      %s250 = scalar_lea.vmem %s1, %s249
      %p251 = scmp.lt.s32.totalorder %s20, 0
      %s252 = scalar_select %p251, %s20, 0
      %s253 = scalar_lea.vmem %s2, %s252
      %p254 = scmp.lt.s32.totalorder %s20, 0
      %s255 = scalar_select %p254, %s20, 0
      %s256 = scalar_lea.vmem %s3, %s255
      %s257 = smul.u32 32, %s19
      %p258 = scmp.lt.s32.totalorder %s257, 63
      %s259 = scalar_select %p258, %s257, 63
      %p260 = scmp.lt.s32.totalorder %s20, 0
      %s261 = scalar_select %p260, %s20, 0
      %s262 = sadd.s32 %s261, %s259
      %s263 = smul.addr %s262, 8
      %s264 = scalar_lea.vmem %s4, %s263
      %s265 = smul.u32 32, %s19
      %v267 = vld [vmem:[%s245] sm:$0xf]
      %v268 = vld [vmem:[%s245 + $0x4] sm:$0xf]
      %v269 = vld [vmem:[%s245 + $0x8] sm:$0xf]
      %v270 = vld [vmem:[%s245 + $0xc] sm:$0xf]
      %v271 = vld [vmem:[%s245 + $0x10] sm:$0xf]
      %v272 = vld [vmem:[%s245 + $0x14] sm:$0xf]
      %v273 = vld [vmem:[%s245 + $0x18] sm:$0xf]
      %v274 = vld [vmem:[%s245 + $0x1c] sm:$0xf]
      %v275 = vld [vmem:[%s245 + $0x20] sm:$0xf]
      %v276 = vld [vmem:[%s245 + $0x24] sm:$0xf]
      %v277 = vld [vmem:[%s245 + $0x28] sm:$0xf]
      %v278 = vld [vmem:[%s245 + $0x2c] sm:$0xf]
      %v279 = vld [vmem:[%s245 + $0x30] sm:$0xf]
      %v280 = vld [vmem:[%s245 + $0x34] sm:$0xf]
      %v281 = vld [vmem:[%s245 + $0x38] sm:$0xf]
      %v282 = vld [vmem:[%s245 + $0x3c] sm:$0xf]
      %v283 = vld [vmem:[%s245 + $0x40] sm:$0xf]
      %v284 = vld [vmem:[%s245 + $0x44] sm:$0xf]
      %v285 = vld [vmem:[%s245 + $0x48] sm:$0xf]
      %v286 = vld [vmem:[%s245 + $0x4c] sm:$0xf]
      %v287 = vld [vmem:[%s245 + $0x50] sm:$0xf]
      %v288 = vld [vmem:[%s245 + $0x54] sm:$0xf]
      %v289 = vld [vmem:[%s245 + $0x58] sm:$0xf]
      %v290 = vld [vmem:[%s245 + $0x5c] sm:$0xf]
      %v291 = vld [vmem:[%s245 + $0x60] sm:$0xf]
      %v292 = vld [vmem:[%s245 + $0x64] sm:$0xf]
      %v293 = vld [vmem:[%s245 + $0x68] sm:$0xf]
      %v294 = vld [vmem:[%s245 + $0x6c] sm:$0xf]
      %v295 = vld [vmem:[%s245 + $0x70] sm:$0xf]
      %v296 = vld [vmem:[%s245 + $0x74] sm:$0xf]
      %v297 = vld [vmem:[%s245 + $0x78] sm:$0xf]
      %v298 = vld [vmem:[%s245 + $0x7c] sm:$0xf]
      %v299 = vld [vmem:[%s250] sm:$0xf]
      %v300 = vld [vmem:[%s250 + $0x4] sm:$0xf]
      %v301 = vld [vmem:[%s250 + $0x8] sm:$0xf]
      %v302 = vld [vmem:[%s250 + $0xc] sm:$0xf]
      %v303 = vld [vmem:[%s250 + $0x10] sm:$0xf]
      %v304 = vld [vmem:[%s250 + $0x14] sm:$0xf]
      %v305 = vld [vmem:[%s250 + $0x18] sm:$0xf]
      %v306 = vld [vmem:[%s250 + $0x1c] sm:$0xf]
      %v307 = vld [vmem:[%s250 + $0x20] sm:$0xf]
      %v340 = vunpack.c.l.b16 %v267
      %v341 = vunpack.c.l.b16 %v268
      %v342 = vunpack.c.l.b16 %v269
      %v343 = vunpack.c.l.b16 %v270
      %v344 = vunpack.c.l.b16 %v271
      %v345 = vunpack.c.l.b16 %v272
      %v346 = vunpack.c.l.b16 %v273
      %v347 = vunpack.c.l.b16 %v274
      %v348 = vunpack.c.l.b16 %v275
      %v349 = vunpack.c.l.b16 %v276
      %v350 = vunpack.c.l.b16 %v277
      %v351 = vunpack.c.l.b16 %v278
      %v352 = vunpack.c.l.b16 %v279
      %v353 = vunpack.c.l.b16 %v280
      %v354 = vunpack.c.l.b16 %v281
      %v355 = vunpack.c.l.b16 %v282
      %v356 = vunpack.c.l.b16 %v283
      %v357 = vunpack.c.l.b16 %v284
      %v358 = vunpack.c.l.b16 %v285
      %v359 = vunpack.c.l.b16 %v286
      %v360 = vunpack.c.l.b16 %v287
      %v361 = vunpack.c.l.b16 %v288
      %v362 = vunpack.c.l.b16 %v289
      %v363 = vunpack.c.l.b16 %v290
      %v364 = vunpack.c.l.b16 %v291
      %v365 = vunpack.c.l.b16 %v292
      %v366 = vunpack.c.l.b16 %v293
      %v367 = vunpack.c.l.b16 %v294
      %v368 = vunpack.c.l.b16 %v295
      %v369 = vunpack.c.l.b16 %v296
      %v370 = vunpack.c.l.b16 %v297
      %v371 = vunpack.c.l.b16 %v298
      %v372 = vpack.c.b16 %v341, %v340
      %v373 = vpack.c.b16 %v343, %v342
      %v374 = vpack.c.b16 %v345, %v344
      %v375 = vpack.c.b16 %v347, %v346
      %v376 = vpack.c.b16 %v349, %v348
      %v377 = vpack.c.b16 %v351, %v350
      %v378 = vpack.c.b16 %v353, %v352
      %v379 = vpack.c.b16 %v355, %v354
      %v380 = vpack.c.b16 %v357, %v356
      %v381 = vpack.c.b16 %v359, %v358
      %v382 = vpack.c.b16 %v361, %v360
      %v383 = vpack.c.b16 %v363, %v362
      %v384 = vpack.c.b16 %v365, %v364
      %v385 = vpack.c.b16 %v367, %v366
      %v386 = vpack.c.b16 %v369, %v368
      %v387 = vpack.c.b16 %v371, %v370
      %v397 = vunpack.c.l.b16 %v299
      %v398 = vunpack.c.l.b16 %v300
      %v399 = vunpack.c.l.b16 %v301
      %v400 = vunpack.c.l.b16 %v302
      %v401 = vunpack.c.l.b16 %v303
      %v402 = vunpack.c.l.b16 %v304
      %v403 = vunpack.c.l.b16 %v305
      %v404 = vunpack.c.l.b16 %v306
      %v405 = vunpack.c.l.b16 %v307
      %v406 = vpack.c.b16 %v398, %v397
      %v407 = vpack.c.b16 %v400, %v399
      %v408 = vpack.c.b16 %v402, %v401
      %v409 = vpack.c.b16 %v404, %v403
      %v410 = vpack.c.b16 %v405, %v405
      %vm415 = vcmask 588800
      %v417 = vsel %vm415, %v372, 0
      %v420 = vsel %vm415, %v373, 0
      %v423 = vsel %vm415, %v374, 0
      %v426 = vsel %vm415, %v375, 0
      %v429 = vsel %vm415, %v376, 0
      %v432 = vsel %vm415, %v377, 0
      %v435 = vsel %vm415, %v378, 0
      %v438 = vsel %vm415, %v379, 0
      %v441 = vsel %vm415, %v380, 0
      %v444 = vsel %vm415, %v381, 0
      %v447 = vsel %vm415, %v382, 0
      %v450 = vsel %vm415, %v383, 0
      %v453 = vsel %vm415, %v384, 0
      %v456 = vsel %vm415, %v385, 0
      %v459 = vsel %vm415, %v386, 0
      %v462 = vsel %vm415, %v387, 0
      %vm464 = vcmask 1043456
      %v466 = vsel %vm464, %v410, 0
      %468 = vmatpush.bf16.msra.mxu0 0
      %469 = vmatpush.bf16.msra.mxu0 0
      %470 = vmatpush.bf16.msra.mxu0 0
      %471 = vmatpush.bf16.msra.mxu0 %v466
      %472 = vmatpush.bf16.msra.mxu0 %v409
      %473 = vmatpush.bf16.msra.mxu0 %v408
      %474 = vmatpush.bf16.msra.mxu0 %v407
      %475 = vmatpush.bf16.msra.mxu0 %v406
      %476 = vmatmul.bf16.gmra.mxu0 %v417
      %v477 = vpop.f32.mrf.mxu0
      %v478 = vadd.f32 0.0, %v477
      %v479 = vpop.f32.mrf.mxu0
      %v480 = vadd.f32 0.0, %v479
      %481 = vmatmul.bf16.gmra.mxu0 %v420
      %v482 = vpop.f32.mrf.mxu0
      %v483 = vadd.f32 0.0, %v482
      %v484 = vpop.f32.mrf.mxu0
      %v485 = vadd.f32 0.0, %v484
      %486 = vmatmul.bf16.gmra.mxu0 %v423
      %v487 = vpop.f32.mrf.mxu0
      %v488 = vadd.f32 0.0, %v487
      %v489 = vpop.f32.mrf.mxu0
      %v490 = vadd.f32 0.0, %v489
      %491 = vmatmul.bf16.gmra.mxu0 %v426
      %v492 = vpop.f32.mrf.mxu0
      %v493 = vadd.f32 0.0, %v492
      %v494 = vpop.f32.mrf.mxu0
      %v495 = vadd.f32 0.0, %v494
      %496 = vmatmul.bf16.gmra.mxu0 %v429
      %v497 = vpop.f32.mrf.mxu0
      %v498 = vadd.f32 0.0, %v497
      %v499 = vpop.f32.mrf.mxu0
      %v500 = vadd.f32 0.0, %v499
      %501 = vmatmul.bf16.gmra.mxu0 %v432
      %v502 = vpop.f32.mrf.mxu0
      %v503 = vadd.f32 0.0, %v502
      %v504 = vpop.f32.mrf.mxu0
      %v505 = vadd.f32 0.0, %v504
      %506 = vmatmul.bf16.gmra.mxu0 %v435
      %v507 = vpop.f32.mrf.mxu0
      %v508 = vadd.f32 0.0, %v507
      %v509 = vpop.f32.mrf.mxu0
      %v510 = vadd.f32 0.0, %v509
      %511 = vmatmul.bf16.gmra.mxu0 %v438
      %v512 = vpop.f32.mrf.mxu0
      %v513 = vadd.f32 0.0, %v512
      %v514 = vpop.f32.mrf.mxu0
      %v515 = vadd.f32 0.0, %v514
      %516 = vmatmul.bf16.gmra.mxu0 %v441
      %v517 = vpop.f32.mrf.mxu0
      %v518 = vadd.f32 0.0, %v517
      %v519 = vpop.f32.mrf.mxu0
      %v520 = vadd.f32 0.0, %v519
      %521 = vmatmul.bf16.gmra.mxu0 %v444
      %v522 = vpop.f32.mrf.mxu0
      %v523 = vadd.f32 0.0, %v522
      %v524 = vpop.f32.mrf.mxu0
      %v525 = vadd.f32 0.0, %v524
      %526 = vmatmul.bf16.gmra.mxu0 %v447
      %v527 = vpop.f32.mrf.mxu0
      %v528 = vadd.f32 0.0, %v527
      %v529 = vpop.f32.mrf.mxu0
      %v530 = vadd.f32 0.0, %v529
      %531 = vmatmul.bf16.gmra.mxu0 %v450
      %v532 = vpop.f32.mrf.mxu0
      %v533 = vadd.f32 0.0, %v532
      %v534 = vpop.f32.mrf.mxu0
      %v535 = vadd.f32 0.0, %v534
      %536 = vmatmul.bf16.gmra.mxu0 %v453
      %v537 = vpop.f32.mrf.mxu0
      %v538 = vadd.f32 0.0, %v537
      %v539 = vpop.f32.mrf.mxu0
      %v540 = vadd.f32 0.0, %v539
      %541 = vmatmul.bf16.gmra.mxu0 %v456
      %v542 = vpop.f32.mrf.mxu0
      %v543 = vadd.f32 0.0, %v542
      %v544 = vpop.f32.mrf.mxu0
      %v545 = vadd.f32 0.0, %v544
      %546 = vmatmul.bf16.gmra.mxu0 %v459
      %v547 = vpop.f32.mrf.mxu0
      %v548 = vadd.f32 0.0, %v547
      %v549 = vpop.f32.mrf.mxu0
      %v550 = vadd.f32 0.0, %v549
      %551 = vmatmul.bf16.gmra.mxu0 %v462
      %v552 = vpop.f32.mrf.mxu0
      %v553 = vadd.f32 0.0, %v552
      %v554 = vpop.f32.mrf.mxu0
      %v555 = vadd.f32 0.0, %v554
      %556 = vdwg.mxu0
      %v557 = vld [vmem:[%s253] sm:$0x1]
      %v559 = vperm.slane %v557, 0
      %v561 = vmul.f32 %v478, %v559
      %v562 = vmul.f32 %v480, %v559
      %v563 = vmul.f32 %v483, %v559
      %v564 = vmul.f32 %v485, %v559
      %v565 = vmul.f32 %v488, %v559
      %v566 = vmul.f32 %v490, %v559
      %v567 = vmul.f32 %v493, %v559
      %v568 = vmul.f32 %v495, %v559
      %v569 = vmul.f32 %v498, %v559
      %v570 = vmul.f32 %v500, %v559
      %v571 = vmul.f32 %v503, %v559
      %v572 = vmul.f32 %v505, %v559
      %v573 = vmul.f32 %v508, %v559
      %v574 = vmul.f32 %v510, %v559
      %v575 = vmul.f32 %v513, %v559
      %v576 = vmul.f32 %v515, %v559
      %v577 = vmul.f32 %v518, %v559
      %v578 = vmul.f32 %v520, %v559
      %v579 = vmul.f32 %v523, %v559
      %v580 = vmul.f32 %v525, %v559
      %v581 = vmul.f32 %v528, %v559
      %v582 = vmul.f32 %v530, %v559
      %v583 = vmul.f32 %v533, %v559
      %v584 = vmul.f32 %v535, %v559
      %v585 = vmul.f32 %v538, %v559
      %v586 = vmul.f32 %v540, %v559
      %v587 = vmul.f32 %v543, %v559
      %v588 = vmul.f32 %v545, %v559
      %v589 = vmul.f32 %v548, %v559
      %v590 = vmul.f32 %v550, %v559
      %v591 = vmul.f32 %v553, %v559
      %v592 = vmul.f32 %v555, %v559
      %v593 = vld [vmem:[%s256] sm:$0x1]
      %v595 = vperm.slane %v593, 0
      %v597 = vadd.f32 %v561, %v595
      %v598 = vadd.f32 %v562, %v595
      %v599 = vadd.f32 %v563, %v595
      %v600 = vadd.f32 %v564, %v595
      %v601 = vadd.f32 %v565, %v595
      %v602 = vadd.f32 %v566, %v595
      %v603 = vadd.f32 %v567, %v595
      %v604 = vadd.f32 %v568, %v595
      %v605 = vadd.f32 %v569, %v595
      %v606 = vadd.f32 %v570, %v595
      %v607 = vadd.f32 %v571, %v595
      %v608 = vadd.f32 %v572, %v595
      %v609 = vadd.f32 %v573, %v595
      %v610 = vadd.f32 %v574, %v595
      %v611 = vadd.f32 %v575, %v595
      %v612 = vadd.f32 %v576, %v595
      %v613 = vadd.f32 %v577, %v595
      %v614 = vadd.f32 %v578, %v595
      %v615 = vadd.f32 %v579, %v595
      %v616 = vadd.f32 %v580, %v595
      %v617 = vadd.f32 %v581, %v595
      %v618 = vadd.f32 %v582, %v595
      %v619 = vadd.f32 %v583, %v595
      %v620 = vadd.f32 %v584, %v595
      %v621 = vadd.f32 %v585, %v595
      %v622 = vadd.f32 %v586, %v595
      %v623 = vadd.f32 %v587, %v595
      %v624 = vadd.f32 %v588, %v595
      %v625 = vadd.f32 %v589, %v595
      %v626 = vadd.f32 %v590, %v595
      %v627 = vadd.f32 %v591, %v595
      %v628 = vadd.f32 %v592, %v595
      %v629 = vmax.f32 %v597, 0.0
      %v630 = vmax.f32 %v598, 0.0
      %v631 = vmax.f32 %v599, 0.0
      %v632 = vmax.f32 %v600, 0.0
      %v633 = vmax.f32 %v601, 0.0
      %v634 = vmax.f32 %v602, 0.0
      %v635 = vmax.f32 %v603, 0.0
      %v636 = vmax.f32 %v604, 0.0
      %v637 = vmax.f32 %v605, 0.0
      %v638 = vmax.f32 %v606, 0.0
      %v639 = vmax.f32 %v607, 0.0
      %v640 = vmax.f32 %v608, 0.0
      %v641 = vmax.f32 %v609, 0.0
      %v642 = vmax.f32 %v610, 0.0
      %v643 = vmax.f32 %v611, 0.0
      %v644 = vmax.f32 %v612, 0.0
      %v645 = vmax.f32 %v613, 0.0
      %v646 = vmax.f32 %v614, 0.0
      %v647 = vmax.f32 %v615, 0.0
      %v648 = vmax.f32 %v616, 0.0
      %v649 = vmax.f32 %v617, 0.0
      %v650 = vmax.f32 %v618, 0.0
      %v651 = vmax.f32 %v619, 0.0
      %v652 = vmax.f32 %v620, 0.0
      %v653 = vmax.f32 %v621, 0.0
      %v654 = vmax.f32 %v622, 0.0
      %v655 = vmax.f32 %v623, 0.0
      %v656 = vmax.f32 %v624, 0.0
      %v657 = vmax.f32 %v625, 0.0
      %v658 = vmax.f32 %v626, 0.0
      %v659 = vmax.f32 %v627, 0.0
      %v660 = vmax.f32 %v628, 0.0
      %661 = vst [vmem:[%s264] sm:$0xff] %v629
      %662 = vst [vmem:[%s264 + $0x8] sm:$0xff] %v630
      %663 = vst [vmem:[%s264 + $0x10] sm:$0xff] %v631
      %664 = vst [vmem:[%s264 + $0x18] sm:$0xff] %v632
      %665 = vst [vmem:[%s264 + $0x20] sm:$0xff] %v633
      %666 = vst [vmem:[%s264 + $0x28] sm:$0xff] %v634
      %667 = vst [vmem:[%s264 + $0x30] sm:$0xff] %v635
      %668 = vst [vmem:[%s264 + $0x38] sm:$0xff] %v636
      %669 = vst [vmem:[%s264 + $0x40] sm:$0xff] %v637
      %670 = vst [vmem:[%s264 + $0x48] sm:$0xff] %v638
      %671 = vst [vmem:[%s264 + $0x50] sm:$0xff] %v639
      %672 = vst [vmem:[%s264 + $0x58] sm:$0xff] %v640
      %673 = vst [vmem:[%s264 + $0x60] sm:$0xff] %v641
      %674 = vst [vmem:[%s264 + $0x68] sm:$0xff] %v642
      %675 = vst [vmem:[%s264 + $0x70] sm:$0xff] %v643
      %676 = vst [vmem:[%s264 + $0x78] sm:$0xff] %v644
      %677 = vst [vmem:[%s264 + $0x80] sm:$0xff] %v645
      %678 = vst [vmem:[%s264 + $0x88] sm:$0xff] %v646
      %679 = vst [vmem:[%s264 + $0x90] sm:$0xff] %v647
      %680 = vst [vmem:[%s264 + $0x98] sm:$0xff] %v648
      %681 = vst [vmem:[%s264 + $0xa0] sm:$0xff] %v649
      %682 = vst [vmem:[%s264 + $0xa8] sm:$0xff] %v650
      %683 = vst [vmem:[%s264 + $0xb0] sm:$0xff] %v651
      %684 = vst [vmem:[%s264 + $0xb8] sm:$0xff] %v652
      %685 = vst [vmem:[%s264 + $0xc0] sm:$0xff] %v653
      %686 = vst [vmem:[%s264 + $0xc8] sm:$0xff] %v654
      %687 = vst [vmem:[%s264 + $0xd0] sm:$0xff] %v655
      %688 = vst [vmem:[%s264 + $0xd8] sm:$0xff] %v656
      %689 = vst [vmem:[%s264 + $0xe0] sm:$0xff] %v657
      %690 = vst [vmem:[%s264 + $0xe8] sm:$0xff] %v658
      %691 = vst [vmem:[%s264 + $0xf0] sm:$0xff] %v659
      %692 = vst [vmem:[%s264 + $0xf8] sm:$0xff] %v660
      %s693 = smul.u32 32, %s19
      %p694 = scmp.lt.s32.totalorder %s693, 63
      %s695 = scalar_select %p694, %s693, 63
      %p696 = scmp.lt.s32.totalorder %s20, 0
      %s697 = scalar_select %p696, %s20, 0
      %s698 = sadd.s32 %s697, %s695
      %s699 = smul.addr %s698, 8
      %s700 = scalar_lea.vmem %s4, %s699
      // Predicated region
      $region37: #{deform_up_forward.5} parent=35 // pred_check
        %p701 = pneg %p151
      $region38: #{deform_up_forward.5} parent=35 // pred_check_branch
        %703 = sbr.rel (%p701) target = $region40
      $region39: #{deform_up_forward.5} parent=35 // pred_region
        %s704 = smul.u32 32, %s19
      $region40: #{deform_up_forward.5} parent=35 // pred_fallthru
        _
    $region36: #{deform_up_forward.5} parent=5 // pred_fallthru
      _
    %p705 = scmp.le.s32.totalorder 2, %s10
    // Predicated region
    $region41: #{deform_up_forward.5} parent=5 // pred_check
      %p706 = pneg %p705
    $region42: #{deform_up_forward.5} parent=5 // pred_check_branch
      %708 = sbr.rel (%p706) target = $region44
    $region43: #{deform_up_forward.5} parent=5 // pred_region
      %s709 = ssub.s32 %s10, 2
      // Predicated region
      $region45: #{deform_up_forward.5} parent=43 // pred_check
        %p710 = pneg %p157
      $region46: #{deform_up_forward.5} parent=43 // pred_check_branch
        %712 = sbr.rel (%p710) target = $region48
      $region47: #{deform_up_forward.5} parent=43 // pred_region
        %s713 = smul.u32 32, %s21
        %p714 = scmp.lt.s32.totalorder %s713, 63
        %s715 = scalar_select %p714, %s713, 63
        %p716 = scmp.lt.s32.totalorder %s22, 0
        %s717 = scalar_select %p716, %s22, 0
        %s718 = sadd.s32 %s717, %s715
        %s719 = smul.addr %s718, 8
        %s720 = scalar_lea.vmem %s4, %s719
      $region48: #{deform_up_forward.5} parent=43 // pred_fallthru
        _
    $region44: #{deform_up_forward.5} parent=5 // pred_fallthru
      _
  $region6: #{deform_up_forward.5} parent=0 // loop_footer
    %s14 = sadd.s32 1, %s10
  $region7: #{deform_up_forward.5} parent=0 // loop_footer_branch
    %9 = sbr.rel target = $region3
  $region8: #{deform_up_forward.5} parent=0 // loop_exit
    _

</llo_original>
